<compile_context>
chip_gen: v5e
topology: v5e:2x2
jax: 0.10.0
libtpu: 0.0.40
codegen_flags: <defaults>
</compile_context>

<pallas_src>
import functools

import jax
import jax.numpy as jnp
from jax.experimental import pallas as pl
from jax.experimental.pallas import tpu as pltpu

NEG_SLOPE = 0.01  # nn.LeakyReLU default
BN_EPS = 1e-5     # nn.BatchNorm2d default


def _fused_kernel(x_ref, w1_ref, t1_ref, w2_ref, t2_ref, o_ref,
                  xpad_ref, midpad_ref, *, C_in, C_mid, C_out, H, W):
    """Fused (conv3x3 p=2 + folded BN + LeakyReLU) x 2 for one image (NCHW).

    x_ref     : (1, C_in, H, W)       VMEM input block
    w1_ref    : (C_mid*C_in*9,)       SMEM, BN-scaled conv1 weights, OIHW flat
    t1_ref    : (C_mid,)              SMEM, folded shift (= bn_shift + bias*scale)
    w2_ref    : (C_out*C_mid*9,)      SMEM, BN-scaled conv2 weights, OIHW flat
    t2_ref    : (C_out,)              SMEM, folded shift
    o_ref     : (1, C_out, H+4, W+4)  VMEM output block
    xpad_ref  : (C_in, H+4, W+4)      VMEM scratch: zero-padded input
    midpad_ref: (C_mid, H+6, W+6)     VMEM scratch: zero-padded intermediate
    """
    H1, W1 = H + 2, W + 2   # spatial size after conv1 (k=3, p=2)
    H2, W2 = H + 4, W + 4   # spatial size after conv2

    # ---- stage 0: zero-pad the input into VMEM scratch (pad = 2 per side) --
    xpad_ref[...] = jnp.zeros_like(xpad_ref)
    for ci in range(C_in):
        xpad_ref[ci, 2:2 + H, 2:2 + W] = x_ref[0, ci]

    midpad_ref[...] = jnp.zeros_like(midpad_ref)

    # ---- layer 1: conv3x3(p=2) + folded BN + LeakyReLU -> VMEM scratch -----
    # Accumulators start at the folded per-channel shift (bias+BN already in).
    acc1 = [jnp.full((H1, W1), t1_ref[co], jnp.float32) for co in range(C_mid)]
    for ci in range(C_in):
        for kh in range(3):
            for kw in range(3):
                patch = xpad_ref[ci, kh:kh + H1, kw:kw + W1]
                for co in range(C_mid):
                    w = w1_ref[((co * C_in + ci) * 3 + kh) * 3 + kw]
                    acc1[co] = acc1[co] + w * patch
    for co in range(C_mid):
        a = acc1[co]
        a = jnp.where(a >= 0, a, NEG_SLOPE * a)      # LeakyReLU
        midpad_ref[co, 2:2 + H1, 2:2 + W1] = a       # intermediate stays in VMEM

    # ---- layer 2: conv3x3(p=2) + folded BN + LeakyReLU -> output -----------
    acc2 = [jnp.full((H2, W2), t2_ref[co], jnp.float32) for co in range(C_out)]
    for ci in range(C_mid):
        for kh in range(3):
            for kw in range(3):
                patch = midpad_ref[ci, kh:kh + H2, kw:kw + W2]
                for co in range(C_out):
                    w = w2_ref[((co * C_mid + ci) * 3 + kh) * 3 + kw]
                    acc2[co] = acc2[co] + w * patch
    for co in range(C_out):
        a = acc2[co]
        a = jnp.where(a >= 0, a, NEG_SLOPE * a)      # LeakyReLU
        o_ref[0, co, :, :] = a.astype(o_ref.dtype)


def trans_conv0_forward(x_nchw, params):
    """Fused Trans_Conv0 forward: NCHW in -> NCHW out, one pallas_call."""
    (w1, b1, s1, t1), (w2, b2, s2, t2) = params   # w in OIHW; s/t = BN scale/shift
    N, C_in, H, W = x_nchw.shape
    C_mid = w1.shape[0]
    C_out = w2.shape[0]
    H2, W2 = H + 4, W + 4

    # Fold conv bias + BN scale into the weights / shift (constants, wrapper-side).
    w1f = (w1 * s1[:, None, None, None]).reshape(-1).astype(jnp.float32)
    t1f = (t1 + b1 * s1).astype(jnp.float32)
    w2f = (w2 * s2[:, None, None, None]).reshape(-1).astype(jnp.float32)
    t2f = (t2 + b2 * s2).astype(jnp.float32)

    kernel = functools.partial(_fused_kernel, C_in=C_in, C_mid=C_mid,
                               C_out=C_out, H=H, W=W)

    flops = 2 * N * 9 * ((H + 2) * (W + 2) * C_in * C_mid
                         + (H + 4) * (W + 4) * C_mid * C_out)
    bytes_accessed = 4 * (x_nchw.size + w1f.size + t1f.size + w2f.size
                          + t2f.size + N * C_out * H2 * W2)

    smem_spec = pl.BlockSpec(memory_space=pltpu.MemorySpace.SMEM)

    return pl.pallas_call(
        kernel,
        out_shape=jax.ShapeDtypeStruct((N, C_out, H2, W2), jnp.float32),
        grid=(N,),
        in_specs=[
            pl.BlockSpec((1, C_in, H, W), lambda n: (n, 0, 0, 0)),
            smem_spec,   # w1 (BN-scaled), flat OIHW
            smem_spec,   # folded shift 1
            smem_spec,   # w2 (BN-scaled), flat OIHW
            smem_spec,   # folded shift 2
        ],
        out_specs=pl.BlockSpec((1, C_out, H2, W2), lambda n: (n, 0, 0, 0)),
        scratch_shapes=[
            pltpu.VMEM((C_in, H + 4, W + 4), jnp.float32),    # padded input
            pltpu.VMEM((C_mid, H + 6, W + 6), jnp.float32),   # padded intermediate
        ],
        compiler_params=pltpu.CompilerParams(
            dimension_semantics=("parallel",)),
        cost_estimate=pl.CostEstimate(flops=flops, transcendentals=0,
                                      bytes_accessed=bytes_accessed),
    )(x_nchw.astype(jnp.float32), w1f, t1f, w2f, t2f)


def make_params(key, in_channel):
    """Deterministic synthetic params matching Trans_Conv0(in_channel)."""
    c_mid = in_channel
    c_out = int(in_channel / 2)
    k1, k2, k3, k4 = jax.random.split(key, 4)

    # Conv weights in PyTorch OIHW layout.
    w1_oihw = 0.1 * jax.random.normal(k1, (c_mid, in_channel, 3, 3), jnp.float32)
    b1 = 0.05 * jax.random.normal(k2, (c_mid,), jnp.float32)
    w2_oihw = 0.1 * jax.random.normal(k3, (c_out, c_mid, 3, 3), jnp.float32)
    b2 = 0.05 * jax.random.normal(k4, (c_out,), jnp.float32)

    # BatchNorm default init: gamma=1, beta=0, running_mean=0, running_var=1.
    def bn_fold(c):
        gamma = jnp.ones((c,), jnp.float32)
        beta = jnp.zeros((c,), jnp.float32)
        mean = jnp.zeros((c,), jnp.float32)
        var = jnp.ones((c,), jnp.float32)
        scale = gamma / jnp.sqrt(var + BN_EPS)
        shift = beta - mean * scale
        return scale, shift

    s1, t1 = bn_fold(c_mid)
    s2, t2 = bn_fold(c_out)
    return (w1_oihw, b1, s1, t1), (w2_oihw, b2, s2, t2)


def _reference_forward(x_nchw, params):
    """Pure-JAX reference (lax conv) for a correctness sanity check."""
    (w1, b1, s1, t1), (w2, b2, s2, t2) = params
    dn = ("NHWC", "HWIO", "NHWC")

    def layer(x, w_oihw, b, s, t):
        w = jnp.transpose(w_oihw, (2, 3, 1, 0))   # OIHW -> HWIO
        y = jax.lax.conv_general_dilated(
            x, w, window_strides=(1, 1), padding=((2, 2), (2, 2)),
            dimension_numbers=dn)
        y = y + b.reshape(1, 1, 1, -1)
        y = y * s.reshape(1, 1, 1, -1) + t.reshape(1, 1, 1, -1)
        return jnp.where(y >= 0, y, NEG_SLOPE * y)

    x = jnp.transpose(x_nchw, (0, 2, 3, 1))
    y = layer(x, w1, b1, s1, t1)
    y = layer(y, w2, b2, s2, t2)
    return jnp.transpose(y, (0, 3, 1, 2))


if __name__ == "__main__":
    key = jax.random.PRNGKey(0)
    kx, kp = jax.random.split(key)

    N, C, H, W = 2, 4, 16, 16
    x = jax.random.normal(kx, (N, C, H, W), jnp.float32)
    params = make_params(kp, C)

    out = jax.block_until_ready(trans_conv0_forward(x, params))
    assert out.shape == (N, C // 2, H + 4, W + 4), out.shape

    ref = jax.block_until_ready(_reference_forward(x, params))
    assert jnp.allclose(out, ref, atol=1e-4, rtol=1e-4), (
        float(jnp.max(jnp.abs(out - ref))))

    print("KERNEL_OK")
</pallas_src>

<mosaic_0001>
module attributes {stable_mosaic.version = 11 : i64} {
  func.func @_fused_kernel(%arg0: i32, %arg1: memref<1x4x16x16xf32, #tpu.memory_space<vmem>>, %arg2: memref<144xf32, #tpu.memory_space<smem>>, %arg3: memref<4xf32, #tpu.memory_space<smem>>, %arg4: memref<72xf32, #tpu.memory_space<smem>>, %arg5: memref<2xf32, #tpu.memory_space<smem>>, %arg6: memref<1x2x20x20xf32, #tpu.memory_space<vmem>>, %arg7: memref<4x20x20xf32, #tpu.memory_space<vmem>>, %arg8: memref<4x22x22xf32, #tpu.memory_space<vmem>>) attributes {dimension_semantics = [#tpu.dimension_semantics<parallel>], iteration_bounds = array<i64: 2>, scalar_prefetch = 0 : i64, scratch_operands = 2 : i64, tpu.core_type = #tpu.core_type<tc>, window_params = [{transform_indices = @transform_0, window_bounds = array<i64: 1, 4, 16, 16>}, {transform_indices = @transform_1, window_bounds = array<i64: 144>}, {transform_indices = @transform_2, window_bounds = array<i64: 4>}, {transform_indices = @transform_3, window_bounds = array<i64: 72>}, {transform_indices = @transform_4, window_bounds = array<i64: 2>}, {transform_indices = @transform_5, window_bounds = array<i64: 1, 2, 20, 20>}]} {
    %cst = arith.constant 0.000000e+00 : f32
    %0 = vector.broadcast %cst : f32 to vector<4x20x20xf32>
    %c0 = arith.constant 0 : index
    %c0_0 = arith.constant 0 : index
    %c0_1 = arith.constant 0 : index
    %1 = vector.load %arg7[%c0, %c0_0, %c0_1] : memref<4x20x20xf32, #tpu.memory_space<vmem>>, vector<4x20x20xf32>
    tpu.vector_store %arg7[%c0, %c0_0, %c0_1], %0 {strides = array<i32>} : memref<4x20x20xf32, #tpu.memory_space<vmem>>, vector<4x20x20xf32>,
    %c0_2 = arith.constant 0 : index
    %c0_3 = arith.constant 0 : index
    %c0_4 = arith.constant 0 : index
    %c0_5 = arith.constant 0 : index
    %2 = vector.load %arg1[%c0_2, %c0_3, %c0_4, %c0_5] : memref<1x4x16x16xf32, #tpu.memory_space<vmem>>, vector<1x1x16x16xf32>
    %3 = vector.shape_cast %2 : vector<1x1x16x16xf32> to vector<16x16xf32>
    %c0_6 = arith.constant 0 : index
    %c2 = arith.constant 2 : index
    %c2_7 = arith.constant 2 : index
    %4 = vector.load %arg7[%c0_6, %c2, %c2_7] : memref<4x20x20xf32, #tpu.memory_space<vmem>>, vector<1x16x16xf32>
    %5 = vector.shape_cast %4 : vector<1x16x16xf32> to vector<16x16xf32>
    %6 = vector.shape_cast %3 : vector<16x16xf32> to vector<1x16x16xf32>
    tpu.vector_store %arg7[%c0_6, %c2, %c2_7], %6 {strides = array<i32>} : memref<4x20x20xf32, #tpu.memory_space<vmem>>, vector<1x16x16xf32>,
    %c0_8 = arith.constant 0 : index
    %c1 = arith.constant 1 : index
    %c0_9 = arith.constant 0 : index
    %c0_10 = arith.constant 0 : index
    %7 = vector.load %arg1[%c0_8, %c1, %c0_9, %c0_10] : memref<1x4x16x16xf32, #tpu.memory_space<vmem>>, vector<1x1x16x16xf32>
    %8 = vector.shape_cast %7 : vector<1x1x16x16xf32> to vector<16x16xf32>
    %c1_11 = arith.constant 1 : index
    %c2_12 = arith.constant 2 : index
    %c2_13 = arith.constant 2 : index
    %9 = vector.load %arg7[%c1_11, %c2_12, %c2_13] : memref<4x20x20xf32, #tpu.memory_space<vmem>>, vector<1x16x16xf32>
    %10 = vector.shape_cast %9 : vector<1x16x16xf32> to vector<16x16xf32>
    %11 = vector.shape_cast %8 : vector<16x16xf32> to vector<1x16x16xf32>
    tpu.vector_store %arg7[%c1_11, %c2_12, %c2_13], %11 {strides = array<i32>} : memref<4x20x20xf32, #tpu.memory_space<vmem>>, vector<1x16x16xf32>,
    %c0_14 = arith.constant 0 : index
    %c2_15 = arith.constant 2 : index
    %c0_16 = arith.constant 0 : index
    %c0_17 = arith.constant 0 : index
    %12 = vector.load %arg1[%c0_14, %c2_15, %c0_16, %c0_17] : memref<1x4x16x16xf32, #tpu.memory_space<vmem>>, vector<1x1x16x16xf32>
    %13 = vector.shape_cast %12 : vector<1x1x16x16xf32> to vector<16x16xf32>
    %c2_18 = arith.constant 2 : index
    %c2_19 = arith.constant 2 : index
    %c2_20 = arith.constant 2 : index
    %14 = vector.load %arg7[%c2_18, %c2_19, %c2_20] : memref<4x20x20xf32, #tpu.memory_space<vmem>>, vector<1x16x16xf32>
    %15 = vector.shape_cast %14 : vector<1x16x16xf32> to vector<16x16xf32>
    %16 = vector.shape_cast %13 : vector<16x16xf32> to vector<1x16x16xf32>
    tpu.vector_store %arg7[%c2_18, %c2_19, %c2_20], %16 {strides = array<i32>} : memref<4x20x20xf32, #tpu.memory_space<vmem>>, vector<1x16x16xf32>,
    %c0_21 = arith.constant 0 : index
    %c3 = arith.constant 3 : index
    %c0_22 = arith.constant 0 : index
    %c0_23 = arith.constant 0 : index
    %17 = vector.load %arg1[%c0_21, %c3, %c0_22, %c0_23] : memref<1x4x16x16xf32, #tpu.memory_space<vmem>>, vector<1x1x16x16xf32>
    %18 = vector.shape_cast %17 : vector<1x1x16x16xf32> to vector<16x16xf32>
    %c3_24 = arith.constant 3 : index
    %c2_25 = arith.constant 2 : index
    %c2_26 = arith.constant 2 : index
    %19 = vector.load %arg7[%c3_24, %c2_25, %c2_26] : memref<4x20x20xf32, #tpu.memory_space<vmem>>, vector<1x16x16xf32>
    %20 = vector.shape_cast %19 : vector<1x16x16xf32> to vector<16x16xf32>
    %21 = vector.shape_cast %18 : vector<16x16xf32> to vector<1x16x16xf32>
    tpu.vector_store %arg7[%c3_24, %c2_25, %c2_26], %21 {strides = array<i32>} : memref<4x20x20xf32, #tpu.memory_space<vmem>>, vector<1x16x16xf32>,
    %cst_27 = arith.constant 0.000000e+00 : f32
    %22 = vector.broadcast %cst_27 : f32 to vector<4x22x22xf32>
    %c0_28 = arith.constant 0 : index
    %c0_29 = arith.constant 0 : index
    %c0_30 = arith.constant 0 : index
    %23 = vector.load %arg8[%c0_28, %c0_29, %c0_30] : memref<4x22x22xf32, #tpu.memory_space<vmem>>, vector<4x22x22xf32>
    tpu.vector_store %arg8[%c0_28, %c0_29, %c0_30], %22 {strides = array<i32>} : memref<4x22x22xf32, #tpu.memory_space<vmem>>, vector<4x22x22xf32>,
    %c0_31 = arith.constant 0 : index
    %24 = memref.load %arg3[%c0_31] : memref<4xf32, #tpu.memory_space<smem>>
    %25 = vector.broadcast %24 : f32 to vector<18x18xf32>
    %c1_32 = arith.constant 1 : index
    %26 = memref.load %arg3[%c1_32] : memref<4xf32, #tpu.memory_space<smem>>
    %27 = vector.broadcast %26 : f32 to vector<18x18xf32>
    %c2_33 = arith.constant 2 : index
    %28 = memref.load %arg3[%c2_33] : memref<4xf32, #tpu.memory_space<smem>>
    %29 = vector.broadcast %28 : f32 to vector<18x18xf32>
    %c3_34 = arith.constant 3 : index
    %30 = memref.load %arg3[%c3_34] : memref<4xf32, #tpu.memory_space<smem>>
    %31 = vector.broadcast %30 : f32 to vector<18x18xf32>
    %c0_35 = arith.constant 0 : index
    %c0_36 = arith.constant 0 : index
    %c0_37 = arith.constant 0 : index
    %32 = vector.load %arg7[%c0_35, %c0_36, %c0_37] : memref<4x20x20xf32, #tpu.memory_space<vmem>>, vector<1x18x18xf32>
    %33 = vector.shape_cast %32 : vector<1x18x18xf32> to vector<18x18xf32>
    %c0_38 = arith.constant 0 : index
    %34 = memref.load %arg2[%c0_38] : memref<144xf32, #tpu.memory_space<smem>>
    %35 = vector.broadcast %34 : f32 to vector<18x18xf32>
    %36 = arith.mulf %35, %33 : vector<18x18xf32>
    %37 = arith.addf %25, %36 : vector<18x18xf32>
    %c36 = arith.constant 36 : index
    %38 = memref.load %arg2[%c36] : memref<144xf32, #tpu.memory_space<smem>>
    %39 = vector.broadcast %38 : f32 to vector<18x18xf32>
    %40 = arith.mulf %39, %33 : vector<18x18xf32>
    %41 = arith.addf %27, %40 : vector<18x18xf32>
    %c72 = arith.constant 72 : index
    %42 = memref.load %arg2[%c72] : memref<144xf32, #tpu.memory_space<smem>>
    %43 = vector.broadcast %42 : f32 to vector<18x18xf32>
    %44 = arith.mulf %43, %33 : vector<18x18xf32>
    %45 = arith.addf %29, %44 : vector<18x18xf32>
    %c108 = arith.constant 108 : index
    %46 = memref.load %arg2[%c108] : memref<144xf32, #tpu.memory_space<smem>>
    %47 = vector.broadcast %46 : f32 to vector<18x18xf32>
    %48 = arith.mulf %47, %33 : vector<18x18xf32>
    %49 = arith.addf %31, %48 : vector<18x18xf32>
    %c0_39 = arith.constant 0 : index
    %c0_40 = arith.constant 0 : index
    %c1_41 = arith.constant 1 : index
    %50 = vector.load %arg7[%c0_39, %c0_40, %c1_41] : memref<4x20x20xf32, #tpu.memory_space<vmem>>, vector<1x18x18xf32>
    %51 = vector.shape_cast %50 : vector<1x18x18xf32> to vector<18x18xf32>
    %c1_42 = arith.constant 1 : index
    %52 = memref.load %arg2[%c1_42] : memref<144xf32, #tpu.memory_space<smem>>
    %53 = vector.broadcast %52 : f32 to vector<18x18xf32>
    %54 = arith.mulf %53, %51 : vector<18x18xf32>
    %55 = arith.addf %37, %54 : vector<18x18xf32>
    %c37 = arith.constant 37 : index
    %56 = memref.load %arg2[%c37] : memref<144xf32, #tpu.memory_space<smem>>
    %57 = vector.broadcast %56 : f32 to vector<18x18xf32>
    %58 = arith.mulf %57, %51 : vector<18x18xf32>
    %59 = arith.addf %41, %58 : vector<18x18xf32>
    %c73 = arith.constant 73 : index
    %60 = memref.load %arg2[%c73] : memref<144xf32, #tpu.memory_space<smem>>
    %61 = vector.broadcast %60 : f32 to vector<18x18xf32>
    %62 = arith.mulf %61, %51 : vector<18x18xf32>
    %63 = arith.addf %45, %62 : vector<18x18xf32>
    %c109 = arith.constant 109 : index
    %64 = memref.load %arg2[%c109] : memref<144xf32, #tpu.memory_space<smem>>
    %65 = vector.broadcast %64 : f32 to vector<18x18xf32>
    %66 = arith.mulf %65, %51 : vector<18x18xf32>
    %67 = arith.addf %49, %66 : vector<18x18xf32>
    %c0_43 = arith.constant 0 : index
    %c0_44 = arith.constant 0 : index
    %c2_45 = arith.constant 2 : index
    %68 = vector.load %arg7[%c0_43, %c0_44, %c2_45] : memref<4x20x20xf32, #tpu.memory_space<vmem>>, vector<1x18x18xf32>
    %69 = vector.shape_cast %68 : vector<1x18x18xf32> to vector<18x18xf32>
    %c2_46 = arith.constant 2 : index
    %70 = memref.load %arg2[%c2_46] : memref<144xf32, #tpu.memory_space<smem>>
    %71 = vector.broadcast %70 : f32 to vector<18x18xf32>
    %72 = arith.mulf %71, %69 : vector<18x18xf32>
    %73 = arith.addf %55, %72 : vector<18x18xf32>
    %c38 = arith.constant 38 : index
    %74 = memref.load %arg2[%c38] : memref<144xf32, #tpu.memory_space<smem>>
    %75 = vector.broadcast %74 : f32 to vector<18x18xf32>
    %76 = arith.mulf %75, %69 : vector<18x18xf32>
    %77 = arith.addf %59, %76 : vector<18x18xf32>
    %c74 = arith.constant 74 : index
    %78 = memref.load %arg2[%c74] : memref<144xf32, #tpu.memory_space<smem>>
    %79 = vector.broadcast %78 : f32 to vector<18x18xf32>
    %80 = arith.mulf %79, %69 : vector<18x18xf32>
    %81 = arith.addf %63, %80 : vector<18x18xf32>
    %c110 = arith.constant 110 : index
    %82 = memref.load %arg2[%c110] : memref<144xf32, #tpu.memory_space<smem>>
    %83 = vector.broadcast %82 : f32 to vector<18x18xf32>
    %84 = arith.mulf %83, %69 : vector<18x18xf32>
    %85 = arith.addf %67, %84 : vector<18x18xf32>
    %c0_47 = arith.constant 0 : index
    %c1_48 = arith.constant 1 : index
    %c0_49 = arith.constant 0 : index
    %86 = vector.load %arg7[%c0_47, %c1_48, %c0_49] : memref<4x20x20xf32, #tpu.memory_space<vmem>>, vector<1x18x18xf32>
    %87 = vector.shape_cast %86 : vector<1x18x18xf32> to vector<18x18xf32>
    %c3_50 = arith.constant 3 : index
    %88 = memref.load %arg2[%c3_50] : memref<144xf32, #tpu.memory_space<smem>>
    %89 = vector.broadcast %88 : f32 to vector<18x18xf32>
    %90 = arith.mulf %89, %87 : vector<18x18xf32>
    %91 = arith.addf %73, %90 : vector<18x18xf32>
    %c39 = arith.constant 39 : index
    %92 = memref.load %arg2[%c39] : memref<144xf32, #tpu.memory_space<smem>>
    %93 = vector.broadcast %92 : f32 to vector<18x18xf32>
    %94 = arith.mulf %93, %87 : vector<18x18xf32>
    %95 = arith.addf %77, %94 : vector<18x18xf32>
    %c75 = arith.constant 75 : index
    %96 = memref.load %arg2[%c75] : memref<144xf32, #tpu.memory_space<smem>>
    %97 = vector.broadcast %96 : f32 to vector<18x18xf32>
    %98 = arith.mulf %97, %87 : vector<18x18xf32>
    %99 = arith.addf %81, %98 : vector<18x18xf32>
    %c111 = arith.constant 111 : index
    %100 = memref.load %arg2[%c111] : memref<144xf32, #tpu.memory_space<smem>>
    %101 = vector.broadcast %100 : f32 to vector<18x18xf32>
    %102 = arith.mulf %101, %87 : vector<18x18xf32>
    %103 = arith.addf %85, %102 : vector<18x18xf32>
    %c0_51 = arith.constant 0 : index
    %c1_52 = arith.constant 1 : index
    %c1_53 = arith.constant 1 : index
    %104 = vector.load %arg7[%c0_51, %c1_52, %c1_53] : memref<4x20x20xf32, #tpu.memory_space<vmem>>, vector<1x18x18xf32>
    %105 = vector.shape_cast %104 : vector<1x18x18xf32> to vector<18x18xf32>
    %c4 = arith.constant 4 : index
    %106 = memref.load %arg2[%c4] : memref<144xf32, #tpu.memory_space<smem>>
    %107 = vector.broadcast %106 : f32 to vector<18x18xf32>
    %108 = arith.mulf %107, %105 : vector<18x18xf32>
    %109 = arith.addf %91, %108 : vector<18x18xf32>
    %c40 = arith.constant 40 : index
    %110 = memref.load %arg2[%c40] : memref<144xf32, #tpu.memory_space<smem>>
    %111 = vector.broadcast %110 : f32 to vector<18x18xf32>
    %112 = arith.mulf %111, %105 : vector<18x18xf32>
    %113 = arith.addf %95, %112 : vector<18x18xf32>
    %c76 = arith.constant 76 : index
    %114 = memref.load %arg2[%c76] : memref<144xf32, #tpu.memory_space<smem>>
    %115 = vector.broadcast %114 : f32 to vector<18x18xf32>
    %116 = arith.mulf %115, %105 : vector<18x18xf32>
    %117 = arith.addf %99, %116 : vector<18x18xf32>
    %c112 = arith.constant 112 : index
    %118 = memref.load %arg2[%c112] : memref<144xf32, #tpu.memory_space<smem>>
    %119 = vector.broadcast %118 : f32 to vector<18x18xf32>
    %120 = arith.mulf %119, %105 : vector<18x18xf32>
    %121 = arith.addf %103, %120 : vector<18x18xf32>
    %c0_54 = arith.constant 0 : index
    %c1_55 = arith.constant 1 : index
    %c2_56 = arith.constant 2 : index
    %122 = vector.load %arg7[%c0_54, %c1_55, %c2_56] : memref<4x20x20xf32, #tpu.memory_space<vmem>>, vector<1x18x18xf32>
    %123 = vector.shape_cast %122 : vector<1x18x18xf32> to vector<18x18xf32>
    %c5 = arith.constant 5 : index
    %124 = memref.load %arg2[%c5] : memref<144xf32, #tpu.memory_space<smem>>
    %125 = vector.broadcast %124 : f32 to vector<18x18xf32>
    %126 = arith.mulf %125, %123 : vector<18x18xf32>
    %127 = arith.addf %109, %126 : vector<18x18xf32>
    %c41 = arith.constant 41 : index
    %128 = memref.load %arg2[%c41] : memref<144xf32, #tpu.memory_space<smem>>
    %129 = vector.broadcast %128 : f32 to vector<18x18xf32>
    %130 = arith.mulf %129, %123 : vector<18x18xf32>
    %131 = arith.addf %113, %130 : vector<18x18xf32>
    %c77 = arith.constant 77 : index
    %132 = memref.load %arg2[%c77] : memref<144xf32, #tpu.memory_space<smem>>
    %133 = vector.broadcast %132 : f32 to vector<18x18xf32>
    %134 = arith.mulf %133, %123 : vector<18x18xf32>
    %135 = arith.addf %117, %134 : vector<18x18xf32>
    %c113 = arith.constant 113 : index
    %136 = memref.load %arg2[%c113] : memref<144xf32, #tpu.memory_space<smem>>
    %137 = vector.broadcast %136 : f32 to vector<18x18xf32>
    %138 = arith.mulf %137, %123 : vector<18x18xf32>
    %139 = arith.addf %121, %138 : vector<18x18xf32>
    %c0_57 = arith.constant 0 : index
    %c2_58 = arith.constant 2 : index
    %c0_59 = arith.constant 0 : index
    %140 = vector.load %arg7[%c0_57, %c2_58, %c0_59] : memref<4x20x20xf32, #tpu.memory_space<vmem>>, vector<1x18x18xf32>
    %141 = vector.shape_cast %140 : vector<1x18x18xf32> to vector<18x18xf32>
    %c6 = arith.constant 6 : index
    %142 = memref.load %arg2[%c6] : memref<144xf32, #tpu.memory_space<smem>>
    %143 = vector.broadcast %142 : f32 to vector<18x18xf32>
    %144 = arith.mulf %143, %141 : vector<18x18xf32>
    %145 = arith.addf %127, %144 : vector<18x18xf32>
    %c42 = arith.constant 42 : index
    %146 = memref.load %arg2[%c42] : memref<144xf32, #tpu.memory_space<smem>>
    %147 = vector.broadcast %146 : f32 to vector<18x18xf32>
    %148 = arith.mulf %147, %141 : vector<18x18xf32>
    %149 = arith.addf %131, %148 : vector<18x18xf32>
    %c78 = arith.constant 78 : index
    %150 = memref.load %arg2[%c78] : memref<144xf32, #tpu.memory_space<smem>>
    %151 = vector.broadcast %150 : f32 to vector<18x18xf32>
    %152 = arith.mulf %151, %141 : vector<18x18xf32>
    %153 = arith.addf %135, %152 : vector<18x18xf32>
    %c114 = arith.constant 114 : index
    %154 = memref.load %arg2[%c114] : memref<144xf32, #tpu.memory_space<smem>>
    %155 = vector.broadcast %154 : f32 to vector<18x18xf32>
    %156 = arith.mulf %155, %141 : vector<18x18xf32>
    %157 = arith.addf %139, %156 : vector<18x18xf32>
    %c0_60 = arith.constant 0 : index
    %c2_61 = arith.constant 2 : index
    %c1_62 = arith.constant 1 : index
    %158 = vector.load %arg7[%c0_60, %c2_61, %c1_62] : memref<4x20x20xf32, #tpu.memory_space<vmem>>, vector<1x18x18xf32>
    %159 = vector.shape_cast %158 : vector<1x18x18xf32> to vector<18x18xf32>
    %c7 = arith.constant 7 : index
    %160 = memref.load %arg2[%c7] : memref<144xf32, #tpu.memory_space<smem>>
    %161 = vector.broadcast %160 : f32 to vector<18x18xf32>
    %162 = arith.mulf %161, %159 : vector<18x18xf32>
    %163 = arith.addf %145, %162 : vector<18x18xf32>
    %c43 = arith.constant 43 : index
    %164 = memref.load %arg2[%c43] : memref<144xf32, #tpu.memory_space<smem>>
    %165 = vector.broadcast %164 : f32 to vector<18x18xf32>
    %166 = arith.mulf %165, %159 : vector<18x18xf32>
    %167 = arith.addf %149, %166 : vector<18x18xf32>
    %c79 = arith.constant 79 : index
    %168 = memref.load %arg2[%c79] : memref<144xf32, #tpu.memory_space<smem>>
    %169 = vector.broadcast %168 : f32 to vector<18x18xf32>
    %170 = arith.mulf %169, %159 : vector<18x18xf32>
    %171 = arith.addf %153, %170 : vector<18x18xf32>
    %c115 = arith.constant 115 : index
    %172 = memref.load %arg2[%c115] : memref<144xf32, #tpu.memory_space<smem>>
    %173 = vector.broadcast %172 : f32 to vector<18x18xf32>
    %174 = arith.mulf %173, %159 : vector<18x18xf32>
    %175 = arith.addf %157, %174 : vector<18x18xf32>
    %c0_63 = arith.constant 0 : index
    %c2_64 = arith.constant 2 : index
    %c2_65 = arith.constant 2 : index
    %176 = vector.load %arg7[%c0_63, %c2_64, %c2_65] : memref<4x20x20xf32, #tpu.memory_space<vmem>>, vector<1x18x18xf32>
    %177 = vector.shape_cast %176 : vector<1x18x18xf32> to vector<18x18xf32>
    %c8 = arith.constant 8 : index
    %178 = memref.load %arg2[%c8] : memref<144xf32, #tpu.memory_space<smem>>
    %179 = vector.broadcast %178 : f32 to vector<18x18xf32>
    %180 = arith.mulf %179, %177 : vector<18x18xf32>
    %181 = arith.addf %163, %180 : vector<18x18xf32>
    %c44 = arith.constant 44 : index
    %182 = memref.load %arg2[%c44] : memref<144xf32, #tpu.memory_space<smem>>
    %183 = vector.broadcast %182 : f32 to vector<18x18xf32>
    %184 = arith.mulf %183, %177 : vector<18x18xf32>
    %185 = arith.addf %167, %184 : vector<18x18xf32>
    %c80 = arith.constant 80 : index
    %186 = memref.load %arg2[%c80] : memref<144xf32, #tpu.memory_space<smem>>
    %187 = vector.broadcast %186 : f32 to vector<18x18xf32>
    %188 = arith.mulf %187, %177 : vector<18x18xf32>
    %189 = arith.addf %171, %188 : vector<18x18xf32>
    %c116 = arith.constant 116 : index
    %190 = memref.load %arg2[%c116] : memref<144xf32, #tpu.memory_space<smem>>
    %191 = vector.broadcast %190 : f32 to vector<18x18xf32>
    %192 = arith.mulf %191, %177 : vector<18x18xf32>
    %193 = arith.addf %175, %192 : vector<18x18xf32>
    %c1_66 = arith.constant 1 : index
    %c0_67 = arith.constant 0 : index
    %c0_68 = arith.constant 0 : index
    %194 = vector.load %arg7[%c1_66, %c0_67, %c0_68] : memref<4x20x20xf32, #tpu.memory_space<vmem>>, vector<1x18x18xf32>
    %195 = vector.shape_cast %194 : vector<1x18x18xf32> to vector<18x18xf32>
    %c9 = arith.constant 9 : index
    %196 = memref.load %arg2[%c9] : memref<144xf32, #tpu.memory_space<smem>>
    %197 = vector.broadcast %196 : f32 to vector<18x18xf32>
    %198 = arith.mulf %197, %195 : vector<18x18xf32>
    %199 = arith.addf %181, %198 : vector<18x18xf32>
    %c45 = arith.constant 45 : index
    %200 = memref.load %arg2[%c45] : memref<144xf32, #tpu.memory_space<smem>>
    %201 = vector.broadcast %200 : f32 to vector<18x18xf32>
    %202 = arith.mulf %201, %195 : vector<18x18xf32>
    %203 = arith.addf %185, %202 : vector<18x18xf32>
    %c81 = arith.constant 81 : index
    %204 = memref.load %arg2[%c81] : memref<144xf32, #tpu.memory_space<smem>>
    %205 = vector.broadcast %204 : f32 to vector<18x18xf32>
    %206 = arith.mulf %205, %195 : vector<18x18xf32>
    %207 = arith.addf %189, %206 : vector<18x18xf32>
    %c117 = arith.constant 117 : index
    %208 = memref.load %arg2[%c117] : memref<144xf32, #tpu.memory_space<smem>>
    %209 = vector.broadcast %208 : f32 to vector<18x18xf32>
    %210 = arith.mulf %209, %195 : vector<18x18xf32>
    %211 = arith.addf %193, %210 : vector<18x18xf32>
    %c1_69 = arith.constant 1 : index
    %c0_70 = arith.constant 0 : index
    %c1_71 = arith.constant 1 : index
    %212 = vector.load %arg7[%c1_69, %c0_70, %c1_71] : memref<4x20x20xf32, #tpu.memory_space<vmem>>, vector<1x18x18xf32>
    %213 = vector.shape_cast %212 : vector<1x18x18xf32> to vector<18x18xf32>
    %c10 = arith.constant 10 : index
    %214 = memref.load %arg2[%c10] : memref<144xf32, #tpu.memory_space<smem>>
    %215 = vector.broadcast %214 : f32 to vector<18x18xf32>
    %216 = arith.mulf %215, %213 : vector<18x18xf32>
    %217 = arith.addf %199, %216 : vector<18x18xf32>
    %c46 = arith.constant 46 : index
    %218 = memref.load %arg2[%c46] : memref<144xf32, #tpu.memory_space<smem>>
    %219 = vector.broadcast %218 : f32 to vector<18x18xf32>
    %220 = arith.mulf %219, %213 : vector<18x18xf32>
    %221 = arith.addf %203, %220 : vector<18x18xf32>
    %c82 = arith.constant 82 : index
    %222 = memref.load %arg2[%c82] : memref<144xf32, #tpu.memory_space<smem>>
    %223 = vector.broadcast %222 : f32 to vector<18x18xf32>
    %224 = arith.mulf %223, %213 : vector<18x18xf32>
    %225 = arith.addf %207, %224 : vector<18x18xf32>
    %c118 = arith.constant 118 : index
    %226 = memref.load %arg2[%c118] : memref<144xf32, #tpu.memory_space<smem>>
    %227 = vector.broadcast %226 : f32 to vector<18x18xf32>
    %228 = arith.mulf %227, %213 : vector<18x18xf32>
    %229 = arith.addf %211, %228 : vector<18x18xf32>
    %c1_72 = arith.constant 1 : index
    %c0_73 = arith.constant 0 : index
    %c2_74 = arith.constant 2 : index
    %230 = vector.load %arg7[%c1_72, %c0_73, %c2_74] : memref<4x20x20xf32, #tpu.memory_space<vmem>>, vector<1x18x18xf32>
    %231 = vector.shape_cast %230 : vector<1x18x18xf32> to vector<18x18xf32>
    %c11 = arith.constant 11 : index
    %232 = memref.load %arg2[%c11] : memref<144xf32, #tpu.memory_space<smem>>
    %233 = vector.broadcast %232 : f32 to vector<18x18xf32>
    %234 = arith.mulf %233, %231 : vector<18x18xf32>
    %235 = arith.addf %217, %234 : vector<18x18xf32>
    %c47 = arith.constant 47 : index
    %236 = memref.load %arg2[%c47] : memref<144xf32, #tpu.memory_space<smem>>
    %237 = vector.broadcast %236 : f32 to vector<18x18xf32>
    %238 = arith.mulf %237, %231 : vector<18x18xf32>
    %239 = arith.addf %221, %238 : vector<18x18xf32>
    %c83 = arith.constant 83 : index
    %240 = memref.load %arg2[%c83] : memref<144xf32, #tpu.memory_space<smem>>
    %241 = vector.broadcast %240 : f32 to vector<18x18xf32>
    %242 = arith.mulf %241, %231 : vector<18x18xf32>
    %243 = arith.addf %225, %242 : vector<18x18xf32>
    %c119 = arith.constant 119 : index
    %244 = memref.load %arg2[%c119] : memref<144xf32, #tpu.memory_space<smem>>
    %245 = vector.broadcast %244 : f32 to vector<18x18xf32>
    %246 = arith.mulf %245, %231 : vector<18x18xf32>
    %247 = arith.addf %229, %246 : vector<18x18xf32>
    %c1_75 = arith.constant 1 : index
    %c1_76 = arith.constant 1 : index
    %c0_77 = arith.constant 0 : index
    %248 = vector.load %arg7[%c1_75, %c1_76, %c0_77] : memref<4x20x20xf32, #tpu.memory_space<vmem>>, vector<1x18x18xf32>
    %249 = vector.shape_cast %248 : vector<1x18x18xf32> to vector<18x18xf32>
    %c12 = arith.constant 12 : index
    %250 = memref.load %arg2[%c12] : memref<144xf32, #tpu.memory_space<smem>>
    %251 = vector.broadcast %250 : f32 to vector<18x18xf32>
    %252 = arith.mulf %251, %249 : vector<18x18xf32>
    %253 = arith.addf %235, %252 : vector<18x18xf32>
    %c48 = arith.constant 48 : index
    %254 = memref.load %arg2[%c48] : memref<144xf32, #tpu.memory_space<smem>>
    %255 = vector.broadcast %254 : f32 to vector<18x18xf32>
    %256 = arith.mulf %255, %249 : vector<18x18xf32>
    %257 = arith.addf %239, %256 : vector<18x18xf32>
    %c84 = arith.constant 84 : index
    %258 = memref.load %arg2[%c84] : memref<144xf32, #tpu.memory_space<smem>>
    %259 = vector.broadcast %258 : f32 to vector<18x18xf32>
    %260 = arith.mulf %259, %249 : vector<18x18xf32>
    %261 = arith.addf %243, %260 : vector<18x18xf32>
    %c120 = arith.constant 120 : index
    %262 = memref.load %arg2[%c120] : memref<144xf32, #tpu.memory_space<smem>>
    %263 = vector.broadcast %262 : f32 to vector<18x18xf32>
    %264 = arith.mulf %263, %249 : vector<18x18xf32>
    %265 = arith.addf %247, %264 : vector<18x18xf32>
    %c1_78 = arith.constant 1 : index
    %c1_79 = arith.constant 1 : index
    %c1_80 = arith.constant 1 : index
    %266 = vector.load %arg7[%c1_78, %c1_79, %c1_80] : memref<4x20x20xf32, #tpu.memory_space<vmem>>, vector<1x18x18xf32>
    %267 = vector.shape_cast %266 : vector<1x18x18xf32> to vector<18x18xf32>
    %c13 = arith.constant 13 : index
    %268 = memref.load %arg2[%c13] : memref<144xf32, #tpu.memory_space<smem>>
    %269 = vector.broadcast %268 : f32 to vector<18x18xf32>
    %270 = arith.mulf %269, %267 : vector<18x18xf32>
    %271 = arith.addf %253, %270 : vector<18x18xf32>
    %c49 = arith.constant 49 : index
    %272 = memref.load %arg2[%c49] : memref<144xf32, #tpu.memory_space<smem>>
    %273 = vector.broadcast %272 : f32 to vector<18x18xf32>
    %274 = arith.mulf %273, %267 : vector<18x18xf32>
    %275 = arith.addf %257, %274 : vector<18x18xf32>
    %c85 = arith.constant 85 : index
    %276 = memref.load %arg2[%c85] : memref<144xf32, #tpu.memory_space<smem>>
    %277 = vector.broadcast %276 : f32 to vector<18x18xf32>
    %278 = arith.mulf %277, %267 : vector<18x18xf32>
    %279 = arith.addf %261, %278 : vector<18x18xf32>
    %c121 = arith.constant 121 : index
    %280 = memref.load %arg2[%c121] : memref<144xf32, #tpu.memory_space<smem>>
    %281 = vector.broadcast %280 : f32 to vector<18x18xf32>
    %282 = arith.mulf %281, %267 : vector<18x18xf32>
    %283 = arith.addf %265, %282 : vector<18x18xf32>
    %c1_81 = arith.constant 1 : index
    %c1_82 = arith.constant 1 : index
    %c2_83 = arith.constant 2 : index
    %284 = vector.load %arg7[%c1_81, %c1_82, %c2_83] : memref<4x20x20xf32, #tpu.memory_space<vmem>>, vector<1x18x18xf32>
    %285 = vector.shape_cast %284 : vector<1x18x18xf32> to vector<18x18xf32>
    %c14 = arith.constant 14 : index
    %286 = memref.load %arg2[%c14] : memref<144xf32, #tpu.memory_space<smem>>
    %287 = vector.broadcast %286 : f32 to vector<18x18xf32>
    %288 = arith.mulf %287, %285 : vector<18x18xf32>
    %289 = arith.addf %271, %288 : vector<18x18xf32>
    %c50 = arith.constant 50 : index
    %290 = memref.load %arg2[%c50] : memref<144xf32, #tpu.memory_space<smem>>
    %291 = vector.broadcast %290 : f32 to vector<18x18xf32>
    %292 = arith.mulf %291, %285 : vector<18x18xf32>
    %293 = arith.addf %275, %292 : vector<18x18xf32>
    %c86 = arith.constant 86 : index
    %294 = memref.load %arg2[%c86] : memref<144xf32, #tpu.memory_space<smem>>
    %295 = vector.broadcast %294 : f32 to vector<18x18xf32>
    %296 = arith.mulf %295, %285 : vector<18x18xf32>
    %297 = arith.addf %279, %296 : vector<18x18xf32>
    %c122 = arith.constant 122 : index
    %298 = memref.load %arg2[%c122] : memref<144xf32, #tpu.memory_space<smem>>
    %299 = vector.broadcast %298 : f32 to vector<18x18xf32>
    %300 = arith.mulf %299, %285 : vector<18x18xf32>
    %301 = arith.addf %283, %300 : vector<18x18xf32>
    %c1_84 = arith.constant 1 : index
    %c2_85 = arith.constant 2 : index
    %c0_86 = arith.constant 0 : index
    %302 = vector.load %arg7[%c1_84, %c2_85, %c0_86] : memref<4x20x20xf32, #tpu.memory_space<vmem>>, vector<1x18x18xf32>
    %303 = vector.shape_cast %302 : vector<1x18x18xf32> to vector<18x18xf32>
    %c15 = arith.constant 15 : index
    %304 = memref.load %arg2[%c15] : memref<144xf32, #tpu.memory_space<smem>>
    %305 = vector.broadcast %304 : f32 to vector<18x18xf32>
    %306 = arith.mulf %305, %303 : vector<18x18xf32>
    %307 = arith.addf %289, %306 : vector<18x18xf32>
    %c51 = arith.constant 51 : index
    %308 = memref.load %arg2[%c51] : memref<144xf32, #tpu.memory_space<smem>>
    %309 = vector.broadcast %308 : f32 to vector<18x18xf32>
    %310 = arith.mulf %309, %303 : vector<18x18xf32>
    %311 = arith.addf %293, %310 : vector<18x18xf32>
    %c87 = arith.constant 87 : index
    %312 = memref.load %arg2[%c87] : memref<144xf32, #tpu.memory_space<smem>>
    %313 = vector.broadcast %312 : f32 to vector<18x18xf32>
    %314 = arith.mulf %313, %303 : vector<18x18xf32>
    %315 = arith.addf %297, %314 : vector<18x18xf32>
    %c123 = arith.constant 123 : index
    %316 = memref.load %arg2[%c123] : memref<144xf32, #tpu.memory_space<smem>>
    %317 = vector.broadcast %316 : f32 to vector<18x18xf32>
    %318 = arith.mulf %317, %303 : vector<18x18xf32>
    %319 = arith.addf %301, %318 : vector<18x18xf32>
    %c1_87 = arith.constant 1 : index
    %c2_88 = arith.constant 2 : index
    %c1_89 = arith.constant 1 : index
    %320 = vector.load %arg7[%c1_87, %c2_88, %c1_89] : memref<4x20x20xf32, #tpu.memory_space<vmem>>, vector<1x18x18xf32>
    %321 = vector.shape_cast %320 : vector<1x18x18xf32> to vector<18x18xf32>
    %c16 = arith.constant 16 : index
    %322 = memref.load %arg2[%c16] : memref<144xf32, #tpu.memory_space<smem>>
    %323 = vector.broadcast %322 : f32 to vector<18x18xf32>
    %324 = arith.mulf %323, %321 : vector<18x18xf32>
    %325 = arith.addf %307, %324 : vector<18x18xf32>
    %c52 = arith.constant 52 : index
    %326 = memref.load %arg2[%c52] : memref<144xf32, #tpu.memory_space<smem>>
    %327 = vector.broadcast %326 : f32 to vector<18x18xf32>
    %328 = arith.mulf %327, %321 : vector<18x18xf32>
    %329 = arith.addf %311, %328 : vector<18x18xf32>
    %c88 = arith.constant 88 : index
    %330 = memref.load %arg2[%c88] : memref<144xf32, #tpu.memory_space<smem>>
    %331 = vector.broadcast %330 : f32 to vector<18x18xf32>
    %332 = arith.mulf %331, %321 : vector<18x18xf32>
    %333 = arith.addf %315, %332 : vector<18x18xf32>
    %c124 = arith.constant 124 : index
    %334 = memref.load %arg2[%c124] : memref<144xf32, #tpu.memory_space<smem>>
    %335 = vector.broadcast %334 : f32 to vector<18x18xf32>
    %336 = arith.mulf %335, %321 : vector<18x18xf32>
    %337 = arith.addf %319, %336 : vector<18x18xf32>
    %c1_90 = arith.constant 1 : index
    %c2_91 = arith.constant 2 : index
    %c2_92 = arith.constant 2 : index
    %338 = vector.load %arg7[%c1_90, %c2_91, %c2_92] : memref<4x20x20xf32, #tpu.memory_space<vmem>>, vector<1x18x18xf32>
    %339 = vector.shape_cast %338 : vector<1x18x18xf32> to vector<18x18xf32>
    %c17 = arith.constant 17 : index
    %340 = memref.load %arg2[%c17] : memref<144xf32, #tpu.memory_space<smem>>
    %341 = vector.broadcast %340 : f32 to vector<18x18xf32>
    %342 = arith.mulf %341, %339 : vector<18x18xf32>
    %343 = arith.addf %325, %342 : vector<18x18xf32>
    %c53 = arith.constant 53 : index
    %344 = memref.load %arg2[%c53] : memref<144xf32, #tpu.memory_space<smem>>
    %345 = vector.broadcast %344 : f32 to vector<18x18xf32>
    %346 = arith.mulf %345, %339 : vector<18x18xf32>
    %347 = arith.addf %329, %346 : vector<18x18xf32>
    %c89 = arith.constant 89 : index
    %348 = memref.load %arg2[%c89] : memref<144xf32, #tpu.memory_space<smem>>
    %349 = vector.broadcast %348 : f32 to vector<18x18xf32>
    %350 = arith.mulf %349, %339 : vector<18x18xf32>
    %351 = arith.addf %333, %350 : vector<18x18xf32>
    %c125 = arith.constant 125 : index
    %352 = memref.load %arg2[%c125] : memref<144xf32, #tpu.memory_space<smem>>
    %353 = vector.broadcast %352 : f32 to vector<18x18xf32>
    %354 = arith.mulf %353, %339 : vector<18x18xf32>
    %355 = arith.addf %337, %354 : vector<18x18xf32>
    %c2_93 = arith.constant 2 : index
    %c0_94 = arith.constant 0 : index
    %c0_95 = arith.constant 0 : index
    %356 = vector.load %arg7[%c2_93, %c0_94, %c0_95] : memref<4x20x20xf32, #tpu.memory_space<vmem>>, vector<1x18x18xf32>
    %357 = vector.shape_cast %356 : vector<1x18x18xf32> to vector<18x18xf32>
    %c18 = arith.constant 18 : index
    %358 = memref.load %arg2[%c18] : memref<144xf32, #tpu.memory_space<smem>>
    %359 = vector.broadcast %358 : f32 to vector<18x18xf32>
    %360 = arith.mulf %359, %357 : vector<18x18xf32>
    %361 = arith.addf %343, %360 : vector<18x18xf32>
    %c54 = arith.constant 54 : index
    %362 = memref.load %arg2[%c54] : memref<144xf32, #tpu.memory_space<smem>>
    %363 = vector.broadcast %362 : f32 to vector<18x18xf32>
    %364 = arith.mulf %363, %357 : vector<18x18xf32>
    %365 = arith.addf %347, %364 : vector<18x18xf32>
    %c90 = arith.constant 90 : index
    %366 = memref.load %arg2[%c90] : memref<144xf32, #tpu.memory_space<smem>>
    %367 = vector.broadcast %366 : f32 to vector<18x18xf32>
    %368 = arith.mulf %367, %357 : vector<18x18xf32>
    %369 = arith.addf %351, %368 : vector<18x18xf32>
    %c126 = arith.constant 126 : index
    %370 = memref.load %arg2[%c126] : memref<144xf32, #tpu.memory_space<smem>>
    %371 = vector.broadcast %370 : f32 to vector<18x18xf32>
    %372 = arith.mulf %371, %357 : vector<18x18xf32>
    %373 = arith.addf %355, %372 : vector<18x18xf32>
    %c2_96 = arith.constant 2 : index
    %c0_97 = arith.constant 0 : index
    %c1_98 = arith.constant 1 : index
    %374 = vector.load %arg7[%c2_96, %c0_97, %c1_98] : memref<4x20x20xf32, #tpu.memory_space<vmem>>, vector<1x18x18xf32>
    %375 = vector.shape_cast %374 : vector<1x18x18xf32> to vector<18x18xf32>
    %c19 = arith.constant 19 : index
    %376 = memref.load %arg2[%c19] : memref<144xf32, #tpu.memory_space<smem>>
    %377 = vector.broadcast %376 : f32 to vector<18x18xf32>
    %378 = arith.mulf %377, %375 : vector<18x18xf32>
    %379 = arith.addf %361, %378 : vector<18x18xf32>
    %c55 = arith.constant 55 : index
    %380 = memref.load %arg2[%c55] : memref<144xf32, #tpu.memory_space<smem>>
    %381 = vector.broadcast %380 : f32 to vector<18x18xf32>
    %382 = arith.mulf %381, %375 : vector<18x18xf32>
    %383 = arith.addf %365, %382 : vector<18x18xf32>
    %c91 = arith.constant 91 : index
    %384 = memref.load %arg2[%c91] : memref<144xf32, #tpu.memory_space<smem>>
    %385 = vector.broadcast %384 : f32 to vector<18x18xf32>
    %386 = arith.mulf %385, %375 : vector<18x18xf32>
    %387 = arith.addf %369, %386 : vector<18x18xf32>
    %c127 = arith.constant 127 : index
    %388 = memref.load %arg2[%c127] : memref<144xf32, #tpu.memory_space<smem>>
    %389 = vector.broadcast %388 : f32 to vector<18x18xf32>
    %390 = arith.mulf %389, %375 : vector<18x18xf32>
    %391 = arith.addf %373, %390 : vector<18x18xf32>
    %c2_99 = arith.constant 2 : index
    %c0_100 = arith.constant 0 : index
    %c2_101 = arith.constant 2 : index
    %392 = vector.load %arg7[%c2_99, %c0_100, %c2_101] : memref<4x20x20xf32, #tpu.memory_space<vmem>>, vector<1x18x18xf32>
    %393 = vector.shape_cast %392 : vector<1x18x18xf32> to vector<18x18xf32>
    %c20 = arith.constant 20 : index
    %394 = memref.load %arg2[%c20] : memref<144xf32, #tpu.memory_space<smem>>
    %395 = vector.broadcast %394 : f32 to vector<18x18xf32>
    %396 = arith.mulf %395, %393 : vector<18x18xf32>
    %397 = arith.addf %379, %396 : vector<18x18xf32>
    %c56 = arith.constant 56 : index
    %398 = memref.load %arg2[%c56] : memref<144xf32, #tpu.memory_space<smem>>
    %399 = vector.broadcast %398 : f32 to vector<18x18xf32>
    %400 = arith.mulf %399, %393 : vector<18x18xf32>
    %401 = arith.addf %383, %400 : vector<18x18xf32>
    %c92 = arith.constant 92 : index
    %402 = memref.load %arg2[%c92] : memref<144xf32, #tpu.memory_space<smem>>
    %403 = vector.broadcast %402 : f32 to vector<18x18xf32>
    %404 = arith.mulf %403, %393 : vector<18x18xf32>
    %405 = arith.addf %387, %404 : vector<18x18xf32>
    %c128 = arith.constant 128 : index
    %406 = memref.load %arg2[%c128] : memref<144xf32, #tpu.memory_space<smem>>
    %407 = vector.broadcast %406 : f32 to vector<18x18xf32>
    %408 = arith.mulf %407, %393 : vector<18x18xf32>
    %409 = arith.addf %391, %408 : vector<18x18xf32>
    %c2_102 = arith.constant 2 : index
    %c1_103 = arith.constant 1 : index
    %c0_104 = arith.constant 0 : index
    %410 = vector.load %arg7[%c2_102, %c1_103, %c0_104] : memref<4x20x20xf32, #tpu.memory_space<vmem>>, vector<1x18x18xf32>
    %411 = vector.shape_cast %410 : vector<1x18x18xf32> to vector<18x18xf32>
    %c21 = arith.constant 21 : index
    %412 = memref.load %arg2[%c21] : memref<144xf32, #tpu.memory_space<smem>>
    %413 = vector.broadcast %412 : f32 to vector<18x18xf32>
    %414 = arith.mulf %413, %411 : vector<18x18xf32>
    %415 = arith.addf %397, %414 : vector<18x18xf32>
    %c57 = arith.constant 57 : index
    %416 = memref.load %arg2[%c57] : memref<144xf32, #tpu.memory_space<smem>>
    %417 = vector.broadcast %416 : f32 to vector<18x18xf32>
    %418 = arith.mulf %417, %411 : vector<18x18xf32>
    %419 = arith.addf %401, %418 : vector<18x18xf32>
    %c93 = arith.constant 93 : index
    %420 = memref.load %arg2[%c93] : memref<144xf32, #tpu.memory_space<smem>>
    %421 = vector.broadcast %420 : f32 to vector<18x18xf32>
    %422 = arith.mulf %421, %411 : vector<18x18xf32>
    %423 = arith.addf %405, %422 : vector<18x18xf32>
    %c129 = arith.constant 129 : index
    %424 = memref.load %arg2[%c129] : memref<144xf32, #tpu.memory_space<smem>>
    %425 = vector.broadcast %424 : f32 to vector<18x18xf32>
    %426 = arith.mulf %425, %411 : vector<18x18xf32>
    %427 = arith.addf %409, %426 : vector<18x18xf32>
    %c2_105 = arith.constant 2 : index
    %c1_106 = arith.constant 1 : index
    %c1_107 = arith.constant 1 : index
    %428 = vector.load %arg7[%c2_105, %c1_106, %c1_107] : memref<4x20x20xf32, #tpu.memory_space<vmem>>, vector<1x18x18xf32>
    %429 = vector.shape_cast %428 : vector<1x18x18xf32> to vector<18x18xf32>
    %c22 = arith.constant 22 : index
    %430 = memref.load %arg2[%c22] : memref<144xf32, #tpu.memory_space<smem>>
    %431 = vector.broadcast %430 : f32 to vector<18x18xf32>
    %432 = arith.mulf %431, %429 : vector<18x18xf32>
    %433 = arith.addf %415, %432 : vector<18x18xf32>
    %c58 = arith.constant 58 : index
    %434 = memref.load %arg2[%c58] : memref<144xf32, #tpu.memory_space<smem>>
    %435 = vector.broadcast %434 : f32 to vector<18x18xf32>
    %436 = arith.mulf %435, %429 : vector<18x18xf32>
    %437 = arith.addf %419, %436 : vector<18x18xf32>
    %c94 = arith.constant 94 : index
    %438 = memref.load %arg2[%c94] : memref<144xf32, #tpu.memory_space<smem>>
    %439 = vector.broadcast %438 : f32 to vector<18x18xf32>
    %440 = arith.mulf %439, %429 : vector<18x18xf32>
    %441 = arith.addf %423, %440 : vector<18x18xf32>
    %c130 = arith.constant 130 : index
    %442 = memref.load %arg2[%c130] : memref<144xf32, #tpu.memory_space<smem>>
    %443 = vector.broadcast %442 : f32 to vector<18x18xf32>
    %444 = arith.mulf %443, %429 : vector<18x18xf32>
    %445 = arith.addf %427, %444 : vector<18x18xf32>
    %c2_108 = arith.constant 2 : index
    %c1_109 = arith.constant 1 : index
    %c2_110 = arith.constant 2 : index
    %446 = vector.load %arg7[%c2_108, %c1_109, %c2_110] : memref<4x20x20xf32, #tpu.memory_space<vmem>>, vector<1x18x18xf32>
    %447 = vector.shape_cast %446 : vector<1x18x18xf32> to vector<18x18xf32>
    %c23 = arith.constant 23 : index
    %448 = memref.load %arg2[%c23] : memref<144xf32, #tpu.memory_space<smem>>
    %449 = vector.broadcast %448 : f32 to vector<18x18xf32>
    %450 = arith.mulf %449, %447 : vector<18x18xf32>
    %451 = arith.addf %433, %450 : vector<18x18xf32>
    %c59 = arith.constant 59 : index
    %452 = memref.load %arg2[%c59] : memref<144xf32, #tpu.memory_space<smem>>
    %453 = vector.broadcast %452 : f32 to vector<18x18xf32>
    %454 = arith.mulf %453, %447 : vector<18x18xf32>
    %455 = arith.addf %437, %454 : vector<18x18xf32>
    %c95 = arith.constant 95 : index
    %456 = memref.load %arg2[%c95] : memref<144xf32, #tpu.memory_space<smem>>
    %457 = vector.broadcast %456 : f32 to vector<18x18xf32>
    %458 = arith.mulf %457, %447 : vector<18x18xf32>
    %459 = arith.addf %441, %458 : vector<18x18xf32>
    %c131 = arith.constant 131 : index
    %460 = memref.load %arg2[%c131] : memref<144xf32, #tpu.memory_space<smem>>
    %461 = vector.broadcast %460 : f32 to vector<18x18xf32>
    %462 = arith.mulf %461, %447 : vector<18x18xf32>
    %463 = arith.addf %445, %462 : vector<18x18xf32>
    %c2_111 = arith.constant 2 : index
    %c2_112 = arith.constant 2 : index
    %c0_113 = arith.constant 0 : index
    %464 = vector.load %arg7[%c2_111, %c2_112, %c0_113] : memref<4x20x20xf32, #tpu.memory_space<vmem>>, vector<1x18x18xf32>
    %465 = vector.shape_cast %464 : vector<1x18x18xf32> to vector<18x18xf32>
    %c24 = arith.constant 24 : index
    %466 = memref.load %arg2[%c24] : memref<144xf32, #tpu.memory_space<smem>>
    %467 = vector.broadcast %466 : f32 to vector<18x18xf32>
    %468 = arith.mulf %467, %465 : vector<18x18xf32>
    %469 = arith.addf %451, %468 : vector<18x18xf32>
    %c60 = arith.constant 60 : index
    %470 = memref.load %arg2[%c60] : memref<144xf32, #tpu.memory_space<smem>>
    %471 = vector.broadcast %470 : f32 to vector<18x18xf32>
    %472 = arith.mulf %471, %465 : vector<18x18xf32>
    %473 = arith.addf %455, %472 : vector<18x18xf32>
    %c96 = arith.constant 96 : index
    %474 = memref.load %arg2[%c96] : memref<144xf32, #tpu.memory_space<smem>>
    %475 = vector.broadcast %474 : f32 to vector<18x18xf32>
    %476 = arith.mulf %475, %465 : vector<18x18xf32>
    %477 = arith.addf %459, %476 : vector<18x18xf32>
    %c132 = arith.constant 132 : index
    %478 = memref.load %arg2[%c132] : memref<144xf32, #tpu.memory_space<smem>>
    %479 = vector.broadcast %478 : f32 to vector<18x18xf32>
    %480 = arith.mulf %479, %465 : vector<18x18xf32>
    %481 = arith.addf %463, %480 : vector<18x18xf32>
    %c2_114 = arith.constant 2 : index
    %c2_115 = arith.constant 2 : index
    %c1_116 = arith.constant 1 : index
    %482 = vector.load %arg7[%c2_114, %c2_115, %c1_116] : memref<4x20x20xf32, #tpu.memory_space<vmem>>, vector<1x18x18xf32>
    %483 = vector.shape_cast %482 : vector<1x18x18xf32> to vector<18x18xf32>
    %c25 = arith.constant 25 : index
    %484 = memref.load %arg2[%c25] : memref<144xf32, #tpu.memory_space<smem>>
    %485 = vector.broadcast %484 : f32 to vector<18x18xf32>
    %486 = arith.mulf %485, %483 : vector<18x18xf32>
    %487 = arith.addf %469, %486 : vector<18x18xf32>
    %c61 = arith.constant 61 : index
    %488 = memref.load %arg2[%c61] : memref<144xf32, #tpu.memory_space<smem>>
    %489 = vector.broadcast %488 : f32 to vector<18x18xf32>
    %490 = arith.mulf %489, %483 : vector<18x18xf32>
    %491 = arith.addf %473, %490 : vector<18x18xf32>
    %c97 = arith.constant 97 : index
    %492 = memref.load %arg2[%c97] : memref<144xf32, #tpu.memory_space<smem>>
    %493 = vector.broadcast %492 : f32 to vector<18x18xf32>
    %494 = arith.mulf %493, %483 : vector<18x18xf32>
    %495 = arith.addf %477, %494 : vector<18x18xf32>
    %c133 = arith.constant 133 : index
    %496 = memref.load %arg2[%c133] : memref<144xf32, #tpu.memory_space<smem>>
    %497 = vector.broadcast %496 : f32 to vector<18x18xf32>
    %498 = arith.mulf %497, %483 : vector<18x18xf32>
    %499 = arith.addf %481, %498 : vector<18x18xf32>
    %c2_117 = arith.constant 2 : index
    %c2_118 = arith.constant 2 : index
    %c2_119 = arith.constant 2 : index
    %500 = vector.load %arg7[%c2_117, %c2_118, %c2_119] : memref<4x20x20xf32, #tpu.memory_space<vmem>>, vector<1x18x18xf32>
    %501 = vector.shape_cast %500 : vector<1x18x18xf32> to vector<18x18xf32>
    %c26 = arith.constant 26 : index
    %502 = memref.load %arg2[%c26] : memref<144xf32, #tpu.memory_space<smem>>
    %503 = vector.broadcast %502 : f32 to vector<18x18xf32>
    %504 = arith.mulf %503, %501 : vector<18x18xf32>
    %505 = arith.addf %487, %504 : vector<18x18xf32>
    %c62 = arith.constant 62 : index
    %506 = memref.load %arg2[%c62] : memref<144xf32, #tpu.memory_space<smem>>
    %507 = vector.broadcast %506 : f32 to vector<18x18xf32>
    %508 = arith.mulf %507, %501 : vector<18x18xf32>
    %509 = arith.addf %491, %508 : vector<18x18xf32>
    %c98 = arith.constant 98 : index
    %510 = memref.load %arg2[%c98] : memref<144xf32, #tpu.memory_space<smem>>
    %511 = vector.broadcast %510 : f32 to vector<18x18xf32>
    %512 = arith.mulf %511, %501 : vector<18x18xf32>
    %513 = arith.addf %495, %512 : vector<18x18xf32>
    %c134 = arith.constant 134 : index
    %514 = memref.load %arg2[%c134] : memref<144xf32, #tpu.memory_space<smem>>
    %515 = vector.broadcast %514 : f32 to vector<18x18xf32>
    %516 = arith.mulf %515, %501 : vector<18x18xf32>
    %517 = arith.addf %499, %516 : vector<18x18xf32>
    %c3_120 = arith.constant 3 : index
    %c0_121 = arith.constant 0 : index
    %c0_122 = arith.constant 0 : index
    %518 = vector.load %arg7[%c3_120, %c0_121, %c0_122] : memref<4x20x20xf32, #tpu.memory_space<vmem>>, vector<1x18x18xf32>
    %519 = vector.shape_cast %518 : vector<1x18x18xf32> to vector<18x18xf32>
    %c27 = arith.constant 27 : index
    %520 = memref.load %arg2[%c27] : memref<144xf32, #tpu.memory_space<smem>>
    %521 = vector.broadcast %520 : f32 to vector<18x18xf32>
    %522 = arith.mulf %521, %519 : vector<18x18xf32>
    %523 = arith.addf %505, %522 : vector<18x18xf32>
    %c63 = arith.constant 63 : index
    %524 = memref.load %arg2[%c63] : memref<144xf32, #tpu.memory_space<smem>>
    %525 = vector.broadcast %524 : f32 to vector<18x18xf32>
    %526 = arith.mulf %525, %519 : vector<18x18xf32>
    %527 = arith.addf %509, %526 : vector<18x18xf32>
    %c99 = arith.constant 99 : index
    %528 = memref.load %arg2[%c99] : memref<144xf32, #tpu.memory_space<smem>>
    %529 = vector.broadcast %528 : f32 to vector<18x18xf32>
    %530 = arith.mulf %529, %519 : vector<18x18xf32>
    %531 = arith.addf %513, %530 : vector<18x18xf32>
    %c135 = arith.constant 135 : index
    %532 = memref.load %arg2[%c135] : memref<144xf32, #tpu.memory_space<smem>>
    %533 = vector.broadcast %532 : f32 to vector<18x18xf32>
    %534 = arith.mulf %533, %519 : vector<18x18xf32>
    %535 = arith.addf %517, %534 : vector<18x18xf32>
    %c3_123 = arith.constant 3 : index
    %c0_124 = arith.constant 0 : index
    %c1_125 = arith.constant 1 : index
    %536 = vector.load %arg7[%c3_123, %c0_124, %c1_125] : memref<4x20x20xf32, #tpu.memory_space<vmem>>, vector<1x18x18xf32>
    %537 = vector.shape_cast %536 : vector<1x18x18xf32> to vector<18x18xf32>
    %c28 = arith.constant 28 : index
    %538 = memref.load %arg2[%c28] : memref<144xf32, #tpu.memory_space<smem>>
    %539 = vector.broadcast %538 : f32 to vector<18x18xf32>
    %540 = arith.mulf %539, %537 : vector<18x18xf32>
    %541 = arith.addf %523, %540 : vector<18x18xf32>
    %c64 = arith.constant 64 : index
    %542 = memref.load %arg2[%c64] : memref<144xf32, #tpu.memory_space<smem>>
    %543 = vector.broadcast %542 : f32 to vector<18x18xf32>
    %544 = arith.mulf %543, %537 : vector<18x18xf32>
    %545 = arith.addf %527, %544 : vector<18x18xf32>
    %c100 = arith.constant 100 : index
    %546 = memref.load %arg2[%c100] : memref<144xf32, #tpu.memory_space<smem>>
    %547 = vector.broadcast %546 : f32 to vector<18x18xf32>
    %548 = arith.mulf %547, %537 : vector<18x18xf32>
    %549 = arith.addf %531, %548 : vector<18x18xf32>
    %c136 = arith.constant 136 : index
    %550 = memref.load %arg2[%c136] : memref<144xf32, #tpu.memory_space<smem>>
    %551 = vector.broadcast %550 : f32 to vector<18x18xf32>
    %552 = arith.mulf %551, %537 : vector<18x18xf32>
    %553 = arith.addf %535, %552 : vector<18x18xf32>
    %c3_126 = arith.constant 3 : index
    %c0_127 = arith.constant 0 : index
    %c2_128 = arith.constant 2 : index
    %554 = vector.load %arg7[%c3_126, %c0_127, %c2_128] : memref<4x20x20xf32, #tpu.memory_space<vmem>>, vector<1x18x18xf32>
    %555 = vector.shape_cast %554 : vector<1x18x18xf32> to vector<18x18xf32>
    %c29 = arith.constant 29 : index
    %556 = memref.load %arg2[%c29] : memref<144xf32, #tpu.memory_space<smem>>
    %557 = vector.broadcast %556 : f32 to vector<18x18xf32>
    %558 = arith.mulf %557, %555 : vector<18x18xf32>
    %559 = arith.addf %541, %558 : vector<18x18xf32>
    %c65 = arith.constant 65 : index
    %560 = memref.load %arg2[%c65] : memref<144xf32, #tpu.memory_space<smem>>
    %561 = vector.broadcast %560 : f32 to vector<18x18xf32>
    %562 = arith.mulf %561, %555 : vector<18x18xf32>
    %563 = arith.addf %545, %562 : vector<18x18xf32>
    %c101 = arith.constant 101 : index
    %564 = memref.load %arg2[%c101] : memref<144xf32, #tpu.memory_space<smem>>
    %565 = vector.broadcast %564 : f32 to vector<18x18xf32>
    %566 = arith.mulf %565, %555 : vector<18x18xf32>
    %567 = arith.addf %549, %566 : vector<18x18xf32>
    %c137 = arith.constant 137 : index
    %568 = memref.load %arg2[%c137] : memref<144xf32, #tpu.memory_space<smem>>
    %569 = vector.broadcast %568 : f32 to vector<18x18xf32>
    %570 = arith.mulf %569, %555 : vector<18x18xf32>
    %571 = arith.addf %553, %570 : vector<18x18xf32>
    %c3_129 = arith.constant 3 : index
    %c1_130 = arith.constant 1 : index
    %c0_131 = arith.constant 0 : index
    %572 = vector.load %arg7[%c3_129, %c1_130, %c0_131] : memref<4x20x20xf32, #tpu.memory_space<vmem>>, vector<1x18x18xf32>
    %573 = vector.shape_cast %572 : vector<1x18x18xf32> to vector<18x18xf32>
    %c30 = arith.constant 30 : index
    %574 = memref.load %arg2[%c30] : memref<144xf32, #tpu.memory_space<smem>>
    %575 = vector.broadcast %574 : f32 to vector<18x18xf32>
    %576 = arith.mulf %575, %573 : vector<18x18xf32>
    %577 = arith.addf %559, %576 : vector<18x18xf32>
    %c66 = arith.constant 66 : index
    %578 = memref.load %arg2[%c66] : memref<144xf32, #tpu.memory_space<smem>>
    %579 = vector.broadcast %578 : f32 to vector<18x18xf32>
    %580 = arith.mulf %579, %573 : vector<18x18xf32>
    %581 = arith.addf %563, %580 : vector<18x18xf32>
    %c102 = arith.constant 102 : index
    %582 = memref.load %arg2[%c102] : memref<144xf32, #tpu.memory_space<smem>>
    %583 = vector.broadcast %582 : f32 to vector<18x18xf32>
    %584 = arith.mulf %583, %573 : vector<18x18xf32>
    %585 = arith.addf %567, %584 : vector<18x18xf32>
    %c138 = arith.constant 138 : index
    %586 = memref.load %arg2[%c138] : memref<144xf32, #tpu.memory_space<smem>>
    %587 = vector.broadcast %586 : f32 to vector<18x18xf32>
    %588 = arith.mulf %587, %573 : vector<18x18xf32>
    %589 = arith.addf %571, %588 : vector<18x18xf32>
    %c3_132 = arith.constant 3 : index
    %c1_133 = arith.constant 1 : index
    %c1_134 = arith.constant 1 : index
    %590 = vector.load %arg7[%c3_132, %c1_133, %c1_134] : memref<4x20x20xf32, #tpu.memory_space<vmem>>, vector<1x18x18xf32>
    %591 = vector.shape_cast %590 : vector<1x18x18xf32> to vector<18x18xf32>
    %c31 = arith.constant 31 : index
    %592 = memref.load %arg2[%c31] : memref<144xf32, #tpu.memory_space<smem>>
    %593 = vector.broadcast %592 : f32 to vector<18x18xf32>
    %594 = arith.mulf %593, %591 : vector<18x18xf32>
    %595 = arith.addf %577, %594 : vector<18x18xf32>
    %c67 = arith.constant 67 : index
    %596 = memref.load %arg2[%c67] : memref<144xf32, #tpu.memory_space<smem>>
    %597 = vector.broadcast %596 : f32 to vector<18x18xf32>
    %598 = arith.mulf %597, %591 : vector<18x18xf32>
    %599 = arith.addf %581, %598 : vector<18x18xf32>
    %c103 = arith.constant 103 : index
    %600 = memref.load %arg2[%c103] : memref<144xf32, #tpu.memory_space<smem>>
    %601 = vector.broadcast %600 : f32 to vector<18x18xf32>
    %602 = arith.mulf %601, %591 : vector<18x18xf32>
    %603 = arith.addf %585, %602 : vector<18x18xf32>
    %c139 = arith.constant 139 : index
    %604 = memref.load %arg2[%c139] : memref<144xf32, #tpu.memory_space<smem>>
    %605 = vector.broadcast %604 : f32 to vector<18x18xf32>
    %606 = arith.mulf %605, %591 : vector<18x18xf32>
    %607 = arith.addf %589, %606 : vector<18x18xf32>
    %c3_135 = arith.constant 3 : index
    %c1_136 = arith.constant 1 : index
    %c2_137 = arith.constant 2 : index
    %608 = vector.load %arg7[%c3_135, %c1_136, %c2_137] : memref<4x20x20xf32, #tpu.memory_space<vmem>>, vector<1x18x18xf32>
    %609 = vector.shape_cast %608 : vector<1x18x18xf32> to vector<18x18xf32>
    %c32 = arith.constant 32 : index
    %610 = memref.load %arg2[%c32] : memref<144xf32, #tpu.memory_space<smem>>
    %611 = vector.broadcast %610 : f32 to vector<18x18xf32>
    %612 = arith.mulf %611, %609 : vector<18x18xf32>
    %613 = arith.addf %595, %612 : vector<18x18xf32>
    %c68 = arith.constant 68 : index
    %614 = memref.load %arg2[%c68] : memref<144xf32, #tpu.memory_space<smem>>
    %615 = vector.broadcast %614 : f32 to vector<18x18xf32>
    %616 = arith.mulf %615, %609 : vector<18x18xf32>
    %617 = arith.addf %599, %616 : vector<18x18xf32>
    %c104 = arith.constant 104 : index
    %618 = memref.load %arg2[%c104] : memref<144xf32, #tpu.memory_space<smem>>
    %619 = vector.broadcast %618 : f32 to vector<18x18xf32>
    %620 = arith.mulf %619, %609 : vector<18x18xf32>
    %621 = arith.addf %603, %620 : vector<18x18xf32>
    %c140 = arith.constant 140 : index
    %622 = memref.load %arg2[%c140] : memref<144xf32, #tpu.memory_space<smem>>
    %623 = vector.broadcast %622 : f32 to vector<18x18xf32>
    %624 = arith.mulf %623, %609 : vector<18x18xf32>
    %625 = arith.addf %607, %624 : vector<18x18xf32>
    %c3_138 = arith.constant 3 : index
    %c2_139 = arith.constant 2 : index
    %c0_140 = arith.constant 0 : index
    %626 = vector.load %arg7[%c3_138, %c2_139, %c0_140] : memref<4x20x20xf32, #tpu.memory_space<vmem>>, vector<1x18x18xf32>
    %627 = vector.shape_cast %626 : vector<1x18x18xf32> to vector<18x18xf32>
    %c33 = arith.constant 33 : index
    %628 = memref.load %arg2[%c33] : memref<144xf32, #tpu.memory_space<smem>>
    %629 = vector.broadcast %628 : f32 to vector<18x18xf32>
    %630 = arith.mulf %629, %627 : vector<18x18xf32>
    %631 = arith.addf %613, %630 : vector<18x18xf32>
    %c69 = arith.constant 69 : index
    %632 = memref.load %arg2[%c69] : memref<144xf32, #tpu.memory_space<smem>>
    %633 = vector.broadcast %632 : f32 to vector<18x18xf32>
    %634 = arith.mulf %633, %627 : vector<18x18xf32>
    %635 = arith.addf %617, %634 : vector<18x18xf32>
    %c105 = arith.constant 105 : index
    %636 = memref.load %arg2[%c105] : memref<144xf32, #tpu.memory_space<smem>>
    %637 = vector.broadcast %636 : f32 to vector<18x18xf32>
    %638 = arith.mulf %637, %627 : vector<18x18xf32>
    %639 = arith.addf %621, %638 : vector<18x18xf32>
    %c141 = arith.constant 141 : index
    %640 = memref.load %arg2[%c141] : memref<144xf32, #tpu.memory_space<smem>>
    %641 = vector.broadcast %640 : f32 to vector<18x18xf32>
    %642 = arith.mulf %641, %627 : vector<18x18xf32>
    %643 = arith.addf %625, %642 : vector<18x18xf32>
    %c3_141 = arith.constant 3 : index
    %c2_142 = arith.constant 2 : index
    %c1_143 = arith.constant 1 : index
    %644 = vector.load %arg7[%c3_141, %c2_142, %c1_143] : memref<4x20x20xf32, #tpu.memory_space<vmem>>, vector<1x18x18xf32>
    %645 = vector.shape_cast %644 : vector<1x18x18xf32> to vector<18x18xf32>
    %c34 = arith.constant 34 : index
    %646 = memref.load %arg2[%c34] : memref<144xf32, #tpu.memory_space<smem>>
    %647 = vector.broadcast %646 : f32 to vector<18x18xf32>
    %648 = arith.mulf %647, %645 : vector<18x18xf32>
    %649 = arith.addf %631, %648 : vector<18x18xf32>
    %c70 = arith.constant 70 : index
    %650 = memref.load %arg2[%c70] : memref<144xf32, #tpu.memory_space<smem>>
    %651 = vector.broadcast %650 : f32 to vector<18x18xf32>
    %652 = arith.mulf %651, %645 : vector<18x18xf32>
    %653 = arith.addf %635, %652 : vector<18x18xf32>
    %c106 = arith.constant 106 : index
    %654 = memref.load %arg2[%c106] : memref<144xf32, #tpu.memory_space<smem>>
    %655 = vector.broadcast %654 : f32 to vector<18x18xf32>
    %656 = arith.mulf %655, %645 : vector<18x18xf32>
    %657 = arith.addf %639, %656 : vector<18x18xf32>
    %c142 = arith.constant 142 : index
    %658 = memref.load %arg2[%c142] : memref<144xf32, #tpu.memory_space<smem>>
    %659 = vector.broadcast %658 : f32 to vector<18x18xf32>
    %660 = arith.mulf %659, %645 : vector<18x18xf32>
    %661 = arith.addf %643, %660 : vector<18x18xf32>
    %c3_144 = arith.constant 3 : index
    %c2_145 = arith.constant 2 : index
    %c2_146 = arith.constant 2 : index
    %662 = vector.load %arg7[%c3_144, %c2_145, %c2_146] : memref<4x20x20xf32, #tpu.memory_space<vmem>>, vector<1x18x18xf32>
    %663 = vector.shape_cast %662 : vector<1x18x18xf32> to vector<18x18xf32>
    %c35 = arith.constant 35 : index
    %664 = memref.load %arg2[%c35] : memref<144xf32, #tpu.memory_space<smem>>
    %665 = vector.broadcast %664 : f32 to vector<18x18xf32>
    %666 = arith.mulf %665, %663 : vector<18x18xf32>
    %667 = arith.addf %649, %666 : vector<18x18xf32>
    %c71 = arith.constant 71 : index
    %668 = memref.load %arg2[%c71] : memref<144xf32, #tpu.memory_space<smem>>
    %669 = vector.broadcast %668 : f32 to vector<18x18xf32>
    %670 = arith.mulf %669, %663 : vector<18x18xf32>
    %671 = arith.addf %653, %670 : vector<18x18xf32>
    %c107 = arith.constant 107 : index
    %672 = memref.load %arg2[%c107] : memref<144xf32, #tpu.memory_space<smem>>
    %673 = vector.broadcast %672 : f32 to vector<18x18xf32>
    %674 = arith.mulf %673, %663 : vector<18x18xf32>
    %675 = arith.addf %657, %674 : vector<18x18xf32>
    %c143 = arith.constant 143 : index
    %676 = memref.load %arg2[%c143] : memref<144xf32, #tpu.memory_space<smem>>
    %677 = vector.broadcast %676 : f32 to vector<18x18xf32>
    %678 = arith.mulf %677, %663 : vector<18x18xf32>
    %679 = arith.addf %661, %678 : vector<18x18xf32>
    %cst_147 = arith.constant 0.000000e+00 : f32
    %680 = vector.broadcast %cst_147 : f32 to vector<18x18xf32>
    %681 = arith.cmpf oge, %667, %680 : vector<18x18xf32>
    %cst_148 = arith.constant 0.00999999977 : f32
    %682 = vector.broadcast %cst_148 : f32 to vector<18x18xf32>
    %683 = arith.mulf %682, %667 : vector<18x18xf32>
    %684 = arith.select %681, %667, %683 : vector<18x18xi1>, vector<18x18xf32>
    %c0_149 = arith.constant 0 : index
    %c2_150 = arith.constant 2 : index
    %c2_151 = arith.constant 2 : index
    %685 = vector.load %arg8[%c0_149, %c2_150, %c2_151] : memref<4x22x22xf32, #tpu.memory_space<vmem>>, vector<1x18x18xf32>
    %686 = vector.shape_cast %685 : vector<1x18x18xf32> to vector<18x18xf32>
    %687 = vector.shape_cast %684 : vector<18x18xf32> to vector<1x18x18xf32>
    tpu.vector_store %arg8[%c0_149, %c2_150, %c2_151], %687 {strides = array<i32>} : memref<4x22x22xf32, #tpu.memory_space<vmem>>, vector<1x18x18xf32>,
    %cst_152 = arith.constant 0.000000e+00 : f32
    %688 = vector.broadcast %cst_152 : f32 to vector<18x18xf32>
    %689 = arith.cmpf oge, %671, %688 : vector<18x18xf32>
    %cst_153 = arith.constant 0.00999999977 : f32
    %690 = vector.broadcast %cst_153 : f32 to vector<18x18xf32>
    %691 = arith.mulf %690, %671 : vector<18x18xf32>
    %692 = arith.select %689, %671, %691 : vector<18x18xi1>, vector<18x18xf32>
    %c1_154 = arith.constant 1 : index
    %c2_155 = arith.constant 2 : index
    %c2_156 = arith.constant 2 : index
    %693 = vector.load %arg8[%c1_154, %c2_155, %c2_156] : memref<4x22x22xf32, #tpu.memory_space<vmem>>, vector<1x18x18xf32>
    %694 = vector.shape_cast %693 : vector<1x18x18xf32> to vector<18x18xf32>
    %695 = vector.shape_cast %692 : vector<18x18xf32> to vector<1x18x18xf32>
    tpu.vector_store %arg8[%c1_154, %c2_155, %c2_156], %695 {strides = array<i32>} : memref<4x22x22xf32, #tpu.memory_space<vmem>>, vector<1x18x18xf32>,
    %cst_157 = arith.constant 0.000000e+00 : f32
    %696 = vector.broadcast %cst_157 : f32 to vector<18x18xf32>
    %697 = arith.cmpf oge, %675, %696 : vector<18x18xf32>
    %cst_158 = arith.constant 0.00999999977 : f32
    %698 = vector.broadcast %cst_158 : f32 to vector<18x18xf32>
    %699 = arith.mulf %698, %675 : vector<18x18xf32>
    %700 = arith.select %697, %675, %699 : vector<18x18xi1>, vector<18x18xf32>
    %c2_159 = arith.constant 2 : index
    %c2_160 = arith.constant 2 : index
    %c2_161 = arith.constant 2 : index
    %701 = vector.load %arg8[%c2_159, %c2_160, %c2_161] : memref<4x22x22xf32, #tpu.memory_space<vmem>>, vector<1x18x18xf32>
    %702 = vector.shape_cast %701 : vector<1x18x18xf32> to vector<18x18xf32>
    %703 = vector.shape_cast %700 : vector<18x18xf32> to vector<1x18x18xf32>
    tpu.vector_store %arg8[%c2_159, %c2_160, %c2_161], %703 {strides = array<i32>} : memref<4x22x22xf32, #tpu.memory_space<vmem>>, vector<1x18x18xf32>,
    %cst_162 = arith.constant 0.000000e+00 : f32
    %704 = vector.broadcast %cst_162 : f32 to vector<18x18xf32>
    %705 = arith.cmpf oge, %679, %704 : vector<18x18xf32>
    %cst_163 = arith.constant 0.00999999977 : f32
    %706 = vector.broadcast %cst_163 : f32 to vector<18x18xf32>
    %707 = arith.mulf %706, %679 : vector<18x18xf32>
    %708 = arith.select %705, %679, %707 : vector<18x18xi1>, vector<18x18xf32>
    %c3_164 = arith.constant 3 : index
    %c2_165 = arith.constant 2 : index
    %c2_166 = arith.constant 2 : index
    %709 = vector.load %arg8[%c3_164, %c2_165, %c2_166] : memref<4x22x22xf32, #tpu.memory_space<vmem>>, vector<1x18x18xf32>
    %710 = vector.shape_cast %709 : vector<1x18x18xf32> to vector<18x18xf32>
    %711 = vector.shape_cast %708 : vector<18x18xf32> to vector<1x18x18xf32>
    tpu.vector_store %arg8[%c3_164, %c2_165, %c2_166], %711 {strides = array<i32>} : memref<4x22x22xf32, #tpu.memory_space<vmem>>, vector<1x18x18xf32>,
    %c0_167 = arith.constant 0 : index
    %712 = memref.load %arg5[%c0_167] : memref<2xf32, #tpu.memory_space<smem>>
    %713 = vector.broadcast %712 : f32 to vector<20x20xf32>
    %c1_168 = arith.constant 1 : index
    %714 = memref.load %arg5[%c1_168] : memref<2xf32, #tpu.memory_space<smem>>
    %715 = vector.broadcast %714 : f32 to vector<20x20xf32>
    %c0_169 = arith.constant 0 : index
    %c0_170 = arith.constant 0 : index
    %c0_171 = arith.constant 0 : index
    %716 = vector.load %arg8[%c0_169, %c0_170, %c0_171] : memref<4x22x22xf32, #tpu.memory_space<vmem>>, vector<1x20x20xf32>
    %717 = vector.shape_cast %716 : vector<1x20x20xf32> to vector<20x20xf32>
    %c0_172 = arith.constant 0 : index
    %718 = memref.load %arg4[%c0_172] : memref<72xf32, #tpu.memory_space<smem>>
    %719 = vector.broadcast %718 : f32 to vector<20x20xf32>
    %720 = arith.mulf %719, %717 : vector<20x20xf32>
    %721 = arith.addf %713, %720 : vector<20x20xf32>
    %c36_173 = arith.constant 36 : index
    %722 = memref.load %arg4[%c36_173] : memref<72xf32, #tpu.memory_space<smem>>
    %723 = vector.broadcast %722 : f32 to vector<20x20xf32>
    %724 = arith.mulf %723, %717 : vector<20x20xf32>
    %725 = arith.addf %715, %724 : vector<20x20xf32>
    %c0_174 = arith.constant 0 : index
    %c0_175 = arith.constant 0 : index
    %c1_176 = arith.constant 1 : index
    %726 = vector.load %arg8[%c0_174, %c0_175, %c1_176] : memref<4x22x22xf32, #tpu.memory_space<vmem>>, vector<1x20x20xf32>
    %727 = vector.shape_cast %726 : vector<1x20x20xf32> to vector<20x20xf32>
    %c1_177 = arith.constant 1 : index
    %728 = memref.load %arg4[%c1_177] : memref<72xf32, #tpu.memory_space<smem>>
    %729 = vector.broadcast %728 : f32 to vector<20x20xf32>
    %730 = arith.mulf %729, %727 : vector<20x20xf32>
    %731 = arith.addf %721, %730 : vector<20x20xf32>
    %c37_178 = arith.constant 37 : index
    %732 = memref.load %arg4[%c37_178] : memref<72xf32, #tpu.memory_space<smem>>
    %733 = vector.broadcast %732 : f32 to vector<20x20xf32>
    %734 = arith.mulf %733, %727 : vector<20x20xf32>
    %735 = arith.addf %725, %734 : vector<20x20xf32>
    %c0_179 = arith.constant 0 : index
    %c0_180 = arith.constant 0 : index
    %c2_181 = arith.constant 2 : index
    %736 = vector.load %arg8[%c0_179, %c0_180, %c2_181] : memref<4x22x22xf32, #tpu.memory_space<vmem>>, vector<1x20x20xf32>
    %737 = vector.shape_cast %736 : vector<1x20x20xf32> to vector<20x20xf32>
    %c2_182 = arith.constant 2 : index
    %738 = memref.load %arg4[%c2_182] : memref<72xf32, #tpu.memory_space<smem>>
    %739 = vector.broadcast %738 : f32 to vector<20x20xf32>
    %740 = arith.mulf %739, %737 : vector<20x20xf32>
    %741 = arith.addf %731, %740 : vector<20x20xf32>
    %c38_183 = arith.constant 38 : index
    %742 = memref.load %arg4[%c38_183] : memref<72xf32, #tpu.memory_space<smem>>
    %743 = vector.broadcast %742 : f32 to vector<20x20xf32>
    %744 = arith.mulf %743, %737 : vector<20x20xf32>
    %745 = arith.addf %735, %744 : vector<20x20xf32>
    %c0_184 = arith.constant 0 : index
    %c1_185 = arith.constant 1 : index
    %c0_186 = arith.constant 0 : index
    %746 = vector.load %arg8[%c0_184, %c1_185, %c0_186] : memref<4x22x22xf32, #tpu.memory_space<vmem>>, vector<1x20x20xf32>
    %747 = vector.shape_cast %746 : vector<1x20x20xf32> to vector<20x20xf32>
    %c3_187 = arith.constant 3 : index
    %748 = memref.load %arg4[%c3_187] : memref<72xf32, #tpu.memory_space<smem>>
    %749 = vector.broadcast %748 : f32 to vector<20x20xf32>
    %750 = arith.mulf %749, %747 : vector<20x20xf32>
    %751 = arith.addf %741, %750 : vector<20x20xf32>
    %c39_188 = arith.constant 39 : index
    %752 = memref.load %arg4[%c39_188] : memref<72xf32, #tpu.memory_space<smem>>
    %753 = vector.broadcast %752 : f32 to vector<20x20xf32>
    %754 = arith.mulf %753, %747 : vector<20x20xf32>
    %755 = arith.addf %745, %754 : vector<20x20xf32>
    %c0_189 = arith.constant 0 : index
    %c1_190 = arith.constant 1 : index
    %c1_191 = arith.constant 1 : index
    %756 = vector.load %arg8[%c0_189, %c1_190, %c1_191] : memref<4x22x22xf32, #tpu.memory_space<vmem>>, vector<1x20x20xf32>
    %757 = vector.shape_cast %756 : vector<1x20x20xf32> to vector<20x20xf32>
    %c4_192 = arith.constant 4 : index
    %758 = memref.load %arg4[%c4_192] : memref<72xf32, #tpu.memory_space<smem>>
    %759 = vector.broadcast %758 : f32 to vector<20x20xf32>
    %760 = arith.mulf %759, %757 : vector<20x20xf32>
    %761 = arith.addf %751, %760 : vector<20x20xf32>
    %c40_193 = arith.constant 40 : index
    %762 = memref.load %arg4[%c40_193] : memref<72xf32, #tpu.memory_space<smem>>
    %763 = vector.broadcast %762 : f32 to vector<20x20xf32>
    %764 = arith.mulf %763, %757 : vector<20x20xf32>
    %765 = arith.addf %755, %764 : vector<20x20xf32>
    %c0_194 = arith.constant 0 : index
    %c1_195 = arith.constant 1 : index
    %c2_196 = arith.constant 2 : index
    %766 = vector.load %arg8[%c0_194, %c1_195, %c2_196] : memref<4x22x22xf32, #tpu.memory_space<vmem>>, vector<1x20x20xf32>
    %767 = vector.shape_cast %766 : vector<1x20x20xf32> to vector<20x20xf32>
    %c5_197 = arith.constant 5 : index
    %768 = memref.load %arg4[%c5_197] : memref<72xf32, #tpu.memory_space<smem>>
    %769 = vector.broadcast %768 : f32 to vector<20x20xf32>
    %770 = arith.mulf %769, %767 : vector<20x20xf32>
    %771 = arith.addf %761, %770 : vector<20x20xf32>
    %c41_198 = arith.constant 41 : index
    %772 = memref.load %arg4[%c41_198] : memref<72xf32, #tpu.memory_space<smem>>
    %773 = vector.broadcast %772 : f32 to vector<20x20xf32>
    %774 = arith.mulf %773, %767 : vector<20x20xf32>
    %775 = arith.addf %765, %774 : vector<20x20xf32>
    %c0_199 = arith.constant 0 : index
    %c2_200 = arith.constant 2 : index
    %c0_201 = arith.constant 0 : index
    %776 = vector.load %arg8[%c0_199, %c2_200, %c0_201] : memref<4x22x22xf32, #tpu.memory_space<vmem>>, vector<1x20x20xf32>
    %777 = vector.shape_cast %776 : vector<1x20x20xf32> to vector<20x20xf32>
    %c6_202 = arith.constant 6 : index
    %778 = memref.load %arg4[%c6_202] : memref<72xf32, #tpu.memory_space<smem>>
    %779 = vector.broadcast %778 : f32 to vector<20x20xf32>
    %780 = arith.mulf %779, %777 : vector<20x20xf32>
    %781 = arith.addf %771, %780 : vector<20x20xf32>
    %c42_203 = arith.constant 42 : index
    %782 = memref.load %arg4[%c42_203] : memref<72xf32, #tpu.memory_space<smem>>
    %783 = vector.broadcast %782 : f32 to vector<20x20xf32>
    %784 = arith.mulf %783, %777 : vector<20x20xf32>
    %785 = arith.addf %775, %784 : vector<20x20xf32>
    %c0_204 = arith.constant 0 : index
    %c2_205 = arith.constant 2 : index
    %c1_206 = arith.constant 1 : index
    %786 = vector.load %arg8[%c0_204, %c2_205, %c1_206] : memref<4x22x22xf32, #tpu.memory_space<vmem>>, vector<1x20x20xf32>
    %787 = vector.shape_cast %786 : vector<1x20x20xf32> to vector<20x20xf32>
    %c7_207 = arith.constant 7 : index
    %788 = memref.load %arg4[%c7_207] : memref<72xf32, #tpu.memory_space<smem>>
    %789 = vector.broadcast %788 : f32 to vector<20x20xf32>
    %790 = arith.mulf %789, %787 : vector<20x20xf32>
    %791 = arith.addf %781, %790 : vector<20x20xf32>
    %c43_208 = arith.constant 43 : index
    %792 = memref.load %arg4[%c43_208] : memref<72xf32, #tpu.memory_space<smem>>
    %793 = vector.broadcast %792 : f32 to vector<20x20xf32>
    %794 = arith.mulf %793, %787 : vector<20x20xf32>
    %795 = arith.addf %785, %794 : vector<20x20xf32>
    %c0_209 = arith.constant 0 : index
    %c2_210 = arith.constant 2 : index
    %c2_211 = arith.constant 2 : index
    %796 = vector.load %arg8[%c0_209, %c2_210, %c2_211] : memref<4x22x22xf32, #tpu.memory_space<vmem>>, vector<1x20x20xf32>
    %797 = vector.shape_cast %796 : vector<1x20x20xf32> to vector<20x20xf32>
    %c8_212 = arith.constant 8 : index
    %798 = memref.load %arg4[%c8_212] : memref<72xf32, #tpu.memory_space<smem>>
    %799 = vector.broadcast %798 : f32 to vector<20x20xf32>
    %800 = arith.mulf %799, %797 : vector<20x20xf32>
    %801 = arith.addf %791, %800 : vector<20x20xf32>
    %c44_213 = arith.constant 44 : index
    %802 = memref.load %arg4[%c44_213] : memref<72xf32, #tpu.memory_space<smem>>
    %803 = vector.broadcast %802 : f32 to vector<20x20xf32>
    %804 = arith.mulf %803, %797 : vector<20x20xf32>
    %805 = arith.addf %795, %804 : vector<20x20xf32>
    %c1_214 = arith.constant 1 : index
    %c0_215 = arith.constant 0 : index
    %c0_216 = arith.constant 0 : index
    %806 = vector.load %arg8[%c1_214, %c0_215, %c0_216] : memref<4x22x22xf32, #tpu.memory_space<vmem>>, vector<1x20x20xf32>
    %807 = vector.shape_cast %806 : vector<1x20x20xf32> to vector<20x20xf32>
    %c9_217 = arith.constant 9 : index
    %808 = memref.load %arg4[%c9_217] : memref<72xf32, #tpu.memory_space<smem>>
    %809 = vector.broadcast %808 : f32 to vector<20x20xf32>
    %810 = arith.mulf %809, %807 : vector<20x20xf32>
    %811 = arith.addf %801, %810 : vector<20x20xf32>
    %c45_218 = arith.constant 45 : index
    %812 = memref.load %arg4[%c45_218] : memref<72xf32, #tpu.memory_space<smem>>
    %813 = vector.broadcast %812 : f32 to vector<20x20xf32>
    %814 = arith.mulf %813, %807 : vector<20x20xf32>
    %815 = arith.addf %805, %814 : vector<20x20xf32>
    %c1_219 = arith.constant 1 : index
    %c0_220 = arith.constant 0 : index
    %c1_221 = arith.constant 1 : index
    %816 = vector.load %arg8[%c1_219, %c0_220, %c1_221] : memref<4x22x22xf32, #tpu.memory_space<vmem>>, vector<1x20x20xf32>
    %817 = vector.shape_cast %816 : vector<1x20x20xf32> to vector<20x20xf32>
    %c10_222 = arith.constant 10 : index
    %818 = memref.load %arg4[%c10_222] : memref<72xf32, #tpu.memory_space<smem>>
    %819 = vector.broadcast %818 : f32 to vector<20x20xf32>
    %820 = arith.mulf %819, %817 : vector<20x20xf32>
    %821 = arith.addf %811, %820 : vector<20x20xf32>
    %c46_223 = arith.constant 46 : index
    %822 = memref.load %arg4[%c46_223] : memref<72xf32, #tpu.memory_space<smem>>
    %823 = vector.broadcast %822 : f32 to vector<20x20xf32>
    %824 = arith.mulf %823, %817 : vector<20x20xf32>
    %825 = arith.addf %815, %824 : vector<20x20xf32>
    %c1_224 = arith.constant 1 : index
    %c0_225 = arith.constant 0 : index
    %c2_226 = arith.constant 2 : index
    %826 = vector.load %arg8[%c1_224, %c0_225, %c2_226] : memref<4x22x22xf32, #tpu.memory_space<vmem>>, vector<1x20x20xf32>
    %827 = vector.shape_cast %826 : vector<1x20x20xf32> to vector<20x20xf32>
    %c11_227 = arith.constant 11 : index
    %828 = memref.load %arg4[%c11_227] : memref<72xf32, #tpu.memory_space<smem>>
    %829 = vector.broadcast %828 : f32 to vector<20x20xf32>
    %830 = arith.mulf %829, %827 : vector<20x20xf32>
    %831 = arith.addf %821, %830 : vector<20x20xf32>
    %c47_228 = arith.constant 47 : index
    %832 = memref.load %arg4[%c47_228] : memref<72xf32, #tpu.memory_space<smem>>
    %833 = vector.broadcast %832 : f32 to vector<20x20xf32>
    %834 = arith.mulf %833, %827 : vector<20x20xf32>
    %835 = arith.addf %825, %834 : vector<20x20xf32>
    %c1_229 = arith.constant 1 : index
    %c1_230 = arith.constant 1 : index
    %c0_231 = arith.constant 0 : index
    %836 = vector.load %arg8[%c1_229, %c1_230, %c0_231] : memref<4x22x22xf32, #tpu.memory_space<vmem>>, vector<1x20x20xf32>
    %837 = vector.shape_cast %836 : vector<1x20x20xf32> to vector<20x20xf32>
    %c12_232 = arith.constant 12 : index
    %838 = memref.load %arg4[%c12_232] : memref<72xf32, #tpu.memory_space<smem>>
    %839 = vector.broadcast %838 : f32 to vector<20x20xf32>
    %840 = arith.mulf %839, %837 : vector<20x20xf32>
    %841 = arith.addf %831, %840 : vector<20x20xf32>
    %c48_233 = arith.constant 48 : index
    %842 = memref.load %arg4[%c48_233] : memref<72xf32, #tpu.memory_space<smem>>
    %843 = vector.broadcast %842 : f32 to vector<20x20xf32>
    %844 = arith.mulf %843, %837 : vector<20x20xf32>
    %845 = arith.addf %835, %844 : vector<20x20xf32>
    %c1_234 = arith.constant 1 : index
    %c1_235 = arith.constant 1 : index
    %c1_236 = arith.constant 1 : index
    %846 = vector.load %arg8[%c1_234, %c1_235, %c1_236] : memref<4x22x22xf32, #tpu.memory_space<vmem>>, vector<1x20x20xf32>
    %847 = vector.shape_cast %846 : vector<1x20x20xf32> to vector<20x20xf32>
    %c13_237 = arith.constant 13 : index
    %848 = memref.load %arg4[%c13_237] : memref<72xf32, #tpu.memory_space<smem>>
    %849 = vector.broadcast %848 : f32 to vector<20x20xf32>
    %850 = arith.mulf %849, %847 : vector<20x20xf32>
    %851 = arith.addf %841, %850 : vector<20x20xf32>
    %c49_238 = arith.constant 49 : index
    %852 = memref.load %arg4[%c49_238] : memref<72xf32, #tpu.memory_space<smem>>
    %853 = vector.broadcast %852 : f32 to vector<20x20xf32>
    %854 = arith.mulf %853, %847 : vector<20x20xf32>
    %855 = arith.addf %845, %854 : vector<20x20xf32>
    %c1_239 = arith.constant 1 : index
    %c1_240 = arith.constant 1 : index
    %c2_241 = arith.constant 2 : index
    %856 = vector.load %arg8[%c1_239, %c1_240, %c2_241] : memref<4x22x22xf32, #tpu.memory_space<vmem>>, vector<1x20x20xf32>
    %857 = vector.shape_cast %856 : vector<1x20x20xf32> to vector<20x20xf32>
    %c14_242 = arith.constant 14 : index
    %858 = memref.load %arg4[%c14_242] : memref<72xf32, #tpu.memory_space<smem>>
    %859 = vector.broadcast %858 : f32 to vector<20x20xf32>
    %860 = arith.mulf %859, %857 : vector<20x20xf32>
    %861 = arith.addf %851, %860 : vector<20x20xf32>
    %c50_243 = arith.constant 50 : index
    %862 = memref.load %arg4[%c50_243] : memref<72xf32, #tpu.memory_space<smem>>
    %863 = vector.broadcast %862 : f32 to vector<20x20xf32>
    %864 = arith.mulf %863, %857 : vector<20x20xf32>
    %865 = arith.addf %855, %864 : vector<20x20xf32>
    %c1_244 = arith.constant 1 : index
    %c2_245 = arith.constant 2 : index
    %c0_246 = arith.constant 0 : index
    %866 = vector.load %arg8[%c1_244, %c2_245, %c0_246] : memref<4x22x22xf32, #tpu.memory_space<vmem>>, vector<1x20x20xf32>
    %867 = vector.shape_cast %866 : vector<1x20x20xf32> to vector<20x20xf32>
    %c15_247 = arith.constant 15 : index
    %868 = memref.load %arg4[%c15_247] : memref<72xf32, #tpu.memory_space<smem>>
    %869 = vector.broadcast %868 : f32 to vector<20x20xf32>
    %870 = arith.mulf %869, %867 : vector<20x20xf32>
    %871 = arith.addf %861, %870 : vector<20x20xf32>
    %c51_248 = arith.constant 51 : index
    %872 = memref.load %arg4[%c51_248] : memref<72xf32, #tpu.memory_space<smem>>
    %873 = vector.broadcast %872 : f32 to vector<20x20xf32>
    %874 = arith.mulf %873, %867 : vector<20x20xf32>
    %875 = arith.addf %865, %874 : vector<20x20xf32>
    %c1_249 = arith.constant 1 : index
    %c2_250 = arith.constant 2 : index
    %c1_251 = arith.constant 1 : index
    %876 = vector.load %arg8[%c1_249, %c2_250, %c1_251] : memref<4x22x22xf32, #tpu.memory_space<vmem>>, vector<1x20x20xf32>
    %877 = vector.shape_cast %876 : vector<1x20x20xf32> to vector<20x20xf32>
    %c16_252 = arith.constant 16 : index
    %878 = memref.load %arg4[%c16_252] : memref<72xf32, #tpu.memory_space<smem>>
    %879 = vector.broadcast %878 : f32 to vector<20x20xf32>
    %880 = arith.mulf %879, %877 : vector<20x20xf32>
    %881 = arith.addf %871, %880 : vector<20x20xf32>
    %c52_253 = arith.constant 52 : index
    %882 = memref.load %arg4[%c52_253] : memref<72xf32, #tpu.memory_space<smem>>
    %883 = vector.broadcast %882 : f32 to vector<20x20xf32>
    %884 = arith.mulf %883, %877 : vector<20x20xf32>
    %885 = arith.addf %875, %884 : vector<20x20xf32>
    %c1_254 = arith.constant 1 : index
    %c2_255 = arith.constant 2 : index
    %c2_256 = arith.constant 2 : index
    %886 = vector.load %arg8[%c1_254, %c2_255, %c2_256] : memref<4x22x22xf32, #tpu.memory_space<vmem>>, vector<1x20x20xf32>
    %887 = vector.shape_cast %886 : vector<1x20x20xf32> to vector<20x20xf32>
    %c17_257 = arith.constant 17 : index
    %888 = memref.load %arg4[%c17_257] : memref<72xf32, #tpu.memory_space<smem>>
    %889 = vector.broadcast %888 : f32 to vector<20x20xf32>
    %890 = arith.mulf %889, %887 : vector<20x20xf32>
    %891 = arith.addf %881, %890 : vector<20x20xf32>
    %c53_258 = arith.constant 53 : index
    %892 = memref.load %arg4[%c53_258] : memref<72xf32, #tpu.memory_space<smem>>
    %893 = vector.broadcast %892 : f32 to vector<20x20xf32>
    %894 = arith.mulf %893, %887 : vector<20x20xf32>
    %895 = arith.addf %885, %894 : vector<20x20xf32>
    %c2_259 = arith.constant 2 : index
    %c0_260 = arith.constant 0 : index
    %c0_261 = arith.constant 0 : index
    %896 = vector.load %arg8[%c2_259, %c0_260, %c0_261] : memref<4x22x22xf32, #tpu.memory_space<vmem>>, vector<1x20x20xf32>
    %897 = vector.shape_cast %896 : vector<1x20x20xf32> to vector<20x20xf32>
    %c18_262 = arith.constant 18 : index
    %898 = memref.load %arg4[%c18_262] : memref<72xf32, #tpu.memory_space<smem>>
    %899 = vector.broadcast %898 : f32 to vector<20x20xf32>
    %900 = arith.mulf %899, %897 : vector<20x20xf32>
    %901 = arith.addf %891, %900 : vector<20x20xf32>
    %c54_263 = arith.constant 54 : index
    %902 = memref.load %arg4[%c54_263] : memref<72xf32, #tpu.memory_space<smem>>
    %903 = vector.broadcast %902 : f32 to vector<20x20xf32>
    %904 = arith.mulf %903, %897 : vector<20x20xf32>
    %905 = arith.addf %895, %904 : vector<20x20xf32>
    %c2_264 = arith.constant 2 : index
    %c0_265 = arith.constant 0 : index
    %c1_266 = arith.constant 1 : index
    %906 = vector.load %arg8[%c2_264, %c0_265, %c1_266] : memref<4x22x22xf32, #tpu.memory_space<vmem>>, vector<1x20x20xf32>
    %907 = vector.shape_cast %906 : vector<1x20x20xf32> to vector<20x20xf32>
    %c19_267 = arith.constant 19 : index
    %908 = memref.load %arg4[%c19_267] : memref<72xf32, #tpu.memory_space<smem>>
    %909 = vector.broadcast %908 : f32 to vector<20x20xf32>
    %910 = arith.mulf %909, %907 : vector<20x20xf32>
    %911 = arith.addf %901, %910 : vector<20x20xf32>
    %c55_268 = arith.constant 55 : index
    %912 = memref.load %arg4[%c55_268] : memref<72xf32, #tpu.memory_space<smem>>
    %913 = vector.broadcast %912 : f32 to vector<20x20xf32>
    %914 = arith.mulf %913, %907 : vector<20x20xf32>
    %915 = arith.addf %905, %914 : vector<20x20xf32>
    %c2_269 = arith.constant 2 : index
    %c0_270 = arith.constant 0 : index
    %c2_271 = arith.constant 2 : index
    %916 = vector.load %arg8[%c2_269, %c0_270, %c2_271] : memref<4x22x22xf32, #tpu.memory_space<vmem>>, vector<1x20x20xf32>
    %917 = vector.shape_cast %916 : vector<1x20x20xf32> to vector<20x20xf32>
    %c20_272 = arith.constant 20 : index
    %918 = memref.load %arg4[%c20_272] : memref<72xf32, #tpu.memory_space<smem>>
    %919 = vector.broadcast %918 : f32 to vector<20x20xf32>
    %920 = arith.mulf %919, %917 : vector<20x20xf32>
    %921 = arith.addf %911, %920 : vector<20x20xf32>
    %c56_273 = arith.constant 56 : index
    %922 = memref.load %arg4[%c56_273] : memref<72xf32, #tpu.memory_space<smem>>
    %923 = vector.broadcast %922 : f32 to vector<20x20xf32>
    %924 = arith.mulf %923, %917 : vector<20x20xf32>
    %925 = arith.addf %915, %924 : vector<20x20xf32>
    %c2_274 = arith.constant 2 : index
    %c1_275 = arith.constant 1 : index
    %c0_276 = arith.constant 0 : index
    %926 = vector.load %arg8[%c2_274, %c1_275, %c0_276] : memref<4x22x22xf32, #tpu.memory_space<vmem>>, vector<1x20x20xf32>
    %927 = vector.shape_cast %926 : vector<1x20x20xf32> to vector<20x20xf32>
    %c21_277 = arith.constant 21 : index
    %928 = memref.load %arg4[%c21_277] : memref<72xf32, #tpu.memory_space<smem>>
    %929 = vector.broadcast %928 : f32 to vector<20x20xf32>
    %930 = arith.mulf %929, %927 : vector<20x20xf32>
    %931 = arith.addf %921, %930 : vector<20x20xf32>
    %c57_278 = arith.constant 57 : index
    %932 = memref.load %arg4[%c57_278] : memref<72xf32, #tpu.memory_space<smem>>
    %933 = vector.broadcast %932 : f32 to vector<20x20xf32>
    %934 = arith.mulf %933, %927 : vector<20x20xf32>
    %935 = arith.addf %925, %934 : vector<20x20xf32>
    %c2_279 = arith.constant 2 : index
    %c1_280 = arith.constant 1 : index
    %c1_281 = arith.constant 1 : index
    %936 = vector.load %arg8[%c2_279, %c1_280, %c1_281] : memref<4x22x22xf32, #tpu.memory_space<vmem>>, vector<1x20x20xf32>
    %937 = vector.shape_cast %936 : vector<1x20x20xf32> to vector<20x20xf32>
    %c22_282 = arith.constant 22 : index
    %938 = memref.load %arg4[%c22_282] : memref<72xf32, #tpu.memory_space<smem>>
    %939 = vector.broadcast %938 : f32 to vector<20x20xf32>
    %940 = arith.mulf %939, %937 : vector<20x20xf32>
    %941 = arith.addf %931, %940 : vector<20x20xf32>
    %c58_283 = arith.constant 58 : index
    %942 = memref.load %arg4[%c58_283] : memref<72xf32, #tpu.memory_space<smem>>
    %943 = vector.broadcast %942 : f32 to vector<20x20xf32>
    %944 = arith.mulf %943, %937 : vector<20x20xf32>
    %945 = arith.addf %935, %944 : vector<20x20xf32>
    %c2_284 = arith.constant 2 : index
    %c1_285 = arith.constant 1 : index
    %c2_286 = arith.constant 2 : index
    %946 = vector.load %arg8[%c2_284, %c1_285, %c2_286] : memref<4x22x22xf32, #tpu.memory_space<vmem>>, vector<1x20x20xf32>
    %947 = vector.shape_cast %946 : vector<1x20x20xf32> to vector<20x20xf32>
    %c23_287 = arith.constant 23 : index
    %948 = memref.load %arg4[%c23_287] : memref<72xf32, #tpu.memory_space<smem>>
    %949 = vector.broadcast %948 : f32 to vector<20x20xf32>
    %950 = arith.mulf %949, %947 : vector<20x20xf32>
    %951 = arith.addf %941, %950 : vector<20x20xf32>
    %c59_288 = arith.constant 59 : index
    %952 = memref.load %arg4[%c59_288] : memref<72xf32, #tpu.memory_space<smem>>
    %953 = vector.broadcast %952 : f32 to vector<20x20xf32>
    %954 = arith.mulf %953, %947 : vector<20x20xf32>
    %955 = arith.addf %945, %954 : vector<20x20xf32>
    %c2_289 = arith.constant 2 : index
    %c2_290 = arith.constant 2 : index
    %c0_291 = arith.constant 0 : index
    %956 = vector.load %arg8[%c2_289, %c2_290, %c0_291] : memref<4x22x22xf32, #tpu.memory_space<vmem>>, vector<1x20x20xf32>
    %957 = vector.shape_cast %956 : vector<1x20x20xf32> to vector<20x20xf32>
    %c24_292 = arith.constant 24 : index
    %958 = memref.load %arg4[%c24_292] : memref<72xf32, #tpu.memory_space<smem>>
    %959 = vector.broadcast %958 : f32 to vector<20x20xf32>
    %960 = arith.mulf %959, %957 : vector<20x20xf32>
    %961 = arith.addf %951, %960 : vector<20x20xf32>
    %c60_293 = arith.constant 60 : index
    %962 = memref.load %arg4[%c60_293] : memref<72xf32, #tpu.memory_space<smem>>
    %963 = vector.broadcast %962 : f32 to vector<20x20xf32>
    %964 = arith.mulf %963, %957 : vector<20x20xf32>
    %965 = arith.addf %955, %964 : vector<20x20xf32>
    %c2_294 = arith.constant 2 : index
    %c2_295 = arith.constant 2 : index
    %c1_296 = arith.constant 1 : index
    %966 = vector.load %arg8[%c2_294, %c2_295, %c1_296] : memref<4x22x22xf32, #tpu.memory_space<vmem>>, vector<1x20x20xf32>
    %967 = vector.shape_cast %966 : vector<1x20x20xf32> to vector<20x20xf32>
    %c25_297 = arith.constant 25 : index
    %968 = memref.load %arg4[%c25_297] : memref<72xf32, #tpu.memory_space<smem>>
    %969 = vector.broadcast %968 : f32 to vector<20x20xf32>
    %970 = arith.mulf %969, %967 : vector<20x20xf32>
    %971 = arith.addf %961, %970 : vector<20x20xf32>
    %c61_298 = arith.constant 61 : index
    %972 = memref.load %arg4[%c61_298] : memref<72xf32, #tpu.memory_space<smem>>
    %973 = vector.broadcast %972 : f32 to vector<20x20xf32>
    %974 = arith.mulf %973, %967 : vector<20x20xf32>
    %975 = arith.addf %965, %974 : vector<20x20xf32>
    %c2_299 = arith.constant 2 : index
    %c2_300 = arith.constant 2 : index
    %c2_301 = arith.constant 2 : index
    %976 = vector.load %arg8[%c2_299, %c2_300, %c2_301] : memref<4x22x22xf32, #tpu.memory_space<vmem>>, vector<1x20x20xf32>
    %977 = vector.shape_cast %976 : vector<1x20x20xf32> to vector<20x20xf32>
    %c26_302 = arith.constant 26 : index
    %978 = memref.load %arg4[%c26_302] : memref<72xf32, #tpu.memory_space<smem>>
    %979 = vector.broadcast %978 : f32 to vector<20x20xf32>
    %980 = arith.mulf %979, %977 : vector<20x20xf32>
    %981 = arith.addf %971, %980 : vector<20x20xf32>
    %c62_303 = arith.constant 62 : index
    %982 = memref.load %arg4[%c62_303] : memref<72xf32, #tpu.memory_space<smem>>
    %983 = vector.broadcast %982 : f32 to vector<20x20xf32>
    %984 = arith.mulf %983, %977 : vector<20x20xf32>
    %985 = arith.addf %975, %984 : vector<20x20xf32>
    %c3_304 = arith.constant 3 : index
    %c0_305 = arith.constant 0 : index
    %c0_306 = arith.constant 0 : index
    %986 = vector.load %arg8[%c3_304, %c0_305, %c0_306] : memref<4x22x22xf32, #tpu.memory_space<vmem>>, vector<1x20x20xf32>
    %987 = vector.shape_cast %986 : vector<1x20x20xf32> to vector<20x20xf32>
    %c27_307 = arith.constant 27 : index
    %988 = memref.load %arg4[%c27_307] : memref<72xf32, #tpu.memory_space<smem>>
    %989 = vector.broadcast %988 : f32 to vector<20x20xf32>
    %990 = arith.mulf %989, %987 : vector<20x20xf32>
    %991 = arith.addf %981, %990 : vector<20x20xf32>
    %c63_308 = arith.constant 63 : index
    %992 = memref.load %arg4[%c63_308] : memref<72xf32, #tpu.memory_space<smem>>
    %993 = vector.broadcast %992 : f32 to vector<20x20xf32>
    %994 = arith.mulf %993, %987 : vector<20x20xf32>
    %995 = arith.addf %985, %994 : vector<20x20xf32>
    %c3_309 = arith.constant 3 : index
    %c0_310 = arith.constant 0 : index
    %c1_311 = arith.constant 1 : index
    %996 = vector.load %arg8[%c3_309, %c0_310, %c1_311] : memref<4x22x22xf32, #tpu.memory_space<vmem>>, vector<1x20x20xf32>
    %997 = vector.shape_cast %996 : vector<1x20x20xf32> to vector<20x20xf32>
    %c28_312 = arith.constant 28 : index
    %998 = memref.load %arg4[%c28_312] : memref<72xf32, #tpu.memory_space<smem>>
    %999 = vector.broadcast %998 : f32 to vector<20x20xf32>
    %1000 = arith.mulf %999, %997 : vector<20x20xf32>
    %1001 = arith.addf %991, %1000 : vector<20x20xf32>
    %c64_313 = arith.constant 64 : index
    %1002 = memref.load %arg4[%c64_313] : memref<72xf32, #tpu.memory_space<smem>>
    %1003 = vector.broadcast %1002 : f32 to vector<20x20xf32>
    %1004 = arith.mulf %1003, %997 : vector<20x20xf32>
    %1005 = arith.addf %995, %1004 : vector<20x20xf32>
    %c3_314 = arith.constant 3 : index
    %c0_315 = arith.constant 0 : index
    %c2_316 = arith.constant 2 : index
    %1006 = vector.load %arg8[%c3_314, %c0_315, %c2_316] : memref<4x22x22xf32, #tpu.memory_space<vmem>>, vector<1x20x20xf32>
    %1007 = vector.shape_cast %1006 : vector<1x20x20xf32> to vector<20x20xf32>
    %c29_317 = arith.constant 29 : index
    %1008 = memref.load %arg4[%c29_317] : memref<72xf32, #tpu.memory_space<smem>>
    %1009 = vector.broadcast %1008 : f32 to vector<20x20xf32>
    %1010 = arith.mulf %1009, %1007 : vector<20x20xf32>
    %1011 = arith.addf %1001, %1010 : vector<20x20xf32>
    %c65_318 = arith.constant 65 : index
    %1012 = memref.load %arg4[%c65_318] : memref<72xf32, #tpu.memory_space<smem>>
    %1013 = vector.broadcast %1012 : f32 to vector<20x20xf32>
    %1014 = arith.mulf %1013, %1007 : vector<20x20xf32>
    %1015 = arith.addf %1005, %1014 : vector<20x20xf32>
    %c3_319 = arith.constant 3 : index
    %c1_320 = arith.constant 1 : index
    %c0_321 = arith.constant 0 : index
    %1016 = vector.load %arg8[%c3_319, %c1_320, %c0_321] : memref<4x22x22xf32, #tpu.memory_space<vmem>>, vector<1x20x20xf32>
    %1017 = vector.shape_cast %1016 : vector<1x20x20xf32> to vector<20x20xf32>
    %c30_322 = arith.constant 30 : index
    %1018 = memref.load %arg4[%c30_322] : memref<72xf32, #tpu.memory_space<smem>>
    %1019 = vector.broadcast %1018 : f32 to vector<20x20xf32>
    %1020 = arith.mulf %1019, %1017 : vector<20x20xf32>
    %1021 = arith.addf %1011, %1020 : vector<20x20xf32>
    %c66_323 = arith.constant 66 : index
    %1022 = memref.load %arg4[%c66_323] : memref<72xf32, #tpu.memory_space<smem>>
    %1023 = vector.broadcast %1022 : f32 to vector<20x20xf32>
    %1024 = arith.mulf %1023, %1017 : vector<20x20xf32>
    %1025 = arith.addf %1015, %1024 : vector<20x20xf32>
    %c3_324 = arith.constant 3 : index
    %c1_325 = arith.constant 1 : index
    %c1_326 = arith.constant 1 : index
    %1026 = vector.load %arg8[%c3_324, %c1_325, %c1_326] : memref<4x22x22xf32, #tpu.memory_space<vmem>>, vector<1x20x20xf32>
    %1027 = vector.shape_cast %1026 : vector<1x20x20xf32> to vector<20x20xf32>
    %c31_327 = arith.constant 31 : index
    %1028 = memref.load %arg4[%c31_327] : memref<72xf32, #tpu.memory_space<smem>>
    %1029 = vector.broadcast %1028 : f32 to vector<20x20xf32>
    %1030 = arith.mulf %1029, %1027 : vector<20x20xf32>
    %1031 = arith.addf %1021, %1030 : vector<20x20xf32>
    %c67_328 = arith.constant 67 : index
    %1032 = memref.load %arg4[%c67_328] : memref<72xf32, #tpu.memory_space<smem>>
    %1033 = vector.broadcast %1032 : f32 to vector<20x20xf32>
    %1034 = arith.mulf %1033, %1027 : vector<20x20xf32>
    %1035 = arith.addf %1025, %1034 : vector<20x20xf32>
    %c3_329 = arith.constant 3 : index
    %c1_330 = arith.constant 1 : index
    %c2_331 = arith.constant 2 : index
    %1036 = vector.load %arg8[%c3_329, %c1_330, %c2_331] : memref<4x22x22xf32, #tpu.memory_space<vmem>>, vector<1x20x20xf32>
    %1037 = vector.shape_cast %1036 : vector<1x20x20xf32> to vector<20x20xf32>
    %c32_332 = arith.constant 32 : index
    %1038 = memref.load %arg4[%c32_332] : memref<72xf32, #tpu.memory_space<smem>>
    %1039 = vector.broadcast %1038 : f32 to vector<20x20xf32>
    %1040 = arith.mulf %1039, %1037 : vector<20x20xf32>
    %1041 = arith.addf %1031, %1040 : vector<20x20xf32>
    %c68_333 = arith.constant 68 : index
    %1042 = memref.load %arg4[%c68_333] : memref<72xf32, #tpu.memory_space<smem>>
    %1043 = vector.broadcast %1042 : f32 to vector<20x20xf32>
    %1044 = arith.mulf %1043, %1037 : vector<20x20xf32>
    %1045 = arith.addf %1035, %1044 : vector<20x20xf32>
    %c3_334 = arith.constant 3 : index
    %c2_335 = arith.constant 2 : index
    %c0_336 = arith.constant 0 : index
    %1046 = vector.load %arg8[%c3_334, %c2_335, %c0_336] : memref<4x22x22xf32, #tpu.memory_space<vmem>>, vector<1x20x20xf32>
    %1047 = vector.shape_cast %1046 : vector<1x20x20xf32> to vector<20x20xf32>
    %c33_337 = arith.constant 33 : index
    %1048 = memref.load %arg4[%c33_337] : memref<72xf32, #tpu.memory_space<smem>>
    %1049 = vector.broadcast %1048 : f32 to vector<20x20xf32>
    %1050 = arith.mulf %1049, %1047 : vector<20x20xf32>
    %1051 = arith.addf %1041, %1050 : vector<20x20xf32>
    %c69_338 = arith.constant 69 : index
    %1052 = memref.load %arg4[%c69_338] : memref<72xf32, #tpu.memory_space<smem>>
    %1053 = vector.broadcast %1052 : f32 to vector<20x20xf32>
    %1054 = arith.mulf %1053, %1047 : vector<20x20xf32>
    %1055 = arith.addf %1045, %1054 : vector<20x20xf32>
    %c3_339 = arith.constant 3 : index
    %c2_340 = arith.constant 2 : index
    %c1_341 = arith.constant 1 : index
    %1056 = vector.load %arg8[%c3_339, %c2_340, %c1_341] : memref<4x22x22xf32, #tpu.memory_space<vmem>>, vector<1x20x20xf32>
    %1057 = vector.shape_cast %1056 : vector<1x20x20xf32> to vector<20x20xf32>
    %c34_342 = arith.constant 34 : index
    %1058 = memref.load %arg4[%c34_342] : memref<72xf32, #tpu.memory_space<smem>>
    %1059 = vector.broadcast %1058 : f32 to vector<20x20xf32>
    %1060 = arith.mulf %1059, %1057 : vector<20x20xf32>
    %1061 = arith.addf %1051, %1060 : vector<20x20xf32>
    %c70_343 = arith.constant 70 : index
    %1062 = memref.load %arg4[%c70_343] : memref<72xf32, #tpu.memory_space<smem>>
    %1063 = vector.broadcast %1062 : f32 to vector<20x20xf32>
    %1064 = arith.mulf %1063, %1057 : vector<20x20xf32>
    %1065 = arith.addf %1055, %1064 : vector<20x20xf32>
    %c3_344 = arith.constant 3 : index
    %c2_345 = arith.constant 2 : index
    %c2_346 = arith.constant 2 : index
    %1066 = vector.load %arg8[%c3_344, %c2_345, %c2_346] : memref<4x22x22xf32, #tpu.memory_space<vmem>>, vector<1x20x20xf32>
    %1067 = vector.shape_cast %1066 : vector<1x20x20xf32> to vector<20x20xf32>
    %c35_347 = arith.constant 35 : index
    %1068 = memref.load %arg4[%c35_347] : memref<72xf32, #tpu.memory_space<smem>>
    %1069 = vector.broadcast %1068 : f32 to vector<20x20xf32>
    %1070 = arith.mulf %1069, %1067 : vector<20x20xf32>
    %1071 = arith.addf %1061, %1070 : vector<20x20xf32>
    %c71_348 = arith.constant 71 : index
    %1072 = memref.load %arg4[%c71_348] : memref<72xf32, #tpu.memory_space<smem>>
    %1073 = vector.broadcast %1072 : f32 to vector<20x20xf32>
    %1074 = arith.mulf %1073, %1067 : vector<20x20xf32>
    %1075 = arith.addf %1065, %1074 : vector<20x20xf32>
    %cst_349 = arith.constant 0.000000e+00 : f32
    %1076 = vector.broadcast %cst_349 : f32 to vector<20x20xf32>
    %1077 = arith.cmpf oge, %1071, %1076 : vector<20x20xf32>
    %cst_350 = arith.constant 0.00999999977 : f32
    %1078 = vector.broadcast %cst_350 : f32 to vector<20x20xf32>
    %1079 = arith.mulf %1078, %1071 : vector<20x20xf32>
    %1080 = arith.select %1077, %1071, %1079 : vector<20x20xi1>, vector<20x20xf32>
    %c0_351 = arith.constant 0 : index
    %c0_352 = arith.constant 0 : index
    %c0_353 = arith.constant 0 : index
    %c0_354 = arith.constant 0 : index
    %1081 = vector.load %arg6[%c0_351, %c0_352, %c0_353, %c0_354] : memref<1x2x20x20xf32, #tpu.memory_space<vmem>>, vector<1x1x20x20xf32>
    %1082 = vector.shape_cast %1081 : vector<1x1x20x20xf32> to vector<20x20xf32>
    %1083 = vector.shape_cast %1080 : vector<20x20xf32> to vector<1x1x20x20xf32>
    tpu.vector_store %arg6[%c0_351, %c0_352, %c0_353, %c0_354], %1083 {strides = array<i32>} : memref<1x2x20x20xf32, #tpu.memory_space<vmem>>, vector<1x1x20x20xf32>,
    %cst_355 = arith.constant 0.000000e+00 : f32
    %1084 = vector.broadcast %cst_355 : f32 to vector<20x20xf32>
    %1085 = arith.cmpf oge, %1075, %1084 : vector<20x20xf32>
    %cst_356 = arith.constant 0.00999999977 : f32
    %1086 = vector.broadcast %cst_356 : f32 to vector<20x20xf32>
    %1087 = arith.mulf %1086, %1075 : vector<20x20xf32>
    %1088 = arith.select %1085, %1075, %1087 : vector<20x20xi1>, vector<20x20xf32>
    %c0_357 = arith.constant 0 : index
    %c1_358 = arith.constant 1 : index
    %c0_359 = arith.constant 0 : index
    %c0_360 = arith.constant 0 : index
    %1089 = vector.load %arg6[%c0_357, %c1_358, %c0_359, %c0_360] : memref<1x2x20x20xf32, #tpu.memory_space<vmem>>, vector<1x1x20x20xf32>
    %1090 = vector.shape_cast %1089 : vector<1x1x20x20xf32> to vector<20x20xf32>
    %1091 = vector.shape_cast %1088 : vector<20x20xf32> to vector<1x1x20x20xf32>
    tpu.vector_store %arg6[%c0_357, %c1_358, %c0_359, %c0_360], %1091 {strides = array<i32>} : memref<1x2x20x20xf32, #tpu.memory_space<vmem>>, vector<1x1x20x20xf32>,
    return
  }
  func.func @transform_0(%arg0: i32) -> (i32, i32, i32, i32) {
    %c0_i32 = arith.constant 0 : i32
    %c0_i32_0 = arith.constant 0 : i32
    %c0_i32_1 = arith.constant 0 : i32
    %c0_i32_2 = arith.constant 0 : i32
    return %arg0, %c0_i32, %c0_i32_0, %c0_i32_1 : i32, i32, i32, i32
  }
  func.func @transform_1(%arg0: i32) -> i32 {
    %c0_i32 = arith.constant 0 : i32
    %c0_i32_0 = arith.constant 0 : i32
    return %c0_i32 : i32
  }
  func.func @transform_2(%arg0: i32) -> i32 {
    %c0_i32 = arith.constant 0 : i32
    %c0_i32_0 = arith.constant 0 : i32
    return %c0_i32 : i32
  }
  func.func @transform_3(%arg0: i32) -> i32 {
    %c0_i32 = arith.constant 0 : i32
    %c0_i32_0 = arith.constant 0 : i32
    return %c0_i32 : i32
  }
  func.func @transform_4(%arg0: i32) -> i32 {
    %c0_i32 = arith.constant 0 : i32
    %c0_i32_0 = arith.constant 0 : i32
    return %c0_i32 : i32
  }
  func.func @transform_5(%arg0: i32) -> (i32, i32, i32, i32) {
    %c0_i32 = arith.constant 0 : i32
    %c0_i32_0 = arith.constant 0 : i32
    %c0_i32_1 = arith.constant 0 : i32
    %c0_i32_2 = arith.constant 0 : i32
    return %arg0, %c0_i32, %c0_i32_0, %c0_i32_1 : i32, i32, i32, i32
  }
}

</mosaic_0001>

<llo_original>
// kernel: tpu_custom_call.1
$region0: #{tpu_custom_call.1}
  #allocation0 [shape = 'u32[]', space=smem, size = 0x4, offset = 0x4, fixed_abs, tag = 'smem constant byte address 0x4 - core index']
  #allocation1 [shape = 'u32[72,128]{1,0:T(1,128)}', space=vmem, size = 0x9000, scoped, tag = 'internal scratch']
  #allocation2 [shape = 'f32[4,20,20]{2,1,0:T(8,128)}', space=vmem, size = 0xc000, scoped, tag = 'scratch operand']
  #allocation3 [shape = 'f32[4,22,22]{2,1,0:T(8,128)}', space=vmem, size = 0xc000, scoped, tag = 'scratch operand']
  %s0 = inlined_call_operand.hbm [shape: f32[2,4,16,16], index: 0, kind: input, shape index: {}]
  %s1 = inlined_call_operand.hbm [shape: f32[144], index: 1, kind: input, shape index: {}]
  %s2 = inlined_call_operand.vmem [shape: f32[4], index: 2, kind: input, shape index: {}]
  %s3 = inlined_call_operand.vmem [shape: f32[72], index: 3, kind: input, shape index: {}]
  %s4 = inlined_call_operand.vmem [shape: f32[2], index: 4, kind: input, shape index: {}]
  %s5 = inlined_call_operand.vmem [shape: f32[2,2,20,20], index: 5, kind: output, shape index: {}]
  %s6 = sld [smem:[#allocation0]]
  $region73: #{tpu_custom_call.1} parent=0
    _
  %s8 = ssub.s32 1, %s6
  %s9 = scalar_select 0, %s8, %s6
  $region1: #{tpu_custom_call.1} parent=0
    #allocation4 [shape = 'u8[65536]{0}', space=vmem, size = 0x10000, scoped, tag = 'input window, operand 0']
    #allocation5 [shape = 's32[2]{0}', space=sflag, size = 0x8, scoped, tag = 'scoped memory for tpu_custom_call.1']
    #allocation6 [shape = 's32[2]{0}', space=sflag, size = 0x8, scoped, tag = 'scoped memory for tpu_custom_call.1']
    #allocation7 [shape = 's32[2]{0}', space=sflag, size = 0x8, scoped, tag = 'scoped memory for tpu_custom_call.1']
    #allocation8 [shape = 'u8[1024]{0}', space=smem, size = 0x400, scoped, tag = 'input window, operand 1, single buffered']
    #allocation9 [shape = 'u8[512]{0}', space=smem, size = 0x200, scoped, tag = 'input window, operand 2, single buffered']
    #allocation10 [shape = 'u8[512]{0}', space=smem, size = 0x200, scoped, tag = 'input window, operand 3, single buffered']
    #allocation11 [shape = 's32[1]{0}', space=sflag, size = 0x4, scoped, tag = 'scoped memory for tpu_custom_call.1']
    #allocation12 [shape = 'u8[512]{0}', space=smem, size = 0x200, scoped, tag = 'input window, operand 4, single buffered']
    %10 = vsyncpa [#allocation5], 0
    %s11 = scalar_lea.sflag [#allocation5], 1
    %12 = vsyncpa %s11, 0
    %13 = vsyncpa [#allocation6], 0
    %14 = vsyncpa [#allocation7], 0
    %15 = vsyncpa [#allocation11], 0
    loop: start=0, step=1, limit=4
    $region2: #{tpu_custom_call.1} parent=1 // loop_pre_header
      _
    $region3: #{tpu_custom_call.1} parent=1 // loop_header
      %s17 = sphi 0, %s21
      %p18 = scmp.ge.s32.totalorder %s17, 4
      %s27 = sphi 0, %s29
      %s30 = sphi 0, %s27
      %s31 = sphi 0, %s30
      %s47 = sphi 0, %s31
      %s51 = sphi 0, %s51
      %s53 = sphi 0, %s51
      %s54 = sphi 0, %s53
      %s68 = sphi 0, %s54
      %s72 = sphi 0, %s72
      %s74 = sphi 0, %s72
      %s75 = sphi 0, %s74
      %s89 = sphi 0, %s75
      %s93 = sphi 0, %s93
      %s95 = sphi 0, %s93
      %s96 = sphi 0, %s95
      %s110 = sphi 0, %s96
      %s114 = sphi 0, %s114
      %s116 = sphi 0, %s114
      %s117 = sphi 0, %s116
      %s131 = sphi 0, %s117
      %s137 = sphi 0, %s139
      %s140 = sphi 0, %s137
      %s141 = sphi 0, %s140
      %s157 = sphi 0, %s141
    $region4: #{tpu_custom_call.1} parent=1 // loop_header_branch
      %20 = sbr.rel (%p18) target = $region8
    $region5: #{tpu_custom_call.1} parent=1 // loop_body
      %s22 = ssub.s32 %s17, 1
      %s23 = ssub.s32 %s17, 2
      %s24 = sadd.s32 %s17, 1
      %s25 = ssub.s32 %s17, %s24
      %p26 = scmp.eq.s32.totalorder %s25, 0
      %s28 = sadd.s32 %s27, 1
      %s29 = scalar_select %p26, %s27, %s28
      %p32 = pneg %p26
      %p33 = scmp.eq.s32.totalorder %s17, 1
      %p34 = por %p32, %p33
      %p35 = scmp.ne.s32.totalorder %s27, %s30
      %p36 = scmp.eq.s32.totalorder %s17, 0
      %p37 = por %p35, %p36
      %p38 = scmp.ne.s32.totalorder %s27, %s30
      %p39 = scmp.eq.s32.totalorder %s22, 1
      %p40 = por %p38, %p39
      %p41 = scmp.ne.s32.totalorder %s30, %s31
      %p42 = scmp.eq.s32.totalorder %s22, 0
      %p43 = por %p41, %p42
      %p44 = scmp.ne.s32.totalorder %s30, %s31
      %p45 = scmp.eq.s32.totalorder %s23, 1
      %p46 = por %p44, %p45
      %p48 = scmp.ne.s32.totalorder %s31, %s47
      %p49 = scmp.eq.s32.totalorder %s23, 0
      %p50 = por %p48, %p49
      %s52 = sadd.s32 %s51, 1
      %p55 = scmp.eq.s32.totalorder %s17, 1
      %p56 = scmp.ne.s32.totalorder %s51, %s53
      %p57 = scmp.eq.s32.totalorder %s17, 0
      %p58 = por %p56, %p57
      %p59 = scmp.ne.s32.totalorder %s51, %s53
      %p60 = scmp.eq.s32.totalorder %s22, 1
      %p61 = por %p59, %p60
      %p62 = scmp.ne.s32.totalorder %s53, %s54
      %p63 = scmp.eq.s32.totalorder %s22, 0
      %p64 = por %p62, %p63
      %p65 = scmp.ne.s32.totalorder %s53, %s54
      %p66 = scmp.eq.s32.totalorder %s23, 1
      %p67 = por %p65, %p66
      %p69 = scmp.ne.s32.totalorder %s54, %s68
      %p70 = scmp.eq.s32.totalorder %s23, 0
      %p71 = por %p69, %p70
      %s73 = sadd.s32 %s72, 1
      %p76 = scmp.eq.s32.totalorder %s17, 1
      %p77 = scmp.ne.s32.totalorder %s72, %s74
      %p78 = scmp.eq.s32.totalorder %s17, 0
      %p79 = por %p77, %p78
      %p80 = scmp.ne.s32.totalorder %s72, %s74
      %p81 = scmp.eq.s32.totalorder %s22, 1
      %p82 = por %p80, %p81
      %p83 = scmp.ne.s32.totalorder %s74, %s75
      %p84 = scmp.eq.s32.totalorder %s22, 0
      %p85 = por %p83, %p84
      %p86 = scmp.ne.s32.totalorder %s74, %s75
      %p87 = scmp.eq.s32.totalorder %s23, 1
      %p88 = por %p86, %p87
      %p90 = scmp.ne.s32.totalorder %s75, %s89
      %p91 = scmp.eq.s32.totalorder %s23, 0
      %p92 = por %p90, %p91
      %s94 = sadd.s32 %s93, 1
      %p97 = scmp.eq.s32.totalorder %s17, 1
      %p98 = scmp.ne.s32.totalorder %s93, %s95
      %p99 = scmp.eq.s32.totalorder %s17, 0
      %p100 = por %p98, %p99
      %p101 = scmp.ne.s32.totalorder %s93, %s95
      %p102 = scmp.eq.s32.totalorder %s22, 1
      %p103 = por %p101, %p102
      %p104 = scmp.ne.s32.totalorder %s95, %s96
      %p105 = scmp.eq.s32.totalorder %s22, 0
      %p106 = por %p104, %p105
      %p107 = scmp.ne.s32.totalorder %s95, %s96
      %p108 = scmp.eq.s32.totalorder %s23, 1
      %p109 = por %p107, %p108
      %p111 = scmp.ne.s32.totalorder %s96, %s110
      %p112 = scmp.eq.s32.totalorder %s23, 0
      %p113 = por %p111, %p112
      %s115 = sadd.s32 %s114, 1
      %p118 = scmp.eq.s32.totalorder %s17, 1
      %p119 = scmp.ne.s32.totalorder %s114, %s116
      %p120 = scmp.eq.s32.totalorder %s17, 0
      %p121 = por %p119, %p120
      %p122 = scmp.ne.s32.totalorder %s114, %s116
      %p123 = scmp.eq.s32.totalorder %s22, 1
      %p124 = por %p122, %p123
      %p125 = scmp.ne.s32.totalorder %s116, %s117
      %p126 = scmp.eq.s32.totalorder %s22, 0
      %p127 = por %p125, %p126
      %p128 = scmp.ne.s32.totalorder %s116, %s117
      %p129 = scmp.eq.s32.totalorder %s23, 1
      %p130 = por %p128, %p129
      %p132 = scmp.ne.s32.totalorder %s117, %s131
      %p133 = scmp.eq.s32.totalorder %s23, 0
      %p134 = por %p132, %p133
      %s135 = ssub.s32 %s17, %s24
      %p136 = scmp.eq.s32.totalorder %s135, 0
      %s138 = sadd.s32 %s137, 1
      %s139 = scalar_select %p136, %s137, %s138
      %p142 = pneg %p136
      %p143 = scmp.eq.s32.totalorder %s17, 1
      %p144 = por %p142, %p143
      %p145 = scmp.ne.s32.totalorder %s137, %s140
      %p146 = scmp.eq.s32.totalorder %s17, 0
      %p147 = por %p145, %p146
      %p148 = scmp.ne.s32.totalorder %s137, %s140
      %p149 = scmp.eq.s32.totalorder %s22, 1
      %p150 = por %p148, %p149
      %p151 = scmp.ne.s32.totalorder %s140, %s141
      %p152 = scmp.eq.s32.totalorder %s22, 0
      %p153 = por %p151, %p152
      %p154 = scmp.ne.s32.totalorder %s140, %s141
      %p155 = scmp.eq.s32.totalorder %s23, 1
      %p156 = por %p154, %p155
      %p158 = scmp.ne.s32.totalorder %s141, %s157
      %p159 = scmp.eq.s32.totalorder %s23, 0
      %p160 = por %p158, %p159
      %p161 = scmp.le.s32.totalorder 1, %s17
      %p162 = scmp.lt.s32.totalorder %s17, 3
      %p163 = pnand %p161, %p162
      %p164 = pneg %p163
      // Predicated region
      $region9: #{tpu_custom_call.1} parent=5 // pred_check
        _
      $region10: #{tpu_custom_call.1} parent=5 // pred_check_branch
        %166 = sbr.rel (%p163) target = $region12
      $region11: #{tpu_custom_call.1} parent=5 // pred_region
        %s167 = ssub.s32 %s17, 1
        // Predicated region
        $region13: #{tpu_custom_call.1} parent=11 // pred_check
          %p168 = pneg %p64
        $region14: #{tpu_custom_call.1} parent=11 // pred_check_branch
          %170 = sbr.rel (%p168) target = $region16
        $region15: #{tpu_custom_call.1} parent=11 // pred_region
          %172 = vsyncadd [#allocation6], 0
          %s174 = sshll.u32 %s1, 4
          %s175 = int_to_ptr.hbm [resolvable:$true] %s174
          %177 = dma.hbm_to_smem %s175, 32, [#allocation8], [#allocation6]
        $region16: #{tpu_custom_call.1} parent=11 // pred_fallthru
          _
        // Predicated region
        $region17: #{tpu_custom_call.1} parent=11 // pred_check
          %p178 = pneg %p85
        $region18: #{tpu_custom_call.1} parent=11 // pred_check_branch
          %180 = sbr.rel (%p178) target = $region20
        $region19: #{tpu_custom_call.1} parent=11 // pred_region
          %182 = vsyncadd [#allocation7], 0
          %s184 = sshll.u32 %s2, 4
          %s185 = int_to_ptr.vmem [resolvable:$true] %s184
          %187 = dma.vmem_to_smem %s185, 16, [#allocation9], [#allocation7]
        $region20: #{tpu_custom_call.1} parent=11 // pred_fallthru
          _
        // Predicated region
        $region21: #{tpu_custom_call.1} parent=11 // pred_check
          %p188 = pneg %p106
        $region22: #{tpu_custom_call.1} parent=11 // pred_check_branch
          %190 = sbr.rel (%p188) target = $region24
        $region23: #{tpu_custom_call.1} parent=11 // pred_region
          %192 = vsyncadd [#allocation11], 0
          %s194 = sshll.u32 %s3, 4
          %s195 = int_to_ptr.vmem [resolvable:$true] %s194
          %197 = dma.vmem_to_smem %s195, 16, [#allocation10], [#allocation11]
        $region24: #{tpu_custom_call.1} parent=11 // pred_fallthru
          _
        // Predicated region
        $region25: #{tpu_custom_call.1} parent=11 // pred_check
          %p198 = pneg %p127
        $region26: #{tpu_custom_call.1} parent=11 // pred_check_branch
          %200 = sbr.rel (%p198) target = $region28
        $region27: #{tpu_custom_call.1} parent=11 // pred_region
          %202 = vsyncadd [#allocation11], 0
          %s204 = sshll.u32 %s4, 4
          %s205 = int_to_ptr.vmem [resolvable:$true] %s204
          %207 = dma.vmem_to_smem %s205, 16, [#allocation12], [#allocation11]
        $region28: #{tpu_custom_call.1} parent=11 // pred_fallthru
          _
      $region12: #{tpu_custom_call.1} parent=5 // pred_fallthru
        _
      %p208 = scmp.lt.s32.totalorder %s17, 2
      // Predicated region
      $region29: #{tpu_custom_call.1} parent=5 // pred_check
        %p209 = pneg %p208
      $region30: #{tpu_custom_call.1} parent=5 // pred_check_branch
        %211 = sbr.rel (%p209) target = $region32
      $region31: #{tpu_custom_call.1} parent=5 // pred_region
        // Predicated region
        $region33: #{tpu_custom_call.1} parent=31 // pred_check
          %p212 = pneg %p37
        $region34: #{tpu_custom_call.1} parent=31 // pred_check_branch
          %214 = sbr.rel (%p212) target = $region36
        $region35: #{tpu_custom_call.1} parent=31 // pred_region
          %s215 = sand.u32 %s27, 1
          %s216 = scalar_lea.sflag [#allocation5], %s215
          %s217 = sand.u32 %s27, 1
          %s218 = smul.addr %s217, 64
          %s219 = scalar_lea.vmem [#allocation4], %s218
          %221 = vsyncadd %s216, 0
          %s222 = smul.addr %s17, 8
          %s223 = smul.addr %s222, 8
          %s224 = scalar_lea.hbm %s0, %s223
          %s225 = sshll.u32 %s224, 4
          %s226 = int_to_ptr.hbm [resolvable:$true] %s225
          %s227 = sshll.u32 %s219, 4
          %s228 = int_to_ptr.vmem [resolvable:$true] %s227
          %233 = dma.hbm_to_vmem [thread:$0]  %s226, 1024, %s228, %s216, 128, 128, 8
        $region36: #{tpu_custom_call.1} parent=31 // pred_fallthru
          _
      $region32: #{tpu_custom_call.1} parent=5 // pred_fallthru
        _
      %p234 = scmp.le.s32.totalorder 1, %s17
      %p235 = scmp.lt.s32.totalorder %s17, 3
      %p236 = pnand %p234, %p235
      %p237 = pneg %p236
      // Predicated region
      $region37: #{tpu_custom_call.1} parent=5 // pred_check
        _
      $region38: #{tpu_custom_call.1} parent=5 // pred_check_branch
        %239 = sbr.rel (%p236) target = $region40
      $region39: #{tpu_custom_call.1} parent=5 // pred_region
        %s240 = ssub.s32 %s17, 1
        %s241 = sand.u32 %s30, 1
        %s242 = scalar_lea.sflag [#allocation5], %s241
        %s243 = sand.u32 %s30, 1
        %s244 = smul.addr %s243, 64
        %s245 = scalar_lea.vmem [#allocation4], %s244
        // Predicated region
        $region41: #{tpu_custom_call.1} parent=39 // pred_check
          %p246 = pneg %p43
        $region42: #{tpu_custom_call.1} parent=39 // pred_check_branch
          %248 = sbr.rel (%p246) target = $region44
        $region43: #{tpu_custom_call.1} parent=39 // pred_region
          %250 = dma.done %s242, 1024
        $region44: #{tpu_custom_call.1} parent=39 // pred_fallthru
          _
        // Predicated region
        $region45: #{tpu_custom_call.1} parent=39 // pred_check
          %p251 = pneg %p64
        $region46: #{tpu_custom_call.1} parent=39 // pred_check_branch
          %253 = sbr.rel (%p251) target = $region48
        $region47: #{tpu_custom_call.1} parent=39 // pred_region
          %255 = dma.done [#allocation6], 32
        $region48: #{tpu_custom_call.1} parent=39 // pred_fallthru
          _
        // Predicated region
        $region49: #{tpu_custom_call.1} parent=39 // pred_check
          %p256 = pneg %p85
        $region50: #{tpu_custom_call.1} parent=39 // pred_check_branch
          %258 = sbr.rel (%p256) target = $region52
        $region51: #{tpu_custom_call.1} parent=39 // pred_region
          %260 = dma.done [#allocation7], 16
        $region52: #{tpu_custom_call.1} parent=39 // pred_fallthru
          _
        // Predicated region
        $region53: #{tpu_custom_call.1} parent=39 // pred_check
          %p261 = pneg %p106
        $region54: #{tpu_custom_call.1} parent=39 // pred_check_branch
          %263 = sbr.rel (%p261) target = $region56
        $region55: #{tpu_custom_call.1} parent=39 // pred_region
          %265 = dma.done [#allocation11], 16
        $region56: #{tpu_custom_call.1} parent=39 // pred_fallthru
          _
        // Predicated region
        $region57: #{tpu_custom_call.1} parent=39 // pred_check
          %p266 = pneg %p127
        $region58: #{tpu_custom_call.1} parent=39 // pred_check_branch
          %268 = sbr.rel (%p266) target = $region60
        $region59: #{tpu_custom_call.1} parent=39 // pred_region
          %270 = dma.done [#allocation11], 16
        $region60: #{tpu_custom_call.1} parent=39 // pred_fallthru
          _
        %271 = sfence
        %s272 = sand.u32 %s30, 1
        %s273 = scalar_lea.sflag [#allocation5], %s272
        %s274 = sand.u32 %s30, 1
        %s275 = smul.addr %s274, 64
        %s276 = scalar_lea.vmem [#allocation4], %s275
        %p277 = pneg %p43
        %p278 = pneg %p40
        %p279 = pneg %p64
        %p280 = pneg %p61
        %p281 = pneg %p85
        %p282 = pneg %p82
        %p283 = pneg %p106
        %p284 = pneg %p103
        %p285 = pneg %p127
        %p286 = pneg %p124
        %p287 = pneg %p153
        %p288 = pneg %p150
        %p289 = scmp.lt.s32.totalorder %s22, 1
        %s290 = scalar_select %p289, %s22, 1
        %s291 = smul.addr %s290, 6
        %s292 = smul.addr %s291, 8
        %s293 = scalar_lea.vmem %s5, %s292
        %p294 = scmp.lt.s32.totalorder %s22, 1
        %s295 = scalar_select %p294, %s22, 1
        %s296 = smul.addr %s295, 6
        %s297 = smul.addr %s296, 8
        %s298 = scalar_lea.vmem %s5, %s297
        %vm299 = vcmask 162816
        %300 = vst.msk [vmem:[#allocation2] sm:$0xff] %vm299, 0.0
        %301 = vst.msk [vmem:[#allocation2 + $0x8] sm:$0xff] %vm299, 0.0
        %vm302 = vcmask 158720
        %303 = vst.msk [vmem:[#allocation2 + $0x10] sm:$0xf] %vm302, 0.0
        %304 = vst.msk [vmem:[#allocation2 + $0x18] sm:$0xff] %vm299, 0.0
        %305 = vst.msk [vmem:[#allocation2 + $0x20] sm:$0xff] %vm299, 0.0
        %306 = vst.msk [vmem:[#allocation2 + $0x28] sm:$0xf] %vm302, 0.0
        %307 = vst.msk [vmem:[#allocation2 + $0x30] sm:$0xff] %vm299, 0.0
        %308 = vst.msk [vmem:[#allocation2 + $0x38] sm:$0xff] %vm299, 0.0
        %309 = vst.msk [vmem:[#allocation2 + $0x40] sm:$0xf] %vm302, 0.0
        %310 = vst.msk [vmem:[#allocation2 + $0x48] sm:$0xff] %vm299, 0.0
        %311 = vst.msk [vmem:[#allocation2 + $0x50] sm:$0xff] %vm299, 0.0
        %312 = vst.msk [vmem:[#allocation2 + $0x58] sm:$0xf] %vm302, 0.0
        %v313 = vld [vmem:[%s245] sm:$0xff]
        %v314 = vld [vmem:[%s245 + $0x8] sm:$0xff]
        %317 = vrot.lane.b32.xlu0 %v313, 2
        %v318 = vpop.permute.xlu0 %317
        %319 = vrot.lane.b32.xlu0 %v314, 2
        %v320 = vpop.permute.xlu0 %319
        %vm323 = vcmask 146448
        %324 = vst.msk [vmem:[#allocation2 + $0x2] sm:$0xff] %vm323, %v318
        %325 = vst.msk [vmem:[#allocation2 + $0xa] sm:$0xff] %vm323, %v320
        %s326 = scalar_lea.vmem %s245, 16 [#allocation4]
        %v327 = vld [vmem:[%s326] sm:$0xff]
        %v328 = vld [vmem:[%s326 + $0x8] sm:$0xff]
        %331 = vrot.lane.b32.xlu0 %v327, 2
        %v332 = vpop.permute.xlu0 %331
        %333 = vrot.lane.b32.xlu0 %v328, 2
        %v334 = vpop.permute.xlu0 %333
        %s337 = scalar_lea.vmem [#allocation2], 24
        %338 = vst.msk [vmem:[%s337 + $0x2] sm:$0xff] %vm323, %v332
        %339 = vst.msk [vmem:[%s337 + $0xa] sm:$0xff] %vm323, %v334
        %s340 = scalar_lea.vmem %s245, 32 [#allocation4]
        %v341 = vld [vmem:[%s340] sm:$0xff]
        %v342 = vld [vmem:[%s340 + $0x8] sm:$0xff]
        %345 = vrot.lane.b32.xlu0 %v341, 2
        %v346 = vpop.permute.xlu0 %345
        %347 = vrot.lane.b32.xlu0 %v342, 2
        %v348 = vpop.permute.xlu0 %347
        %s351 = scalar_lea.vmem [#allocation2], 48
        %352 = vst.msk [vmem:[%s351 + $0x2] sm:$0xff] %vm323, %v346
        %353 = vst.msk [vmem:[%s351 + $0xa] sm:$0xff] %vm323, %v348
        %s354 = scalar_lea.vmem %s245, 48 [#allocation4]
        %v355 = vld [vmem:[%s354] sm:$0xff]
        %v356 = vld [vmem:[%s354 + $0x8] sm:$0xff]
        %359 = vrot.lane.b32.xlu0 %v355, 2
        %v360 = vpop.permute.xlu0 %359
        %361 = vrot.lane.b32.xlu0 %v356, 2
        %v362 = vpop.permute.xlu0 %361
        %s365 = scalar_lea.vmem [#allocation2], 72
        %366 = vst.msk [vmem:[%s365 + $0x2] sm:$0xff] %vm323, %v360
        %367 = vst.msk [vmem:[%s365 + $0xa] sm:$0xff] %vm323, %v362
        %vm368 = vcmask 179200
        %369 = vst.msk [vmem:[#allocation3] sm:$0xff] %vm368, 0.0
        %370 = vst.msk [vmem:[#allocation3 + $0x8] sm:$0xff] %vm368, 0.0
        %vm371 = vcmask 177152
        %372 = vst.msk [vmem:[#allocation3 + $0x10] sm:$0x3f] %vm371, 0.0
        %373 = vst.msk [vmem:[#allocation3 + $0x18] sm:$0xff] %vm368, 0.0
        %374 = vst.msk [vmem:[#allocation3 + $0x20] sm:$0xff] %vm368, 0.0
        %375 = vst.msk [vmem:[#allocation3 + $0x28] sm:$0x3f] %vm371, 0.0
        %376 = vst.msk [vmem:[#allocation3 + $0x30] sm:$0xff] %vm368, 0.0
        %377 = vst.msk [vmem:[#allocation3 + $0x38] sm:$0xff] %vm368, 0.0
        %378 = vst.msk [vmem:[#allocation3 + $0x40] sm:$0x3f] %vm371, 0.0
        %379 = vst.msk [vmem:[#allocation3 + $0x48] sm:$0xff] %vm368, 0.0
        %380 = vst.msk [vmem:[#allocation3 + $0x50] sm:$0xff] %vm368, 0.0
        %381 = vst.msk [vmem:[#allocation3 + $0x58] sm:$0x3f] %vm371, 0.0
        %s382 = sld [smem:[#allocation9]]
        %v383 = vstv %s382
        %s384 = sld [smem:[#allocation9 + $0x1]]
        %v385 = vstv %s384
        %s386 = sld [smem:[#allocation9 + $0x2]]
        %v387 = vstv %s386
        %s388 = sld [smem:[#allocation9 + $0x3]]
        %v389 = vstv %s388
        %v390 = vld [vmem:[#allocation2] sm:$0xff]
        %v391 = vld [vmem:[#allocation2 + $0x8] sm:$0xff]
        %v392 = vld [vmem:[#allocation2 + $0x10] sm:$0x3]
        %s393 = sld [smem:[#allocation8]]
        %v394 = vstv %s393
        %v395 = vmul.f32 %v394, %v390
        %v396 = vmul.f32 %v394, %v391
        %v397 = vmul.f32 %v394, %v392
        %v398 = vadd.f32 %v383, %v395
        %v399 = vadd.f32 %v383, %v396
        %v400 = vadd.f32 %v383, %v397
        %s401 = sld [smem:[#allocation8 + $0x24]]
        %v402 = vstv %s401
        %v403 = vmul.f32 %v402, %v390
        %v404 = vmul.f32 %v402, %v391
        %v405 = vmul.f32 %v402, %v392
        %v406 = vadd.f32 %v385, %v403
        %v407 = vadd.f32 %v385, %v404
        %v408 = vadd.f32 %v385, %v405
        %s409 = sld [smem:[#allocation8 + $0x48]]
        %v410 = vstv %s409
        %v411 = vmul.f32 %v410, %v390
        %v412 = vmul.f32 %v410, %v391
        %v413 = vmul.f32 %v410, %v392
        %v414 = vadd.f32 %v387, %v411
        %v415 = vadd.f32 %v387, %v412
        %v416 = vadd.f32 %v387, %v413
        %s417 = sld [smem:[#allocation8 + $0x6c]]
        %v418 = vstv %s417
        %v419 = vmul.f32 %v418, %v390
        %v420 = vmul.f32 %v418, %v391
        %v421 = vmul.f32 %v418, %v392
        %v422 = vadd.f32 %v389, %v419
        %v423 = vadd.f32 %v389, %v420
        %v424 = vadd.f32 %v389, %v421
        %s425 = sld [smem:[#allocation8 + $0x1]]
        %v426 = vstv %s425
        %v427 = vmul.f32 %v426, %v390
        %v428 = vmul.f32 %v426, %v391
        %v429 = vmul.f32 %v426, %v392
        %433 = vrot.lane.b32.xlu0 %v427, 127
        %v434 = vpop.permute.xlu0 %433
        %435 = vrot.lane.b32.xlu0 %v428, 127
        %v436 = vpop.permute.xlu0 %435
        %437 = vrot.lane.b32.xlu0 %v429, 127
        %v438 = vpop.permute.xlu0 %437
        %v442 = vadd.f32 %v398, %v434
        %v443 = vadd.f32 %v399, %v436
        %v444 = vadd.f32 %v400, %v438
        %s445 = sld [smem:[#allocation8 + $0x25]]
        %v446 = vstv %s445
        %v447 = vmul.f32 %v446, %v390
        %v448 = vmul.f32 %v446, %v391
        %v449 = vmul.f32 %v446, %v392
        %453 = vrot.lane.b32.xlu0 %v447, 127
        %v454 = vpop.permute.xlu0 %453
        %455 = vrot.lane.b32.xlu0 %v448, 127
        %v456 = vpop.permute.xlu0 %455
        %457 = vrot.lane.b32.xlu0 %v449, 127
        %v458 = vpop.permute.xlu0 %457
        %v462 = vadd.f32 %v406, %v454
        %v463 = vadd.f32 %v407, %v456
        %v464 = vadd.f32 %v408, %v458
        %s465 = sld [smem:[#allocation8 + $0x49]]
        %v466 = vstv %s465
        %v467 = vmul.f32 %v466, %v390
        %v468 = vmul.f32 %v466, %v391
        %v469 = vmul.f32 %v466, %v392
        %473 = vrot.lane.b32.xlu0 %v467, 127
        %v474 = vpop.permute.xlu0 %473
        %475 = vrot.lane.b32.xlu0 %v468, 127
        %v476 = vpop.permute.xlu0 %475
        %477 = vrot.lane.b32.xlu0 %v469, 127
        %v478 = vpop.permute.xlu0 %477
        %v482 = vadd.f32 %v414, %v474
        %v483 = vadd.f32 %v415, %v476
        %v484 = vadd.f32 %v416, %v478
        %s485 = sld [smem:[#allocation8 + $0x6d]]
        %v486 = vstv %s485
        %v487 = vmul.f32 %v486, %v390
        %v488 = vmul.f32 %v486, %v391
        %v489 = vmul.f32 %v486, %v392
        %493 = vrot.lane.b32.xlu0 %v487, 127
        %v494 = vpop.permute.xlu0 %493
        %495 = vrot.lane.b32.xlu0 %v488, 127
        %v496 = vpop.permute.xlu0 %495
        %497 = vrot.lane.b32.xlu0 %v489, 127
        %v498 = vpop.permute.xlu0 %497
        %v502 = vadd.f32 %v422, %v494
        %v503 = vadd.f32 %v423, %v496
        %v504 = vadd.f32 %v424, %v498
        %s505 = sld [smem:[#allocation8 + $0x2]]
        %v506 = vstv %s505
        %v507 = vmul.f32 %v506, %v390
        %v508 = vmul.f32 %v506, %v391
        %v509 = vmul.f32 %v506, %v392
        %513 = vrot.lane.b32.xlu0 %v507, 126
        %v514 = vpop.permute.xlu0 %513
        %515 = vrot.lane.b32.xlu0 %v508, 126
        %v516 = vpop.permute.xlu0 %515
        %517 = vrot.lane.b32.xlu0 %v509, 126
        %v518 = vpop.permute.xlu0 %517
        %v522 = vadd.f32 %v442, %v514
        %v523 = vadd.f32 %v443, %v516
        %v524 = vadd.f32 %v444, %v518
        %s525 = sld [smem:[#allocation8 + $0x26]]
        %v526 = vstv %s525
        %v527 = vmul.f32 %v526, %v390
        %v528 = vmul.f32 %v526, %v391
        %v529 = vmul.f32 %v526, %v392
        %533 = vrot.lane.b32.xlu0 %v527, 126
        %v534 = vpop.permute.xlu0 %533
        %535 = vrot.lane.b32.xlu0 %v528, 126
        %v536 = vpop.permute.xlu0 %535
        %537 = vrot.lane.b32.xlu0 %v529, 126
        %v538 = vpop.permute.xlu0 %537
        %v542 = vadd.f32 %v462, %v534
        %v543 = vadd.f32 %v463, %v536
        %v544 = vadd.f32 %v464, %v538
        %s545 = sld [smem:[#allocation8 + $0x4a]]
        %v546 = vstv %s545
        %v547 = vmul.f32 %v546, %v390
        %v548 = vmul.f32 %v546, %v391
        %v549 = vmul.f32 %v546, %v392
        %553 = vrot.lane.b32.xlu0 %v547, 126
        %v554 = vpop.permute.xlu0 %553
        %555 = vrot.lane.b32.xlu0 %v548, 126
        %v556 = vpop.permute.xlu0 %555
        %557 = vrot.lane.b32.xlu0 %v549, 126
        %v558 = vpop.permute.xlu0 %557
        %v562 = vadd.f32 %v482, %v554
        %v563 = vadd.f32 %v483, %v556
        %v564 = vadd.f32 %v484, %v558
        %s565 = sld [smem:[#allocation8 + $0x6e]]
        %v566 = vstv %s565
        %v567 = vmul.f32 %v566, %v390
        %v568 = vmul.f32 %v566, %v391
        %v569 = vmul.f32 %v566, %v392
        %573 = vrot.lane.b32.xlu0 %v567, 126
        %v574 = vpop.permute.xlu0 %573
        %575 = vrot.lane.b32.xlu0 %v568, 126
        %v576 = vpop.permute.xlu0 %575
        %577 = vrot.lane.b32.xlu0 %v569, 126
        %v578 = vpop.permute.xlu0 %577
        %v582 = vadd.f32 %v502, %v574
        %v583 = vadd.f32 %v503, %v576
        %v584 = vadd.f32 %v504, %v578
        %v585 = vld [vmem:[#allocation2 + $0x1] sm:$0xff]
        %v586 = vld [vmem:[#allocation2 + $0x9] sm:$0xff]
        %v587 = vld [vmem:[#allocation2 + $0x11] sm:$0x3]
        %s588 = sld [smem:[#allocation8 + $0x3]]
        %v589 = vstv %s588
        %v590 = vmul.f32 %v589, %v585
        %v591 = vmul.f32 %v589, %v586
        %v592 = vmul.f32 %v589, %v587
        %v593 = vadd.f32 %v522, %v590
        %v594 = vadd.f32 %v523, %v591
        %v595 = vadd.f32 %v524, %v592
        %s596 = sld [smem:[#allocation8 + $0x27]]
        %v597 = vstv %s596
        %v598 = vmul.f32 %v597, %v585
        %v599 = vmul.f32 %v597, %v586
        %v600 = vmul.f32 %v597, %v587
        %v601 = vadd.f32 %v542, %v598
        %v602 = vadd.f32 %v543, %v599
        %v603 = vadd.f32 %v544, %v600
        %s604 = sld [smem:[#allocation8 + $0x4b]]
        %v605 = vstv %s604
        %v606 = vmul.f32 %v605, %v585
        %v607 = vmul.f32 %v605, %v586
        %v608 = vmul.f32 %v605, %v587
        %v609 = vadd.f32 %v562, %v606
        %v610 = vadd.f32 %v563, %v607
        %v611 = vadd.f32 %v564, %v608
        %s612 = sld [smem:[#allocation8 + $0x6f]]
        %v613 = vstv %s612
        %v614 = vmul.f32 %v613, %v585
        %v615 = vmul.f32 %v613, %v586
        %v616 = vmul.f32 %v613, %v587
        %v617 = vadd.f32 %v582, %v614
        %v618 = vadd.f32 %v583, %v615
        %v619 = vadd.f32 %v584, %v616
        %s620 = sld [smem:[#allocation8 + $0x4]]
        %v621 = vstv %s620
        %v622 = vmul.f32 %v621, %v585
        %v623 = vmul.f32 %v621, %v586
        %v624 = vmul.f32 %v621, %v587
        %628 = vrot.lane.b32.xlu0 %v622, 127
        %v629 = vpop.permute.xlu0 %628
        %630 = vrot.lane.b32.xlu0 %v623, 127
        %v631 = vpop.permute.xlu0 %630
        %632 = vrot.lane.b32.xlu0 %v624, 127
        %v633 = vpop.permute.xlu0 %632
        %v637 = vadd.f32 %v593, %v629
        %v638 = vadd.f32 %v594, %v631
        %v639 = vadd.f32 %v595, %v633
        %s640 = sld [smem:[#allocation8 + $0x28]]
        %v641 = vstv %s640
        %v642 = vmul.f32 %v641, %v585
        %v643 = vmul.f32 %v641, %v586
        %v644 = vmul.f32 %v641, %v587
        %648 = vrot.lane.b32.xlu0 %v642, 127
        %v649 = vpop.permute.xlu0 %648
        %650 = vrot.lane.b32.xlu0 %v643, 127
        %v651 = vpop.permute.xlu0 %650
        %652 = vrot.lane.b32.xlu0 %v644, 127
        %v653 = vpop.permute.xlu0 %652
        %v657 = vadd.f32 %v601, %v649
        %v658 = vadd.f32 %v602, %v651
        %v659 = vadd.f32 %v603, %v653
        %s660 = sld [smem:[#allocation8 + $0x4c]]
        %v661 = vstv %s660
        %v662 = vmul.f32 %v661, %v585
        %v663 = vmul.f32 %v661, %v586
        %v664 = vmul.f32 %v661, %v587
        %668 = vrot.lane.b32.xlu0 %v662, 127
        %v669 = vpop.permute.xlu0 %668
        %670 = vrot.lane.b32.xlu0 %v663, 127
        %v671 = vpop.permute.xlu0 %670
        %672 = vrot.lane.b32.xlu0 %v664, 127
        %v673 = vpop.permute.xlu0 %672
        %v677 = vadd.f32 %v609, %v669
        %v678 = vadd.f32 %v610, %v671
        %v679 = vadd.f32 %v611, %v673
        %s680 = sld [smem:[#allocation8 + $0x70]]
        %v681 = vstv %s680
        %v682 = vmul.f32 %v681, %v585
        %v683 = vmul.f32 %v681, %v586
        %v684 = vmul.f32 %v681, %v587
        %688 = vrot.lane.b32.xlu0 %v682, 127
        %v689 = vpop.permute.xlu0 %688
        %690 = vrot.lane.b32.xlu0 %v683, 127
        %v691 = vpop.permute.xlu0 %690
        %692 = vrot.lane.b32.xlu0 %v684, 127
        %v693 = vpop.permute.xlu0 %692
        %v697 = vadd.f32 %v617, %v689
        %v698 = vadd.f32 %v618, %v691
        %v699 = vadd.f32 %v619, %v693
        %s700 = sld [smem:[#allocation8 + $0x5]]
        %v701 = vstv %s700
        %v702 = vmul.f32 %v701, %v585
        %v703 = vmul.f32 %v701, %v586
        %v704 = vmul.f32 %v701, %v587
        %708 = vrot.lane.b32.xlu0 %v702, 126
        %v709 = vpop.permute.xlu0 %708
        %710 = vrot.lane.b32.xlu0 %v703, 126
        %v711 = vpop.permute.xlu0 %710
        %712 = vrot.lane.b32.xlu0 %v704, 126
        %v713 = vpop.permute.xlu0 %712
        %v717 = vadd.f32 %v637, %v709
        %v718 = vadd.f32 %v638, %v711
        %v719 = vadd.f32 %v639, %v713
        %s720 = sld [smem:[#allocation8 + $0x29]]
        %v721 = vstv %s720
        %v722 = vmul.f32 %v721, %v585
        %v723 = vmul.f32 %v721, %v586
        %v724 = vmul.f32 %v721, %v587
        %728 = vrot.lane.b32.xlu0 %v722, 126
        %v729 = vpop.permute.xlu0 %728
        %730 = vrot.lane.b32.xlu0 %v723, 126
        %v731 = vpop.permute.xlu0 %730
        %732 = vrot.lane.b32.xlu0 %v724, 126
        %v733 = vpop.permute.xlu0 %732
        %v737 = vadd.f32 %v657, %v729
        %v738 = vadd.f32 %v658, %v731
        %v739 = vadd.f32 %v659, %v733
        %s740 = sld [smem:[#allocation8 + $0x4d]]
        %v741 = vstv %s740
        %v742 = vmul.f32 %v741, %v585
        %v743 = vmul.f32 %v741, %v586
        %v744 = vmul.f32 %v741, %v587
        %748 = vrot.lane.b32.xlu0 %v742, 126
        %v749 = vpop.permute.xlu0 %748
        %750 = vrot.lane.b32.xlu0 %v743, 126
        %v751 = vpop.permute.xlu0 %750
        %752 = vrot.lane.b32.xlu0 %v744, 126
        %v753 = vpop.permute.xlu0 %752
        %v757 = vadd.f32 %v677, %v749
        %v758 = vadd.f32 %v678, %v751
        %v759 = vadd.f32 %v679, %v753
        %s760 = sld [smem:[#allocation8 + $0x71]]
        %v761 = vstv %s760
        %v762 = vmul.f32 %v761, %v585
        %v763 = vmul.f32 %v761, %v586
        %v764 = vmul.f32 %v761, %v587
        %768 = vrot.lane.b32.xlu0 %v762, 126
        %v769 = vpop.permute.xlu0 %768
        %770 = vrot.lane.b32.xlu0 %v763, 126
        %v771 = vpop.permute.xlu0 %770
        %772 = vrot.lane.b32.xlu0 %v764, 126
        %v773 = vpop.permute.xlu0 %772
        %v777 = vadd.f32 %v697, %v769
        %v778 = vadd.f32 %v698, %v771
        %v779 = vadd.f32 %v699, %v773
        %v780 = vld [vmem:[#allocation2 + $0x2] sm:$0xff]
        %v781 = vld [vmem:[#allocation2 + $0xa] sm:$0xff]
        %v782 = vld [vmem:[#allocation2 + $0x12] sm:$0x3]
        %s783 = sld [smem:[#allocation8 + $0x6]]
        %v784 = vstv %s783
        %v785 = vmul.f32 %v784, %v780
        %v786 = vmul.f32 %v784, %v781
        %v787 = vmul.f32 %v784, %v782
        %v788 = vadd.f32 %v717, %v785
        %v789 = vadd.f32 %v718, %v786
        %v790 = vadd.f32 %v719, %v787
        %s791 = sld [smem:[#allocation8 + $0x2a]]
        %v792 = vstv %s791
        %v793 = vmul.f32 %v792, %v780
        %v794 = vmul.f32 %v792, %v781
        %v795 = vmul.f32 %v792, %v782
        %v796 = vadd.f32 %v737, %v793
        %v797 = vadd.f32 %v738, %v794
        %v798 = vadd.f32 %v739, %v795
        %s799 = sld [smem:[#allocation8 + $0x4e]]
        %v800 = vstv %s799
        %v801 = vmul.f32 %v800, %v780
        %v802 = vmul.f32 %v800, %v781
        %v803 = vmul.f32 %v800, %v782
        %v804 = vadd.f32 %v757, %v801
        %v805 = vadd.f32 %v758, %v802
        %v806 = vadd.f32 %v759, %v803
        %s807 = sld [smem:[#allocation8 + $0x72]]
        %v808 = vstv %s807
        %v809 = vmul.f32 %v808, %v780
        %v810 = vmul.f32 %v808, %v781
        %v811 = vmul.f32 %v808, %v782
        %v812 = vadd.f32 %v777, %v809
        %v813 = vadd.f32 %v778, %v810
        %v814 = vadd.f32 %v779, %v811
        %s815 = sld [smem:[#allocation8 + $0x7]]
        %v816 = vstv %s815
        %v817 = vmul.f32 %v816, %v780
        %v818 = vmul.f32 %v816, %v781
        %v819 = vmul.f32 %v816, %v782
        %823 = vrot.lane.b32.xlu0 %v817, 127
        %v824 = vpop.permute.xlu0 %823
        %825 = vrot.lane.b32.xlu0 %v818, 127
        %v826 = vpop.permute.xlu0 %825
        %827 = vrot.lane.b32.xlu0 %v819, 127
        %v828 = vpop.permute.xlu0 %827
        %v832 = vadd.f32 %v788, %v824
        %v833 = vadd.f32 %v789, %v826
        %v834 = vadd.f32 %v790, %v828
        %s835 = sld [smem:[#allocation8 + $0x2b]]
        %v836 = vstv %s835
        %v837 = vmul.f32 %v836, %v780
        %v838 = vmul.f32 %v836, %v781
        %v839 = vmul.f32 %v836, %v782
        %843 = vrot.lane.b32.xlu0 %v837, 127
        %v844 = vpop.permute.xlu0 %843
        %845 = vrot.lane.b32.xlu0 %v838, 127
        %v846 = vpop.permute.xlu0 %845
        %847 = vrot.lane.b32.xlu0 %v839, 127
        %v848 = vpop.permute.xlu0 %847
        %v852 = vadd.f32 %v796, %v844
        %v853 = vadd.f32 %v797, %v846
        %v854 = vadd.f32 %v798, %v848
        %s855 = sld [smem:[#allocation8 + $0x4f]]
        %v856 = vstv %s855
        %v857 = vmul.f32 %v856, %v780
        %v858 = vmul.f32 %v856, %v781
        %v859 = vmul.f32 %v856, %v782
        %863 = vrot.lane.b32.xlu0 %v857, 127
        %v864 = vpop.permute.xlu0 %863
        %865 = vrot.lane.b32.xlu0 %v858, 127
        %v866 = vpop.permute.xlu0 %865
        %867 = vrot.lane.b32.xlu0 %v859, 127
        %v868 = vpop.permute.xlu0 %867
        %v872 = vadd.f32 %v804, %v864
        %v873 = vadd.f32 %v805, %v866
        %v874 = vadd.f32 %v806, %v868
        %s875 = sld [smem:[#allocation8 + $0x73]]
        %v876 = vstv %s875
        %v877 = vmul.f32 %v876, %v780
        %v878 = vmul.f32 %v876, %v781
        %v879 = vmul.f32 %v876, %v782
        %883 = vrot.lane.b32.xlu0 %v877, 127
        %v884 = vpop.permute.xlu0 %883
        %885 = vrot.lane.b32.xlu0 %v878, 127
        %v886 = vpop.permute.xlu0 %885
        %887 = vrot.lane.b32.xlu0 %v879, 127
        %v888 = vpop.permute.xlu0 %887
        %v892 = vadd.f32 %v812, %v884
        %v893 = vadd.f32 %v813, %v886
        %v894 = vadd.f32 %v814, %v888
        %s895 = sld [smem:[#allocation8 + $0x8]]
        %v896 = vstv %s895
        %v897 = vmul.f32 %v896, %v780
        %v898 = vmul.f32 %v896, %v781
        %v899 = vmul.f32 %v896, %v782
        %903 = vrot.lane.b32.xlu0 %v897, 126
        %v904 = vpop.permute.xlu0 %903
        %905 = vrot.lane.b32.xlu0 %v898, 126
        %v906 = vpop.permute.xlu0 %905
        %907 = vrot.lane.b32.xlu0 %v899, 126
        %v908 = vpop.permute.xlu0 %907
        %v912 = vadd.f32 %v832, %v904
        %v913 = vadd.f32 %v833, %v906
        %v914 = vadd.f32 %v834, %v908
        %s915 = sld [smem:[#allocation8 + $0x2c]]
        %v916 = vstv %s915
        %v917 = vmul.f32 %v916, %v780
        %v918 = vmul.f32 %v916, %v781
        %v919 = vmul.f32 %v916, %v782
        %923 = vrot.lane.b32.xlu0 %v917, 126
        %v924 = vpop.permute.xlu0 %923
        %925 = vrot.lane.b32.xlu0 %v918, 126
        %v926 = vpop.permute.xlu0 %925
        %927 = vrot.lane.b32.xlu0 %v919, 126
        %v928 = vpop.permute.xlu0 %927
        %v932 = vadd.f32 %v852, %v924
        %v933 = vadd.f32 %v853, %v926
        %v934 = vadd.f32 %v854, %v928
        %s935 = sld [smem:[#allocation8 + $0x50]]
        %v936 = vstv %s935
        %v937 = vmul.f32 %v936, %v780
        %v938 = vmul.f32 %v936, %v781
        %v939 = vmul.f32 %v936, %v782
        %943 = vrot.lane.b32.xlu0 %v937, 126
        %v944 = vpop.permute.xlu0 %943
        %945 = vrot.lane.b32.xlu0 %v938, 126
        %v946 = vpop.permute.xlu0 %945
        %947 = vrot.lane.b32.xlu0 %v939, 126
        %v948 = vpop.permute.xlu0 %947
        %v952 = vadd.f32 %v872, %v944
        %v953 = vadd.f32 %v873, %v946
        %v954 = vadd.f32 %v874, %v948
        %s955 = sld [smem:[#allocation8 + $0x74]]
        %v956 = vstv %s955
        %v957 = vmul.f32 %v956, %v780
        %v958 = vmul.f32 %v956, %v781
        %v959 = vmul.f32 %v956, %v782
        %963 = vrot.lane.b32.xlu0 %v957, 126
        %v964 = vpop.permute.xlu0 %963
        %965 = vrot.lane.b32.xlu0 %v958, 126
        %v966 = vpop.permute.xlu0 %965
        %967 = vrot.lane.b32.xlu0 %v959, 126
        %v968 = vpop.permute.xlu0 %967
        %v972 = vadd.f32 %v892, %v964
        %v973 = vadd.f32 %v893, %v966
        %v974 = vadd.f32 %v894, %v968
        %v975 = vld [vmem:[%s337] sm:$0xff]
        %v976 = vld [vmem:[%s337 + $0x8] sm:$0xff]
        %v977 = vld [vmem:[%s337 + $0x10] sm:$0x3]
        %s978 = sld [smem:[#allocation8 + $0x9]]
        %v979 = vstv %s978
        %v980 = vmul.f32 %v979, %v975
        %v981 = vmul.f32 %v979, %v976
        %v982 = vmul.f32 %v979, %v977
        %v983 = vadd.f32 %v912, %v980
        %v984 = vadd.f32 %v913, %v981
        %v985 = vadd.f32 %v914, %v982
        %s986 = sld [smem:[#allocation8 + $0x2d]]
        %v987 = vstv %s986
        %v988 = vmul.f32 %v987, %v975
        %v989 = vmul.f32 %v987, %v976
        %v990 = vmul.f32 %v987, %v977
        %v991 = vadd.f32 %v932, %v988
        %v992 = vadd.f32 %v933, %v989
        %v993 = vadd.f32 %v934, %v990
        %s994 = sld [smem:[#allocation8 + $0x51]]
        %v995 = vstv %s994
        %v996 = vmul.f32 %v995, %v975
        %v997 = vmul.f32 %v995, %v976
        %v998 = vmul.f32 %v995, %v977
        %v999 = vadd.f32 %v952, %v996
        %v1000 = vadd.f32 %v953, %v997
        %v1001 = vadd.f32 %v954, %v998
        %s1002 = sld [smem:[#allocation8 + $0x75]]
        %v1003 = vstv %s1002
        %v1004 = vmul.f32 %v1003, %v975
        %v1005 = vmul.f32 %v1003, %v976
        %v1006 = vmul.f32 %v1003, %v977
        %v1007 = vadd.f32 %v972, %v1004
        %v1008 = vadd.f32 %v973, %v1005
        %v1009 = vadd.f32 %v974, %v1006
        %s1010 = sld [smem:[#allocation8 + $0xa]]
        %v1011 = vstv %s1010
        %v1012 = vmul.f32 %v1011, %v975
        %v1013 = vmul.f32 %v1011, %v976
        %v1014 = vmul.f32 %v1011, %v977
        %1018 = vrot.lane.b32.xlu0 %v1012, 127
        %v1019 = vpop.permute.xlu0 %1018
        %1020 = vrot.lane.b32.xlu0 %v1013, 127
        %v1021 = vpop.permute.xlu0 %1020
        %1022 = vrot.lane.b32.xlu0 %v1014, 127
        %v1023 = vpop.permute.xlu0 %1022
        %v1027 = vadd.f32 %v983, %v1019
        %v1028 = vadd.f32 %v984, %v1021
        %v1029 = vadd.f32 %v985, %v1023
        %s1030 = sld [smem:[#allocation8 + $0x2e]]
        %v1031 = vstv %s1030
        %v1032 = vmul.f32 %v1031, %v975
        %v1033 = vmul.f32 %v1031, %v976
        %v1034 = vmul.f32 %v1031, %v977
        %1038 = vrot.lane.b32.xlu0 %v1032, 127
        %v1039 = vpop.permute.xlu0 %1038
        %1040 = vrot.lane.b32.xlu0 %v1033, 127
        %v1041 = vpop.permute.xlu0 %1040
        %1042 = vrot.lane.b32.xlu0 %v1034, 127
        %v1043 = vpop.permute.xlu0 %1042
        %v1047 = vadd.f32 %v991, %v1039
        %v1048 = vadd.f32 %v992, %v1041
        %v1049 = vadd.f32 %v993, %v1043
        %s1050 = sld [smem:[#allocation8 + $0x52]]
        %v1051 = vstv %s1050
        %v1052 = vmul.f32 %v1051, %v975
        %v1053 = vmul.f32 %v1051, %v976
        %v1054 = vmul.f32 %v1051, %v977
        %1058 = vrot.lane.b32.xlu0 %v1052, 127
        %v1059 = vpop.permute.xlu0 %1058
        %1060 = vrot.lane.b32.xlu0 %v1053, 127
        %v1061 = vpop.permute.xlu0 %1060
        %1062 = vrot.lane.b32.xlu0 %v1054, 127
        %v1063 = vpop.permute.xlu0 %1062
        %v1067 = vadd.f32 %v999, %v1059
        %v1068 = vadd.f32 %v1000, %v1061
        %v1069 = vadd.f32 %v1001, %v1063
        %s1070 = sld [smem:[#allocation8 + $0x76]]
        %v1071 = vstv %s1070
        %v1072 = vmul.f32 %v1071, %v975
        %v1073 = vmul.f32 %v1071, %v976
        %v1074 = vmul.f32 %v1071, %v977
        %1078 = vrot.lane.b32.xlu0 %v1072, 127
        %v1079 = vpop.permute.xlu0 %1078
        %1080 = vrot.lane.b32.xlu0 %v1073, 127
        %v1081 = vpop.permute.xlu0 %1080
        %1082 = vrot.lane.b32.xlu0 %v1074, 127
        %v1083 = vpop.permute.xlu0 %1082
        %v1087 = vadd.f32 %v1007, %v1079
        %v1088 = vadd.f32 %v1008, %v1081
        %v1089 = vadd.f32 %v1009, %v1083
        %s1090 = sld [smem:[#allocation8 + $0xb]]
        %v1091 = vstv %s1090
        %v1092 = vmul.f32 %v1091, %v975
        %v1093 = vmul.f32 %v1091, %v976
        %v1094 = vmul.f32 %v1091, %v977
        %1098 = vrot.lane.b32.xlu0 %v1092, 126
        %v1099 = vpop.permute.xlu0 %1098
        %1100 = vrot.lane.b32.xlu0 %v1093, 126
        %v1101 = vpop.permute.xlu0 %1100
        %1102 = vrot.lane.b32.xlu0 %v1094, 126
        %v1103 = vpop.permute.xlu0 %1102
        %v1107 = vadd.f32 %v1027, %v1099
        %v1108 = vadd.f32 %v1028, %v1101
        %v1109 = vadd.f32 %v1029, %v1103
        %s1110 = sld [smem:[#allocation8 + $0x2f]]
        %v1111 = vstv %s1110
        %v1112 = vmul.f32 %v1111, %v975
        %v1113 = vmul.f32 %v1111, %v976
        %v1114 = vmul.f32 %v1111, %v977
        %1118 = vrot.lane.b32.xlu0 %v1112, 126
        %v1119 = vpop.permute.xlu0 %1118
        %1120 = vrot.lane.b32.xlu0 %v1113, 126
        %v1121 = vpop.permute.xlu0 %1120
        %1122 = vrot.lane.b32.xlu0 %v1114, 126
        %v1123 = vpop.permute.xlu0 %1122
        %v1127 = vadd.f32 %v1047, %v1119
        %v1128 = vadd.f32 %v1048, %v1121
        %v1129 = vadd.f32 %v1049, %v1123
        %s1130 = sld [smem:[#allocation8 + $0x53]]
        %v1131 = vstv %s1130
        %v1132 = vmul.f32 %v1131, %v975
        %v1133 = vmul.f32 %v1131, %v976
        %v1134 = vmul.f32 %v1131, %v977
        %1138 = vrot.lane.b32.xlu0 %v1132, 126
        %v1139 = vpop.permute.xlu0 %1138
        %1140 = vrot.lane.b32.xlu0 %v1133, 126
        %v1141 = vpop.permute.xlu0 %1140
        %1142 = vrot.lane.b32.xlu0 %v1134, 126
        %v1143 = vpop.permute.xlu0 %1142
        %v1147 = vadd.f32 %v1067, %v1139
        %v1148 = vadd.f32 %v1068, %v1141
        %v1149 = vadd.f32 %v1069, %v1143
        %s1150 = sld [smem:[#allocation8 + $0x77]]
        %v1151 = vstv %s1150
        %v1152 = vmul.f32 %v1151, %v975
        %v1153 = vmul.f32 %v1151, %v976
        %v1154 = vmul.f32 %v1151, %v977
        %1158 = vrot.lane.b32.xlu0 %v1152, 126
        %v1159 = vpop.permute.xlu0 %1158
        %1160 = vrot.lane.b32.xlu0 %v1153, 126
        %v1161 = vpop.permute.xlu0 %1160
        %1162 = vrot.lane.b32.xlu0 %v1154, 126
        %v1163 = vpop.permute.xlu0 %1162
        %v1167 = vadd.f32 %v1087, %v1159
        %v1168 = vadd.f32 %v1088, %v1161
        %v1169 = vadd.f32 %v1089, %v1163
        %v1170 = vld [vmem:[%s337 + $0x1] sm:$0xff]
        %v1171 = vld [vmem:[%s337 + $0x9] sm:$0xff]
        %v1172 = vld [vmem:[%s337 + $0x11] sm:$0x3]
        %s1173 = sld [smem:[#allocation8 + $0xc]]
        %v1174 = vstv %s1173
        %v1175 = vmul.f32 %v1174, %v1170
        %v1176 = vmul.f32 %v1174, %v1171
        %v1177 = vmul.f32 %v1174, %v1172
        %v1178 = vadd.f32 %v1107, %v1175
        %v1179 = vadd.f32 %v1108, %v1176
        %v1180 = vadd.f32 %v1109, %v1177
        %s1181 = sld [smem:[#allocation8 + $0x30]]
        %v1182 = vstv %s1181
        %v1183 = vmul.f32 %v1182, %v1170
        %v1184 = vmul.f32 %v1182, %v1171
        %v1185 = vmul.f32 %v1182, %v1172
        %v1186 = vadd.f32 %v1127, %v1183
        %v1187 = vadd.f32 %v1128, %v1184
        %v1188 = vadd.f32 %v1129, %v1185
        %s1189 = sld [smem:[#allocation8 + $0x54]]
        %v1190 = vstv %s1189
        %v1191 = vmul.f32 %v1190, %v1170
        %v1192 = vmul.f32 %v1190, %v1171
        %v1193 = vmul.f32 %v1190, %v1172
        %v1194 = vadd.f32 %v1147, %v1191
        %v1195 = vadd.f32 %v1148, %v1192
        %v1196 = vadd.f32 %v1149, %v1193
        %s1197 = sld [smem:[#allocation8 + $0x78]]
        %v1198 = vstv %s1197
        %v1199 = vmul.f32 %v1198, %v1170
        %v1200 = vmul.f32 %v1198, %v1171
        %v1201 = vmul.f32 %v1198, %v1172
        %v1202 = vadd.f32 %v1167, %v1199
        %v1203 = vadd.f32 %v1168, %v1200
        %v1204 = vadd.f32 %v1169, %v1201
        %s1205 = sld [smem:[#allocation8 + $0xd]]
        %v1206 = vstv %s1205
        %v1207 = vmul.f32 %v1206, %v1170
        %v1208 = vmul.f32 %v1206, %v1171
        %v1209 = vmul.f32 %v1206, %v1172
        %1213 = vrot.lane.b32.xlu0 %v1207, 127
        %v1214 = vpop.permute.xlu0 %1213
        %1215 = vrot.lane.b32.xlu0 %v1208, 127
        %v1216 = vpop.permute.xlu0 %1215
        %1217 = vrot.lane.b32.xlu0 %v1209, 127
        %v1218 = vpop.permute.xlu0 %1217
        %v1222 = vadd.f32 %v1178, %v1214
        %v1223 = vadd.f32 %v1179, %v1216
        %v1224 = vadd.f32 %v1180, %v1218
        %s1225 = sld [smem:[#allocation8 + $0x31]]
        %v1226 = vstv %s1225
        %v1227 = vmul.f32 %v1226, %v1170
        %v1228 = vmul.f32 %v1226, %v1171
        %v1229 = vmul.f32 %v1226, %v1172
        %1233 = vrot.lane.b32.xlu0 %v1227, 127
        %v1234 = vpop.permute.xlu0 %1233
        %1235 = vrot.lane.b32.xlu0 %v1228, 127
        %v1236 = vpop.permute.xlu0 %1235
        %1237 = vrot.lane.b32.xlu0 %v1229, 127
        %v1238 = vpop.permute.xlu0 %1237
        %v1242 = vadd.f32 %v1186, %v1234
        %v1243 = vadd.f32 %v1187, %v1236
        %v1244 = vadd.f32 %v1188, %v1238
        %s1245 = sld [smem:[#allocation8 + $0x55]]
        %v1246 = vstv %s1245
        %v1247 = vmul.f32 %v1246, %v1170
        %v1248 = vmul.f32 %v1246, %v1171
        %v1249 = vmul.f32 %v1246, %v1172
        %1253 = vrot.lane.b32.xlu0 %v1247, 127
        %v1254 = vpop.permute.xlu0 %1253
        %1255 = vrot.lane.b32.xlu0 %v1248, 127
        %v1256 = vpop.permute.xlu0 %1255
        %1257 = vrot.lane.b32.xlu0 %v1249, 127
        %v1258 = vpop.permute.xlu0 %1257
        %v1262 = vadd.f32 %v1194, %v1254
        %v1263 = vadd.f32 %v1195, %v1256
        %v1264 = vadd.f32 %v1196, %v1258
        %s1265 = sld [smem:[#allocation8 + $0x79]]
        %v1266 = vstv %s1265
        %v1267 = vmul.f32 %v1266, %v1170
        %v1268 = vmul.f32 %v1266, %v1171
        %v1269 = vmul.f32 %v1266, %v1172
        %1273 = vrot.lane.b32.xlu0 %v1267, 127
        %v1274 = vpop.permute.xlu0 %1273
        %1275 = vrot.lane.b32.xlu0 %v1268, 127
        %v1276 = vpop.permute.xlu0 %1275
        %1277 = vrot.lane.b32.xlu0 %v1269, 127
        %v1278 = vpop.permute.xlu0 %1277
        %v1282 = vadd.f32 %v1202, %v1274
        %v1283 = vadd.f32 %v1203, %v1276
        %v1284 = vadd.f32 %v1204, %v1278
        %s1285 = sld [smem:[#allocation8 + $0xe]]
        %v1286 = vstv %s1285
        %v1287 = vmul.f32 %v1286, %v1170
        %v1288 = vmul.f32 %v1286, %v1171
        %v1289 = vmul.f32 %v1286, %v1172
        %1293 = vrot.lane.b32.xlu0 %v1287, 126
        %v1294 = vpop.permute.xlu0 %1293
        %1295 = vrot.lane.b32.xlu0 %v1288, 126
        %v1296 = vpop.permute.xlu0 %1295
        %1297 = vrot.lane.b32.xlu0 %v1289, 126
        %v1298 = vpop.permute.xlu0 %1297
        %v1302 = vadd.f32 %v1222, %v1294
        %v1303 = vadd.f32 %v1223, %v1296
        %v1304 = vadd.f32 %v1224, %v1298
        %s1305 = sld [smem:[#allocation8 + $0x32]]
        %v1306 = vstv %s1305
        %v1307 = vmul.f32 %v1306, %v1170
        %v1308 = vmul.f32 %v1306, %v1171
        %v1309 = vmul.f32 %v1306, %v1172
        %1313 = vrot.lane.b32.xlu0 %v1307, 126
        %v1314 = vpop.permute.xlu0 %1313
        %1315 = vrot.lane.b32.xlu0 %v1308, 126
        %v1316 = vpop.permute.xlu0 %1315
        %1317 = vrot.lane.b32.xlu0 %v1309, 126
        %v1318 = vpop.permute.xlu0 %1317
        %v1322 = vadd.f32 %v1242, %v1314
        %v1323 = vadd.f32 %v1243, %v1316
        %v1324 = vadd.f32 %v1244, %v1318
        %s1325 = sld [smem:[#allocation8 + $0x56]]
        %v1326 = vstv %s1325
        %v1327 = vmul.f32 %v1326, %v1170
        %v1328 = vmul.f32 %v1326, %v1171
        %v1329 = vmul.f32 %v1326, %v1172
        %1333 = vrot.lane.b32.xlu0 %v1327, 126
        %v1334 = vpop.permute.xlu0 %1333
        %1335 = vrot.lane.b32.xlu0 %v1328, 126
        %v1336 = vpop.permute.xlu0 %1335
        %1337 = vrot.lane.b32.xlu0 %v1329, 126
        %v1338 = vpop.permute.xlu0 %1337
        %v1342 = vadd.f32 %v1262, %v1334
        %v1343 = vadd.f32 %v1263, %v1336
        %v1344 = vadd.f32 %v1264, %v1338
        %s1345 = sld [smem:[#allocation8 + $0x7a]]
        %v1346 = vstv %s1345
        %v1347 = vmul.f32 %v1346, %v1170
        %v1348 = vmul.f32 %v1346, %v1171
        %v1349 = vmul.f32 %v1346, %v1172
        %1353 = vrot.lane.b32.xlu0 %v1347, 126
        %v1354 = vpop.permute.xlu0 %1353
        %1355 = vrot.lane.b32.xlu0 %v1348, 126
        %v1356 = vpop.permute.xlu0 %1355
        %1357 = vrot.lane.b32.xlu0 %v1349, 126
        %v1358 = vpop.permute.xlu0 %1357
        %v1362 = vadd.f32 %v1282, %v1354
        %v1363 = vadd.f32 %v1283, %v1356
        %v1364 = vadd.f32 %v1284, %v1358
        %v1365 = vld [vmem:[%s337 + $0x2] sm:$0xff]
        %v1366 = vld [vmem:[%s337 + $0xa] sm:$0xff]
        %v1367 = vld [vmem:[%s337 + $0x12] sm:$0x3]
        %s1368 = sld [smem:[#allocation8 + $0xf]]
        %v1369 = vstv %s1368
        %v1370 = vmul.f32 %v1369, %v1365
        %v1371 = vmul.f32 %v1369, %v1366
        %v1372 = vmul.f32 %v1369, %v1367
        %v1373 = vadd.f32 %v1302, %v1370
        %v1374 = vadd.f32 %v1303, %v1371
        %v1375 = vadd.f32 %v1304, %v1372
        %s1376 = sld [smem:[#allocation8 + $0x33]]
        %v1377 = vstv %s1376
        %v1378 = vmul.f32 %v1377, %v1365
        %v1379 = vmul.f32 %v1377, %v1366
        %v1380 = vmul.f32 %v1377, %v1367
        %v1381 = vadd.f32 %v1322, %v1378
        %v1382 = vadd.f32 %v1323, %v1379
        %v1383 = vadd.f32 %v1324, %v1380
        %s1384 = sld [smem:[#allocation8 + $0x57]]
        %v1385 = vstv %s1384
        %v1386 = vmul.f32 %v1385, %v1365
        %v1387 = vmul.f32 %v1385, %v1366
        %v1388 = vmul.f32 %v1385, %v1367
        %v1389 = vadd.f32 %v1342, %v1386
        %v1390 = vadd.f32 %v1343, %v1387
        %v1391 = vadd.f32 %v1344, %v1388
        %s1392 = sld [smem:[#allocation8 + $0x7b]]
        %v1393 = vstv %s1392
        %v1394 = vmul.f32 %v1393, %v1365
        %v1395 = vmul.f32 %v1393, %v1366
        %v1396 = vmul.f32 %v1393, %v1367
        %v1397 = vadd.f32 %v1362, %v1394
        %v1398 = vadd.f32 %v1363, %v1395
        %v1399 = vadd.f32 %v1364, %v1396
        %s1400 = sld [smem:[#allocation8 + $0x10]]
        %v1401 = vstv %s1400
        %v1402 = vmul.f32 %v1401, %v1365
        %v1403 = vmul.f32 %v1401, %v1366
        %v1404 = vmul.f32 %v1401, %v1367
        %1408 = vrot.lane.b32.xlu0 %v1402, 127
        %v1409 = vpop.permute.xlu0 %1408
        %1410 = vrot.lane.b32.xlu0 %v1403, 127
        %v1411 = vpop.permute.xlu0 %1410
        %1412 = vrot.lane.b32.xlu0 %v1404, 127
        %v1413 = vpop.permute.xlu0 %1412
        %v1417 = vadd.f32 %v1373, %v1409
        %v1418 = vadd.f32 %v1374, %v1411
        %v1419 = vadd.f32 %v1375, %v1413
        %s1420 = sld [smem:[#allocation8 + $0x34]]
        %v1421 = vstv %s1420
        %v1422 = vmul.f32 %v1421, %v1365
        %v1423 = vmul.f32 %v1421, %v1366
        %v1424 = vmul.f32 %v1421, %v1367
        %1428 = vrot.lane.b32.xlu0 %v1422, 127
        %v1429 = vpop.permute.xlu0 %1428
        %1430 = vrot.lane.b32.xlu0 %v1423, 127
        %v1431 = vpop.permute.xlu0 %1430
        %1432 = vrot.lane.b32.xlu0 %v1424, 127
        %v1433 = vpop.permute.xlu0 %1432
        %v1437 = vadd.f32 %v1381, %v1429
        %v1438 = vadd.f32 %v1382, %v1431
        %v1439 = vadd.f32 %v1383, %v1433
        %s1440 = sld [smem:[#allocation8 + $0x58]]
        %v1441 = vstv %s1440
        %v1442 = vmul.f32 %v1441, %v1365
        %v1443 = vmul.f32 %v1441, %v1366
        %v1444 = vmul.f32 %v1441, %v1367
        %1448 = vrot.lane.b32.xlu0 %v1442, 127
        %v1449 = vpop.permute.xlu0 %1448
        %1450 = vrot.lane.b32.xlu0 %v1443, 127
        %v1451 = vpop.permute.xlu0 %1450
        %1452 = vrot.lane.b32.xlu0 %v1444, 127
        %v1453 = vpop.permute.xlu0 %1452
        %v1457 = vadd.f32 %v1389, %v1449
        %v1458 = vadd.f32 %v1390, %v1451
        %v1459 = vadd.f32 %v1391, %v1453
        %s1460 = sld [smem:[#allocation8 + $0x7c]]
        %v1461 = vstv %s1460
        %v1462 = vmul.f32 %v1461, %v1365
        %v1463 = vmul.f32 %v1461, %v1366
        %v1464 = vmul.f32 %v1461, %v1367
        %1468 = vrot.lane.b32.xlu0 %v1462, 127
        %v1469 = vpop.permute.xlu0 %1468
        %1470 = vrot.lane.b32.xlu0 %v1463, 127
        %v1471 = vpop.permute.xlu0 %1470
        %1472 = vrot.lane.b32.xlu0 %v1464, 127
        %v1473 = vpop.permute.xlu0 %1472
        %v1477 = vadd.f32 %v1397, %v1469
        %v1478 = vadd.f32 %v1398, %v1471
        %v1479 = vadd.f32 %v1399, %v1473
        %s1480 = sld [smem:[#allocation8 + $0x11]]
        %v1481 = vstv %s1480
        %v1482 = vmul.f32 %v1481, %v1365
        %v1483 = vmul.f32 %v1481, %v1366
        %v1484 = vmul.f32 %v1481, %v1367
        %1488 = vrot.lane.b32.xlu0 %v1482, 126
        %v1489 = vpop.permute.xlu0 %1488
        %1490 = vrot.lane.b32.xlu0 %v1483, 126
        %v1491 = vpop.permute.xlu0 %1490
        %1492 = vrot.lane.b32.xlu0 %v1484, 126
        %v1493 = vpop.permute.xlu0 %1492
        %v1497 = vadd.f32 %v1417, %v1489
        %v1498 = vadd.f32 %v1418, %v1491
        %v1499 = vadd.f32 %v1419, %v1493
        %s1500 = sld [smem:[#allocation8 + $0x35]]
        %v1501 = vstv %s1500
        %v1502 = vmul.f32 %v1501, %v1365
        %v1503 = vmul.f32 %v1501, %v1366
        %v1504 = vmul.f32 %v1501, %v1367
        %1508 = vrot.lane.b32.xlu0 %v1502, 126
        %v1509 = vpop.permute.xlu0 %1508
        %1510 = vrot.lane.b32.xlu0 %v1503, 126
        %v1511 = vpop.permute.xlu0 %1510
        %1512 = vrot.lane.b32.xlu0 %v1504, 126
        %v1513 = vpop.permute.xlu0 %1512
        %v1517 = vadd.f32 %v1437, %v1509
        %v1518 = vadd.f32 %v1438, %v1511
        %v1519 = vadd.f32 %v1439, %v1513
        %s1520 = sld [smem:[#allocation8 + $0x59]]
        %v1521 = vstv %s1520
        %v1522 = vmul.f32 %v1521, %v1365
        %v1523 = vmul.f32 %v1521, %v1366
        %v1524 = vmul.f32 %v1521, %v1367
        %1528 = vrot.lane.b32.xlu0 %v1522, 126
        %v1529 = vpop.permute.xlu0 %1528
        %1530 = vrot.lane.b32.xlu0 %v1523, 126
        %v1531 = vpop.permute.xlu0 %1530
        %1532 = vrot.lane.b32.xlu0 %v1524, 126
        %v1533 = vpop.permute.xlu0 %1532
        %v1537 = vadd.f32 %v1457, %v1529
        %v1538 = vadd.f32 %v1458, %v1531
        %v1539 = vadd.f32 %v1459, %v1533
        %s1540 = sld [smem:[#allocation8 + $0x7d]]
        %v1541 = vstv %s1540
        %v1542 = vmul.f32 %v1541, %v1365
        %v1543 = vmul.f32 %v1541, %v1366
        %v1544 = vmul.f32 %v1541, %v1367
        %1548 = vrot.lane.b32.xlu0 %v1542, 126
        %v1549 = vpop.permute.xlu0 %1548
        %1550 = vrot.lane.b32.xlu0 %v1543, 126
        %v1551 = vpop.permute.xlu0 %1550
        %1552 = vrot.lane.b32.xlu0 %v1544, 126
        %v1553 = vpop.permute.xlu0 %1552
        %v1557 = vadd.f32 %v1477, %v1549
        %v1558 = vadd.f32 %v1478, %v1551
        %v1559 = vadd.f32 %v1479, %v1553
        %v1560 = vld [vmem:[%s351] sm:$0xff]
        %v1561 = vld [vmem:[%s351 + $0x8] sm:$0xff]
        %v1562 = vld [vmem:[%s351 + $0x10] sm:$0x3]
        %s1563 = sld [smem:[#allocation8 + $0x12]]
        %v1564 = vstv %s1563
        %v1565 = vmul.f32 %v1564, %v1560
        %v1566 = vmul.f32 %v1564, %v1561
        %v1567 = vmul.f32 %v1564, %v1562
        %v1568 = vadd.f32 %v1497, %v1565
        %v1569 = vadd.f32 %v1498, %v1566
        %v1570 = vadd.f32 %v1499, %v1567
        %s1571 = sld [smem:[#allocation8 + $0x36]]
        %v1572 = vstv %s1571
        %v1573 = vmul.f32 %v1572, %v1560
        %v1574 = vmul.f32 %v1572, %v1561
        %v1575 = vmul.f32 %v1572, %v1562
        %v1576 = vadd.f32 %v1517, %v1573
        %v1577 = vadd.f32 %v1518, %v1574
        %v1578 = vadd.f32 %v1519, %v1575
        %s1579 = sld [smem:[#allocation8 + $0x5a]]
        %v1580 = vstv %s1579
        %v1581 = vmul.f32 %v1580, %v1560
        %v1582 = vmul.f32 %v1580, %v1561
        %v1583 = vmul.f32 %v1580, %v1562
        %v1584 = vadd.f32 %v1537, %v1581
        %v1585 = vadd.f32 %v1538, %v1582
        %v1586 = vadd.f32 %v1539, %v1583
        %s1587 = sld [smem:[#allocation8 + $0x7e]]
        %v1588 = vstv %s1587
        %v1589 = vmul.f32 %v1588, %v1560
        %v1590 = vmul.f32 %v1588, %v1561
        %v1591 = vmul.f32 %v1588, %v1562
        %v1592 = vadd.f32 %v1557, %v1589
        %v1593 = vadd.f32 %v1558, %v1590
        %v1594 = vadd.f32 %v1559, %v1591
        %s1595 = sld [smem:[#allocation8 + $0x13]]
        %v1596 = vstv %s1595
        %v1597 = vmul.f32 %v1596, %v1560
        %v1598 = vmul.f32 %v1596, %v1561
        %v1599 = vmul.f32 %v1596, %v1562
        %1603 = vrot.lane.b32.xlu0 %v1597, 127
        %v1604 = vpop.permute.xlu0 %1603
        %1605 = vrot.lane.b32.xlu0 %v1598, 127
        %v1606 = vpop.permute.xlu0 %1605
        %1607 = vrot.lane.b32.xlu0 %v1599, 127
        %v1608 = vpop.permute.xlu0 %1607
        %v1612 = vadd.f32 %v1568, %v1604
        %v1613 = vadd.f32 %v1569, %v1606
        %v1614 = vadd.f32 %v1570, %v1608
        %s1615 = sld [smem:[#allocation8 + $0x37]]
        %v1616 = vstv %s1615
        %v1617 = vmul.f32 %v1616, %v1560
        %v1618 = vmul.f32 %v1616, %v1561
        %v1619 = vmul.f32 %v1616, %v1562
        %1623 = vrot.lane.b32.xlu0 %v1617, 127
        %v1624 = vpop.permute.xlu0 %1623
        %1625 = vrot.lane.b32.xlu0 %v1618, 127
        %v1626 = vpop.permute.xlu0 %1625
        %1627 = vrot.lane.b32.xlu0 %v1619, 127
        %v1628 = vpop.permute.xlu0 %1627
        %v1632 = vadd.f32 %v1576, %v1624
        %v1633 = vadd.f32 %v1577, %v1626
        %v1634 = vadd.f32 %v1578, %v1628
        %s1635 = sld [smem:[#allocation8 + $0x5b]]
        %v1636 = vstv %s1635
        %v1637 = vmul.f32 %v1636, %v1560
        %v1638 = vmul.f32 %v1636, %v1561
        %v1639 = vmul.f32 %v1636, %v1562
        %1643 = vrot.lane.b32.xlu0 %v1637, 127
        %v1644 = vpop.permute.xlu0 %1643
        %1645 = vrot.lane.b32.xlu0 %v1638, 127
        %v1646 = vpop.permute.xlu0 %1645
        %1647 = vrot.lane.b32.xlu0 %v1639, 127
        %v1648 = vpop.permute.xlu0 %1647
        %v1652 = vadd.f32 %v1584, %v1644
        %v1653 = vadd.f32 %v1585, %v1646
        %v1654 = vadd.f32 %v1586, %v1648
        %s1655 = sld [smem:[#allocation8 + $0x7f]]
        %v1656 = vstv %s1655
        %v1657 = vmul.f32 %v1656, %v1560
        %v1658 = vmul.f32 %v1656, %v1561
        %v1659 = vmul.f32 %v1656, %v1562
        %1663 = vrot.lane.b32.xlu0 %v1657, 127
        %v1664 = vpop.permute.xlu0 %1663
        %1665 = vrot.lane.b32.xlu0 %v1658, 127
        %v1666 = vpop.permute.xlu0 %1665
        %1667 = vrot.lane.b32.xlu0 %v1659, 127
        %v1668 = vpop.permute.xlu0 %1667
        %v1672 = vadd.f32 %v1592, %v1664
        %v1673 = vadd.f32 %v1593, %v1666
        %v1674 = vadd.f32 %v1594, %v1668
        %s1675 = sld [smem:[#allocation8 + $0x14]]
        %v1676 = vstv %s1675
        %v1677 = vmul.f32 %v1676, %v1560
        %v1678 = vmul.f32 %v1676, %v1561
        %v1679 = vmul.f32 %v1676, %v1562
        %1683 = vrot.lane.b32.xlu0 %v1677, 126
        %v1684 = vpop.permute.xlu0 %1683
        %1685 = vrot.lane.b32.xlu0 %v1678, 126
        %v1686 = vpop.permute.xlu0 %1685
        %1687 = vrot.lane.b32.xlu0 %v1679, 126
        %v1688 = vpop.permute.xlu0 %1687
        %v1692 = vadd.f32 %v1612, %v1684
        %v1693 = vadd.f32 %v1613, %v1686
        %v1694 = vadd.f32 %v1614, %v1688
        %s1695 = sld [smem:[#allocation8 + $0x38]]
        %v1696 = vstv %s1695
        %v1697 = vmul.f32 %v1696, %v1560
        %v1698 = vmul.f32 %v1696, %v1561
        %v1699 = vmul.f32 %v1696, %v1562
        %1703 = vrot.lane.b32.xlu0 %v1697, 126
        %v1704 = vpop.permute.xlu0 %1703
        %1705 = vrot.lane.b32.xlu0 %v1698, 126
        %v1706 = vpop.permute.xlu0 %1705
        %1707 = vrot.lane.b32.xlu0 %v1699, 126
        %v1708 = vpop.permute.xlu0 %1707
        %v1712 = vadd.f32 %v1632, %v1704
        %v1713 = vadd.f32 %v1633, %v1706
        %v1714 = vadd.f32 %v1634, %v1708
        %s1715 = sld [smem:[#allocation8 + $0x5c]]
        %v1716 = vstv %s1715
        %v1717 = vmul.f32 %v1716, %v1560
        %v1718 = vmul.f32 %v1716, %v1561
        %v1719 = vmul.f32 %v1716, %v1562
        %1723 = vrot.lane.b32.xlu0 %v1717, 126
        %v1724 = vpop.permute.xlu0 %1723
        %1725 = vrot.lane.b32.xlu0 %v1718, 126
        %v1726 = vpop.permute.xlu0 %1725
        %1727 = vrot.lane.b32.xlu0 %v1719, 126
        %v1728 = vpop.permute.xlu0 %1727
        %v1732 = vadd.f32 %v1652, %v1724
        %v1733 = vadd.f32 %v1653, %v1726
        %v1734 = vadd.f32 %v1654, %v1728
        %s1735 = sld [smem:[#allocation8 + $0x80]]
        %v1736 = vstv %s1735
        %v1737 = vmul.f32 %v1736, %v1560
        %v1738 = vmul.f32 %v1736, %v1561
        %v1739 = vmul.f32 %v1736, %v1562
        %1743 = vrot.lane.b32.xlu0 %v1737, 126
        %v1744 = vpop.permute.xlu0 %1743
        %1745 = vrot.lane.b32.xlu0 %v1738, 126
        %v1746 = vpop.permute.xlu0 %1745
        %1747 = vrot.lane.b32.xlu0 %v1739, 126
        %v1748 = vpop.permute.xlu0 %1747
        %v1752 = vadd.f32 %v1672, %v1744
        %v1753 = vadd.f32 %v1673, %v1746
        %v1754 = vadd.f32 %v1674, %v1748
        %v1755 = vld [vmem:[%s351 + $0x1] sm:$0xff]
        %v1756 = vld [vmem:[%s351 + $0x9] sm:$0xff]
        %v1757 = vld [vmem:[%s351 + $0x11] sm:$0x3]
        %s1758 = sld [smem:[#allocation8 + $0x15]]
        %v1759 = vstv %s1758
        %v1760 = vmul.f32 %v1759, %v1755
        %v1761 = vmul.f32 %v1759, %v1756
        %v1762 = vmul.f32 %v1759, %v1757
        %v1763 = vadd.f32 %v1692, %v1760
        %v1764 = vadd.f32 %v1693, %v1761
        %v1765 = vadd.f32 %v1694, %v1762
        %s1766 = sld [smem:[#allocation8 + $0x39]]
        %v1767 = vstv %s1766
        %v1768 = vmul.f32 %v1767, %v1755
        %v1769 = vmul.f32 %v1767, %v1756
        %v1770 = vmul.f32 %v1767, %v1757
        %v1771 = vadd.f32 %v1712, %v1768
        %v1772 = vadd.f32 %v1713, %v1769
        %v1773 = vadd.f32 %v1714, %v1770
        %s1774 = sld [smem:[#allocation8 + $0x5d]]
        %v1775 = vstv %s1774
        %v1776 = vmul.f32 %v1775, %v1755
        %v1777 = vmul.f32 %v1775, %v1756
        %v1778 = vmul.f32 %v1775, %v1757
        %v1779 = vadd.f32 %v1732, %v1776
        %v1780 = vadd.f32 %v1733, %v1777
        %v1781 = vadd.f32 %v1734, %v1778
        %s1782 = sld [smem:[#allocation8 + $0x81]]
        %v1783 = vstv %s1782
        %v1784 = vmul.f32 %v1783, %v1755
        %v1785 = vmul.f32 %v1783, %v1756
        %v1786 = vmul.f32 %v1783, %v1757
        %v1787 = vadd.f32 %v1752, %v1784
        %v1788 = vadd.f32 %v1753, %v1785
        %v1789 = vadd.f32 %v1754, %v1786
        %s1790 = sld [smem:[#allocation8 + $0x16]]
        %v1791 = vstv %s1790
        %v1792 = vmul.f32 %v1791, %v1755
        %v1793 = vmul.f32 %v1791, %v1756
        %v1794 = vmul.f32 %v1791, %v1757
        %1798 = vrot.lane.b32.xlu0 %v1792, 127
        %v1799 = vpop.permute.xlu0 %1798
        %1800 = vrot.lane.b32.xlu0 %v1793, 127
        %v1801 = vpop.permute.xlu0 %1800
        %1802 = vrot.lane.b32.xlu0 %v1794, 127
        %v1803 = vpop.permute.xlu0 %1802
        %v1807 = vadd.f32 %v1763, %v1799
        %v1808 = vadd.f32 %v1764, %v1801
        %v1809 = vadd.f32 %v1765, %v1803
        %s1810 = sld [smem:[#allocation8 + $0x3a]]
        %v1811 = vstv %s1810
        %v1812 = vmul.f32 %v1811, %v1755
        %v1813 = vmul.f32 %v1811, %v1756
        %v1814 = vmul.f32 %v1811, %v1757
        %1818 = vrot.lane.b32.xlu0 %v1812, 127
        %v1819 = vpop.permute.xlu0 %1818
        %1820 = vrot.lane.b32.xlu0 %v1813, 127
        %v1821 = vpop.permute.xlu0 %1820
        %1822 = vrot.lane.b32.xlu0 %v1814, 127
        %v1823 = vpop.permute.xlu0 %1822
        %v1827 = vadd.f32 %v1771, %v1819
        %v1828 = vadd.f32 %v1772, %v1821
        %v1829 = vadd.f32 %v1773, %v1823
        %s1830 = sld [smem:[#allocation8 + $0x5e]]
        %v1831 = vstv %s1830
        %v1832 = vmul.f32 %v1831, %v1755
        %v1833 = vmul.f32 %v1831, %v1756
        %v1834 = vmul.f32 %v1831, %v1757
        %1838 = vrot.lane.b32.xlu0 %v1832, 127
        %v1839 = vpop.permute.xlu0 %1838
        %1840 = vrot.lane.b32.xlu0 %v1833, 127
        %v1841 = vpop.permute.xlu0 %1840
        %1842 = vrot.lane.b32.xlu0 %v1834, 127
        %v1843 = vpop.permute.xlu0 %1842
        %v1847 = vadd.f32 %v1779, %v1839
        %v1848 = vadd.f32 %v1780, %v1841
        %v1849 = vadd.f32 %v1781, %v1843
        %s1850 = sld [smem:[#allocation8 + $0x82]]
        %v1851 = vstv %s1850
        %v1852 = vmul.f32 %v1851, %v1755
        %v1853 = vmul.f32 %v1851, %v1756
        %v1854 = vmul.f32 %v1851, %v1757
        %1858 = vrot.lane.b32.xlu0 %v1852, 127
        %v1859 = vpop.permute.xlu0 %1858
        %1860 = vrot.lane.b32.xlu0 %v1853, 127
        %v1861 = vpop.permute.xlu0 %1860
        %1862 = vrot.lane.b32.xlu0 %v1854, 127
        %v1863 = vpop.permute.xlu0 %1862
        %v1867 = vadd.f32 %v1787, %v1859
        %v1868 = vadd.f32 %v1788, %v1861
        %v1869 = vadd.f32 %v1789, %v1863
        %s1870 = sld [smem:[#allocation8 + $0x17]]
        %v1871 = vstv %s1870
        %v1872 = vmul.f32 %v1871, %v1755
        %v1873 = vmul.f32 %v1871, %v1756
        %v1874 = vmul.f32 %v1871, %v1757
        %1878 = vrot.lane.b32.xlu0 %v1872, 126
        %v1879 = vpop.permute.xlu0 %1878
        %1880 = vrot.lane.b32.xlu0 %v1873, 126
        %v1881 = vpop.permute.xlu0 %1880
        %1882 = vrot.lane.b32.xlu0 %v1874, 126
        %v1883 = vpop.permute.xlu0 %1882
        %v1887 = vadd.f32 %v1807, %v1879
        %v1888 = vadd.f32 %v1808, %v1881
        %v1889 = vadd.f32 %v1809, %v1883
        %s1890 = sld [smem:[#allocation8 + $0x3b]]
        %v1891 = vstv %s1890
        %v1892 = vmul.f32 %v1891, %v1755
        %v1893 = vmul.f32 %v1891, %v1756
        %v1894 = vmul.f32 %v1891, %v1757
        %1898 = vrot.lane.b32.xlu0 %v1892, 126
        %v1899 = vpop.permute.xlu0 %1898
        %1900 = vrot.lane.b32.xlu0 %v1893, 126
        %v1901 = vpop.permute.xlu0 %1900
        %1902 = vrot.lane.b32.xlu0 %v1894, 126
        %v1903 = vpop.permute.xlu0 %1902
        %v1907 = vadd.f32 %v1827, %v1899
        %v1908 = vadd.f32 %v1828, %v1901
        %v1909 = vadd.f32 %v1829, %v1903
        %s1910 = sld [smem:[#allocation8 + $0x5f]]
        %v1911 = vstv %s1910
        %v1912 = vmul.f32 %v1911, %v1755
        %v1913 = vmul.f32 %v1911, %v1756
        %v1914 = vmul.f32 %v1911, %v1757
        %1918 = vrot.lane.b32.xlu0 %v1912, 126
        %v1919 = vpop.permute.xlu0 %1918
        %1920 = vrot.lane.b32.xlu0 %v1913, 126
        %v1921 = vpop.permute.xlu0 %1920
        %1922 = vrot.lane.b32.xlu0 %v1914, 126
        %v1923 = vpop.permute.xlu0 %1922
        %v1927 = vadd.f32 %v1847, %v1919
        %v1928 = vadd.f32 %v1848, %v1921
        %v1929 = vadd.f32 %v1849, %v1923
        %s1930 = sld [smem:[#allocation8 + $0x83]]
        %v1931 = vstv %s1930
        %v1932 = vmul.f32 %v1931, %v1755
        %v1933 = vmul.f32 %v1931, %v1756
        %v1934 = vmul.f32 %v1931, %v1757
        %1938 = vrot.lane.b32.xlu0 %v1932, 126
        %v1939 = vpop.permute.xlu0 %1938
        %1940 = vrot.lane.b32.xlu0 %v1933, 126
        %v1941 = vpop.permute.xlu0 %1940
        %1942 = vrot.lane.b32.xlu0 %v1934, 126
        %v1943 = vpop.permute.xlu0 %1942
        %v1947 = vadd.f32 %v1867, %v1939
        %v1948 = vadd.f32 %v1868, %v1941
        %v1949 = vadd.f32 %v1869, %v1943
        %v1950 = vld [vmem:[%s351 + $0x2] sm:$0xff]
        %v1951 = vld [vmem:[%s351 + $0xa] sm:$0xff]
        %v1952 = vld [vmem:[%s351 + $0x12] sm:$0x3]
        %s1953 = sld [smem:[#allocation8 + $0x18]]
        %v1954 = vstv %s1953
        %v1955 = vmul.f32 %v1954, %v1950
        %v1956 = vmul.f32 %v1954, %v1951
        %v1957 = vmul.f32 %v1954, %v1952
        %v1958 = vadd.f32 %v1887, %v1955
        %v1959 = vadd.f32 %v1888, %v1956
        %v1960 = vadd.f32 %v1889, %v1957
        %s1961 = sld [smem:[#allocation8 + $0x3c]]
        %v1962 = vstv %s1961
        %v1963 = vmul.f32 %v1962, %v1950
        %v1964 = vmul.f32 %v1962, %v1951
        %v1965 = vmul.f32 %v1962, %v1952
        %v1966 = vadd.f32 %v1907, %v1963
        %v1967 = vadd.f32 %v1908, %v1964
        %v1968 = vadd.f32 %v1909, %v1965
        %s1969 = sld [smem:[#allocation8 + $0x60]]
        %v1970 = vstv %s1969
        %v1971 = vmul.f32 %v1970, %v1950
        %v1972 = vmul.f32 %v1970, %v1951
        %v1973 = vmul.f32 %v1970, %v1952
        %v1974 = vadd.f32 %v1927, %v1971
        %v1975 = vadd.f32 %v1928, %v1972
        %v1976 = vadd.f32 %v1929, %v1973
        %s1977 = sld [smem:[#allocation8 + $0x84]]
        %v1978 = vstv %s1977
        %v1979 = vmul.f32 %v1978, %v1950
        %v1980 = vmul.f32 %v1978, %v1951
        %v1981 = vmul.f32 %v1978, %v1952
        %v1982 = vadd.f32 %v1947, %v1979
        %v1983 = vadd.f32 %v1948, %v1980
        %v1984 = vadd.f32 %v1949, %v1981
        %s1985 = sld [smem:[#allocation8 + $0x19]]
        %v1986 = vstv %s1985
        %v1987 = vmul.f32 %v1986, %v1950
        %v1988 = vmul.f32 %v1986, %v1951
        %v1989 = vmul.f32 %v1986, %v1952
        %1993 = vrot.lane.b32.xlu0 %v1987, 127
        %v1994 = vpop.permute.xlu0 %1993
        %1995 = vrot.lane.b32.xlu0 %v1988, 127
        %v1996 = vpop.permute.xlu0 %1995
        %1997 = vrot.lane.b32.xlu0 %v1989, 127
        %v1998 = vpop.permute.xlu0 %1997
        %v2002 = vadd.f32 %v1958, %v1994
        %v2003 = vadd.f32 %v1959, %v1996
        %v2004 = vadd.f32 %v1960, %v1998
        %s2005 = sld [smem:[#allocation8 + $0x3d]]
        %v2006 = vstv %s2005
        %v2007 = vmul.f32 %v2006, %v1950
        %v2008 = vmul.f32 %v2006, %v1951
        %v2009 = vmul.f32 %v2006, %v1952
        %2013 = vrot.lane.b32.xlu0 %v2007, 127
        %v2014 = vpop.permute.xlu0 %2013
        %2015 = vrot.lane.b32.xlu0 %v2008, 127
        %v2016 = vpop.permute.xlu0 %2015
        %2017 = vrot.lane.b32.xlu0 %v2009, 127
        %v2018 = vpop.permute.xlu0 %2017
        %v2022 = vadd.f32 %v1966, %v2014
        %v2023 = vadd.f32 %v1967, %v2016
        %v2024 = vadd.f32 %v1968, %v2018
        %s2025 = sld [smem:[#allocation8 + $0x61]]
        %v2026 = vstv %s2025
        %v2027 = vmul.f32 %v2026, %v1950
        %v2028 = vmul.f32 %v2026, %v1951
        %v2029 = vmul.f32 %v2026, %v1952
        %2033 = vrot.lane.b32.xlu0 %v2027, 127
        %v2034 = vpop.permute.xlu0 %2033
        %2035 = vrot.lane.b32.xlu0 %v2028, 127
        %v2036 = vpop.permute.xlu0 %2035
        %2037 = vrot.lane.b32.xlu0 %v2029, 127
        %v2038 = vpop.permute.xlu0 %2037
        %v2042 = vadd.f32 %v1974, %v2034
        %v2043 = vadd.f32 %v1975, %v2036
        %v2044 = vadd.f32 %v1976, %v2038
        %s2045 = sld [smem:[#allocation8 + $0x85]]
        %v2046 = vstv %s2045
        %v2047 = vmul.f32 %v2046, %v1950
        %v2048 = vmul.f32 %v2046, %v1951
        %v2049 = vmul.f32 %v2046, %v1952
        %2053 = vrot.lane.b32.xlu0 %v2047, 127
        %v2054 = vpop.permute.xlu0 %2053
        %2055 = vrot.lane.b32.xlu0 %v2048, 127
        %v2056 = vpop.permute.xlu0 %2055
        %2057 = vrot.lane.b32.xlu0 %v2049, 127
        %v2058 = vpop.permute.xlu0 %2057
        %v2062 = vadd.f32 %v1982, %v2054
        %v2063 = vadd.f32 %v1983, %v2056
        %v2064 = vadd.f32 %v1984, %v2058
        %s2065 = sld [smem:[#allocation8 + $0x1a]]
        %v2066 = vstv %s2065
        %v2067 = vmul.f32 %v2066, %v1950
        %v2068 = vmul.f32 %v2066, %v1951
        %v2069 = vmul.f32 %v2066, %v1952
        %2073 = vrot.lane.b32.xlu0 %v2067, 126
        %v2074 = vpop.permute.xlu0 %2073
        %2075 = vrot.lane.b32.xlu0 %v2068, 126
        %v2076 = vpop.permute.xlu0 %2075
        %2077 = vrot.lane.b32.xlu0 %v2069, 126
        %v2078 = vpop.permute.xlu0 %2077
        %v2082 = vadd.f32 %v2002, %v2074
        %v2083 = vadd.f32 %v2003, %v2076
        %v2084 = vadd.f32 %v2004, %v2078
        %s2085 = sld [smem:[#allocation8 + $0x3e]]
        %v2086 = vstv %s2085
        %v2087 = vmul.f32 %v2086, %v1950
        %v2088 = vmul.f32 %v2086, %v1951
        %v2089 = vmul.f32 %v2086, %v1952
        %2093 = vrot.lane.b32.xlu0 %v2087, 126
        %v2094 = vpop.permute.xlu0 %2093
        %2095 = vrot.lane.b32.xlu0 %v2088, 126
        %v2096 = vpop.permute.xlu0 %2095
        %2097 = vrot.lane.b32.xlu0 %v2089, 126
        %v2098 = vpop.permute.xlu0 %2097
        %v2102 = vadd.f32 %v2022, %v2094
        %v2103 = vadd.f32 %v2023, %v2096
        %v2104 = vadd.f32 %v2024, %v2098
        %s2105 = sld [smem:[#allocation8 + $0x62]]
        %v2106 = vstv %s2105
        %v2107 = vmul.f32 %v2106, %v1950
        %v2108 = vmul.f32 %v2106, %v1951
        %v2109 = vmul.f32 %v2106, %v1952
        %2113 = vrot.lane.b32.xlu0 %v2107, 126
        %v2114 = vpop.permute.xlu0 %2113
        %2115 = vrot.lane.b32.xlu0 %v2108, 126
        %v2116 = vpop.permute.xlu0 %2115
        %2117 = vrot.lane.b32.xlu0 %v2109, 126
        %v2118 = vpop.permute.xlu0 %2117
        %v2122 = vadd.f32 %v2042, %v2114
        %v2123 = vadd.f32 %v2043, %v2116
        %v2124 = vadd.f32 %v2044, %v2118
        %s2125 = sld [smem:[#allocation8 + $0x86]]
        %v2126 = vstv %s2125
        %v2127 = vmul.f32 %v2126, %v1950
        %v2128 = vmul.f32 %v2126, %v1951
        %v2129 = vmul.f32 %v2126, %v1952
        %2133 = vrot.lane.b32.xlu0 %v2127, 126
        %v2134 = vpop.permute.xlu0 %2133
        %2135 = vrot.lane.b32.xlu0 %v2128, 126
        %v2136 = vpop.permute.xlu0 %2135
        %2137 = vrot.lane.b32.xlu0 %v2129, 126
        %v2138 = vpop.permute.xlu0 %2137
        %v2142 = vadd.f32 %v2062, %v2134
        %v2143 = vadd.f32 %v2063, %v2136
        %v2144 = vadd.f32 %v2064, %v2138
        %v2145 = vld [vmem:[%s365] sm:$0xff]
        %v2146 = vld [vmem:[%s365 + $0x8] sm:$0xff]
        %v2147 = vld [vmem:[%s365 + $0x10] sm:$0x3]
        %s2148 = sld [smem:[#allocation8 + $0x1b]]
        %v2149 = vstv %s2148
        %v2150 = vmul.f32 %v2149, %v2145
        %v2151 = vmul.f32 %v2149, %v2146
        %v2152 = vmul.f32 %v2149, %v2147
        %v2153 = vadd.f32 %v2082, %v2150
        %v2154 = vadd.f32 %v2083, %v2151
        %v2155 = vadd.f32 %v2084, %v2152
        %s2156 = sld [smem:[#allocation8 + $0x3f]]
        %v2157 = vstv %s2156
        %v2158 = vmul.f32 %v2157, %v2145
        %v2159 = vmul.f32 %v2157, %v2146
        %v2160 = vmul.f32 %v2157, %v2147
        %v2161 = vadd.f32 %v2102, %v2158
        %v2162 = vadd.f32 %v2103, %v2159
        %v2163 = vadd.f32 %v2104, %v2160
        %s2164 = sld [smem:[#allocation8 + $0x63]]
        %v2165 = vstv %s2164
        %v2166 = vmul.f32 %v2165, %v2145
        %v2167 = vmul.f32 %v2165, %v2146
        %v2168 = vmul.f32 %v2165, %v2147
        %v2169 = vadd.f32 %v2122, %v2166
        %v2170 = vadd.f32 %v2123, %v2167
        %v2171 = vadd.f32 %v2124, %v2168
        %s2172 = sld [smem:[#allocation8 + $0x87]]
        %v2173 = vstv %s2172
        %v2174 = vmul.f32 %v2173, %v2145
        %v2175 = vmul.f32 %v2173, %v2146
        %v2176 = vmul.f32 %v2173, %v2147
        %v2177 = vadd.f32 %v2142, %v2174
        %v2178 = vadd.f32 %v2143, %v2175
        %v2179 = vadd.f32 %v2144, %v2176
        %s2180 = sld [smem:[#allocation8 + $0x1c]]
        %v2181 = vstv %s2180
        %v2182 = vmul.f32 %v2181, %v2145
        %v2183 = vmul.f32 %v2181, %v2146
        %v2184 = vmul.f32 %v2181, %v2147
        %2188 = vrot.lane.b32.xlu0 %v2182, 127
        %v2189 = vpop.permute.xlu0 %2188
        %2190 = vrot.lane.b32.xlu0 %v2183, 127
        %v2191 = vpop.permute.xlu0 %2190
        %2192 = vrot.lane.b32.xlu0 %v2184, 127
        %v2193 = vpop.permute.xlu0 %2192
        %v2197 = vadd.f32 %v2153, %v2189
        %v2198 = vadd.f32 %v2154, %v2191
        %v2199 = vadd.f32 %v2155, %v2193
        %s2200 = sld [smem:[#allocation8 + $0x40]]
        %v2201 = vstv %s2200
        %v2202 = vmul.f32 %v2201, %v2145
        %v2203 = vmul.f32 %v2201, %v2146
        %v2204 = vmul.f32 %v2201, %v2147
        %2208 = vrot.lane.b32.xlu0 %v2202, 127
        %v2209 = vpop.permute.xlu0 %2208
        %2210 = vrot.lane.b32.xlu0 %v2203, 127
        %v2211 = vpop.permute.xlu0 %2210
        %2212 = vrot.lane.b32.xlu0 %v2204, 127
        %v2213 = vpop.permute.xlu0 %2212
        %v2217 = vadd.f32 %v2161, %v2209
        %v2218 = vadd.f32 %v2162, %v2211
        %v2219 = vadd.f32 %v2163, %v2213
        %s2220 = sld [smem:[#allocation8 + $0x64]]
        %v2221 = vstv %s2220
        %v2222 = vmul.f32 %v2221, %v2145
        %v2223 = vmul.f32 %v2221, %v2146
        %v2224 = vmul.f32 %v2221, %v2147
        %2228 = vrot.lane.b32.xlu0 %v2222, 127
        %v2229 = vpop.permute.xlu0 %2228
        %2230 = vrot.lane.b32.xlu0 %v2223, 127
        %v2231 = vpop.permute.xlu0 %2230
        %2232 = vrot.lane.b32.xlu0 %v2224, 127
        %v2233 = vpop.permute.xlu0 %2232
        %v2237 = vadd.f32 %v2169, %v2229
        %v2238 = vadd.f32 %v2170, %v2231
        %v2239 = vadd.f32 %v2171, %v2233
        %s2240 = sld [smem:[#allocation8 + $0x88]]
        %v2241 = vstv %s2240
        %v2242 = vmul.f32 %v2241, %v2145
        %v2243 = vmul.f32 %v2241, %v2146
        %v2244 = vmul.f32 %v2241, %v2147
        %2248 = vrot.lane.b32.xlu0 %v2242, 127
        %v2249 = vpop.permute.xlu0 %2248
        %2250 = vrot.lane.b32.xlu0 %v2243, 127
        %v2251 = vpop.permute.xlu0 %2250
        %2252 = vrot.lane.b32.xlu0 %v2244, 127
        %v2253 = vpop.permute.xlu0 %2252
        %v2257 = vadd.f32 %v2177, %v2249
        %v2258 = vadd.f32 %v2178, %v2251
        %v2259 = vadd.f32 %v2179, %v2253
        %s2260 = sld [smem:[#allocation8 + $0x1d]]
        %v2261 = vstv %s2260
        %v2262 = vmul.f32 %v2261, %v2145
        %v2263 = vmul.f32 %v2261, %v2146
        %v2264 = vmul.f32 %v2261, %v2147
        %2268 = vrot.lane.b32.xlu0 %v2262, 126
        %v2269 = vpop.permute.xlu0 %2268
        %2270 = vrot.lane.b32.xlu0 %v2263, 126
        %v2271 = vpop.permute.xlu0 %2270
        %2272 = vrot.lane.b32.xlu0 %v2264, 126
        %v2273 = vpop.permute.xlu0 %2272
        %v2277 = vadd.f32 %v2197, %v2269
        %v2278 = vadd.f32 %v2198, %v2271
        %v2279 = vadd.f32 %v2199, %v2273
        %s2280 = sld [smem:[#allocation8 + $0x41]]
        %v2281 = vstv %s2280
        %v2282 = vmul.f32 %v2281, %v2145
        %v2283 = vmul.f32 %v2281, %v2146
        %v2284 = vmul.f32 %v2281, %v2147
        %2288 = vrot.lane.b32.xlu0 %v2282, 126
        %v2289 = vpop.permute.xlu0 %2288
        %2290 = vrot.lane.b32.xlu0 %v2283, 126
        %v2291 = vpop.permute.xlu0 %2290
        %2292 = vrot.lane.b32.xlu0 %v2284, 126
        %v2293 = vpop.permute.xlu0 %2292
        %v2297 = vadd.f32 %v2217, %v2289
        %v2298 = vadd.f32 %v2218, %v2291
        %v2299 = vadd.f32 %v2219, %v2293
        %s2300 = sld [smem:[#allocation8 + $0x65]]
        %v2301 = vstv %s2300
        %v2302 = vmul.f32 %v2301, %v2145
        %v2303 = vmul.f32 %v2301, %v2146
        %v2304 = vmul.f32 %v2301, %v2147
        %2308 = vrot.lane.b32.xlu0 %v2302, 126
        %v2309 = vpop.permute.xlu0 %2308
        %2310 = vrot.lane.b32.xlu0 %v2303, 126
        %v2311 = vpop.permute.xlu0 %2310
        %2312 = vrot.lane.b32.xlu0 %v2304, 126
        %v2313 = vpop.permute.xlu0 %2312
        %v2317 = vadd.f32 %v2237, %v2309
        %v2318 = vadd.f32 %v2238, %v2311
        %v2319 = vadd.f32 %v2239, %v2313
        %s2320 = sld [smem:[#allocation8 + $0x89]]
        %v2321 = vstv %s2320
        %v2322 = vmul.f32 %v2321, %v2145
        %v2323 = vmul.f32 %v2321, %v2146
        %v2324 = vmul.f32 %v2321, %v2147
        %2328 = vrot.lane.b32.xlu0 %v2322, 126
        %v2329 = vpop.permute.xlu0 %2328
        %2330 = vrot.lane.b32.xlu0 %v2323, 126
        %v2331 = vpop.permute.xlu0 %2330
        %2332 = vrot.lane.b32.xlu0 %v2324, 126
        %v2333 = vpop.permute.xlu0 %2332
        %v2337 = vadd.f32 %v2257, %v2329
        %v2338 = vadd.f32 %v2258, %v2331
        %v2339 = vadd.f32 %v2259, %v2333
        %v2340 = vld [vmem:[%s365 + $0x1] sm:$0xff]
        %v2341 = vld [vmem:[%s365 + $0x9] sm:$0xff]
        %v2342 = vld [vmem:[%s365 + $0x11] sm:$0x3]
        %s2343 = sld [smem:[#allocation8 + $0x1e]]
        %v2344 = vstv %s2343
        %v2345 = vmul.f32 %v2344, %v2340
        %v2346 = vmul.f32 %v2344, %v2341
        %v2347 = vmul.f32 %v2344, %v2342
        %v2348 = vadd.f32 %v2277, %v2345
        %v2349 = vadd.f32 %v2278, %v2346
        %v2350 = vadd.f32 %v2279, %v2347
        %s2351 = sld [smem:[#allocation8 + $0x42]]
        %v2352 = vstv %s2351
        %v2353 = vmul.f32 %v2352, %v2340
        %v2354 = vmul.f32 %v2352, %v2341
        %v2355 = vmul.f32 %v2352, %v2342
        %v2356 = vadd.f32 %v2297, %v2353
        %v2357 = vadd.f32 %v2298, %v2354
        %v2358 = vadd.f32 %v2299, %v2355
        %s2359 = sld [smem:[#allocation8 + $0x66]]
        %v2360 = vstv %s2359
        %v2361 = vmul.f32 %v2360, %v2340
        %v2362 = vmul.f32 %v2360, %v2341
        %v2363 = vmul.f32 %v2360, %v2342
        %v2364 = vadd.f32 %v2317, %v2361
        %v2365 = vadd.f32 %v2318, %v2362
        %v2366 = vadd.f32 %v2319, %v2363
        %s2367 = sld [smem:[#allocation8 + $0x8a]]
        %v2368 = vstv %s2367
        %v2369 = vmul.f32 %v2368, %v2340
        %v2370 = vmul.f32 %v2368, %v2341
        %v2371 = vmul.f32 %v2368, %v2342
        %v2372 = vadd.f32 %v2337, %v2369
        %v2373 = vadd.f32 %v2338, %v2370
        %v2374 = vadd.f32 %v2339, %v2371
        %s2375 = sld [smem:[#allocation8 + $0x1f]]
        %v2376 = vstv %s2375
        %v2377 = vmul.f32 %v2376, %v2340
        %v2378 = vmul.f32 %v2376, %v2341
        %v2379 = vmul.f32 %v2376, %v2342
        %2383 = vrot.lane.b32.xlu0 %v2377, 127
        %v2384 = vpop.permute.xlu0 %2383
        %2385 = vrot.lane.b32.xlu0 %v2378, 127
        %v2386 = vpop.permute.xlu0 %2385
        %2387 = vrot.lane.b32.xlu0 %v2379, 127
        %v2388 = vpop.permute.xlu0 %2387
        %v2392 = vadd.f32 %v2348, %v2384
        %v2393 = vadd.f32 %v2349, %v2386
        %v2394 = vadd.f32 %v2350, %v2388
        %s2395 = sld [smem:[#allocation8 + $0x43]]
        %v2396 = vstv %s2395
        %v2397 = vmul.f32 %v2396, %v2340
        %v2398 = vmul.f32 %v2396, %v2341
        %v2399 = vmul.f32 %v2396, %v2342
        %2403 = vrot.lane.b32.xlu0 %v2397, 127
        %v2404 = vpop.permute.xlu0 %2403
        %2405 = vrot.lane.b32.xlu0 %v2398, 127
        %v2406 = vpop.permute.xlu0 %2405
        %2407 = vrot.lane.b32.xlu0 %v2399, 127
        %v2408 = vpop.permute.xlu0 %2407
        %v2412 = vadd.f32 %v2356, %v2404
        %v2413 = vadd.f32 %v2357, %v2406
        %v2414 = vadd.f32 %v2358, %v2408
        %s2415 = sld [smem:[#allocation8 + $0x67]]
        %v2416 = vstv %s2415
        %v2417 = vmul.f32 %v2416, %v2340
        %v2418 = vmul.f32 %v2416, %v2341
        %v2419 = vmul.f32 %v2416, %v2342
        %2423 = vrot.lane.b32.xlu0 %v2417, 127
        %v2424 = vpop.permute.xlu0 %2423
        %2425 = vrot.lane.b32.xlu0 %v2418, 127
        %v2426 = vpop.permute.xlu0 %2425
        %2427 = vrot.lane.b32.xlu0 %v2419, 127
        %v2428 = vpop.permute.xlu0 %2427
        %v2432 = vadd.f32 %v2364, %v2424
        %v2433 = vadd.f32 %v2365, %v2426
        %v2434 = vadd.f32 %v2366, %v2428
        %s2435 = sld [smem:[#allocation8 + $0x8b]]
        %v2436 = vstv %s2435
        %v2437 = vmul.f32 %v2436, %v2340
        %v2438 = vmul.f32 %v2436, %v2341
        %v2439 = vmul.f32 %v2436, %v2342
        %2443 = vrot.lane.b32.xlu0 %v2437, 127
        %v2444 = vpop.permute.xlu0 %2443
        %2445 = vrot.lane.b32.xlu0 %v2438, 127
        %v2446 = vpop.permute.xlu0 %2445
        %2447 = vrot.lane.b32.xlu0 %v2439, 127
        %v2448 = vpop.permute.xlu0 %2447
        %v2452 = vadd.f32 %v2372, %v2444
        %v2453 = vadd.f32 %v2373, %v2446
        %v2454 = vadd.f32 %v2374, %v2448
        %s2455 = sld [smem:[#allocation8 + $0x20]]
        %v2456 = vstv %s2455
        %v2457 = vmul.f32 %v2456, %v2340
        %v2458 = vmul.f32 %v2456, %v2341
        %v2459 = vmul.f32 %v2456, %v2342
        %2463 = vrot.lane.b32.xlu0 %v2457, 126
        %v2464 = vpop.permute.xlu0 %2463
        %2465 = vrot.lane.b32.xlu0 %v2458, 126
        %v2466 = vpop.permute.xlu0 %2465
        %2467 = vrot.lane.b32.xlu0 %v2459, 126
        %v2468 = vpop.permute.xlu0 %2467
        %v2472 = vadd.f32 %v2392, %v2464
        %v2473 = vadd.f32 %v2393, %v2466
        %v2474 = vadd.f32 %v2394, %v2468
        %s2475 = sld [smem:[#allocation8 + $0x44]]
        %v2476 = vstv %s2475
        %v2477 = vmul.f32 %v2476, %v2340
        %v2478 = vmul.f32 %v2476, %v2341
        %v2479 = vmul.f32 %v2476, %v2342
        %2483 = vrot.lane.b32.xlu0 %v2477, 126
        %v2484 = vpop.permute.xlu0 %2483
        %2485 = vrot.lane.b32.xlu0 %v2478, 126
        %v2486 = vpop.permute.xlu0 %2485
        %2487 = vrot.lane.b32.xlu0 %v2479, 126
        %v2488 = vpop.permute.xlu0 %2487
        %v2492 = vadd.f32 %v2412, %v2484
        %v2493 = vadd.f32 %v2413, %v2486
        %v2494 = vadd.f32 %v2414, %v2488
        %s2495 = sld [smem:[#allocation8 + $0x68]]
        %v2496 = vstv %s2495
        %v2497 = vmul.f32 %v2496, %v2340
        %v2498 = vmul.f32 %v2496, %v2341
        %v2499 = vmul.f32 %v2496, %v2342
        %2503 = vrot.lane.b32.xlu0 %v2497, 126
        %v2504 = vpop.permute.xlu0 %2503
        %2505 = vrot.lane.b32.xlu0 %v2498, 126
        %v2506 = vpop.permute.xlu0 %2505
        %2507 = vrot.lane.b32.xlu0 %v2499, 126
        %v2508 = vpop.permute.xlu0 %2507
        %v2512 = vadd.f32 %v2432, %v2504
        %v2513 = vadd.f32 %v2433, %v2506
        %v2514 = vadd.f32 %v2434, %v2508
        %s2515 = sld [smem:[#allocation8 + $0x8c]]
        %v2516 = vstv %s2515
        %v2517 = vmul.f32 %v2516, %v2340
        %v2518 = vmul.f32 %v2516, %v2341
        %v2519 = vmul.f32 %v2516, %v2342
        %2523 = vrot.lane.b32.xlu0 %v2517, 126
        %v2524 = vpop.permute.xlu0 %2523
        %2525 = vrot.lane.b32.xlu0 %v2518, 126
        %v2526 = vpop.permute.xlu0 %2525
        %2527 = vrot.lane.b32.xlu0 %v2519, 126
        %v2528 = vpop.permute.xlu0 %2527
        %v2532 = vadd.f32 %v2452, %v2524
        %v2533 = vadd.f32 %v2453, %v2526
        %v2534 = vadd.f32 %v2454, %v2528
        %v2535 = vld [vmem:[%s365 + $0x2] sm:$0xff]
        %v2536 = vld [vmem:[%s365 + $0xa] sm:$0xff]
        %v2537 = vld [vmem:[%s365 + $0x12] sm:$0x3]
        %s2538 = sld [smem:[#allocation8 + $0x21]]
        %v2539 = vstv %s2538
        %v2540 = vmul.f32 %v2539, %v2535
        %v2541 = vmul.f32 %v2539, %v2536
        %v2542 = vmul.f32 %v2539, %v2537
        %v2543 = vadd.f32 %v2472, %v2540
        %v2544 = vadd.f32 %v2473, %v2541
        %v2545 = vadd.f32 %v2474, %v2542
        %s2546 = sld [smem:[#allocation8 + $0x45]]
        %v2547 = vstv %s2546
        %v2548 = vmul.f32 %v2547, %v2535
        %v2549 = vmul.f32 %v2547, %v2536
        %v2550 = vmul.f32 %v2547, %v2537
        %v2551 = vadd.f32 %v2492, %v2548
        %v2552 = vadd.f32 %v2493, %v2549
        %v2553 = vadd.f32 %v2494, %v2550
        %s2554 = sld [smem:[#allocation8 + $0x69]]
        %v2555 = vstv %s2554
        %v2556 = vmul.f32 %v2555, %v2535
        %v2557 = vmul.f32 %v2555, %v2536
        %v2558 = vmul.f32 %v2555, %v2537
        %v2559 = vadd.f32 %v2512, %v2556
        %v2560 = vadd.f32 %v2513, %v2557
        %v2561 = vadd.f32 %v2514, %v2558
        %s2562 = sld [smem:[#allocation8 + $0x8d]]
        %v2563 = vstv %s2562
        %v2564 = vmul.f32 %v2563, %v2535
        %v2565 = vmul.f32 %v2563, %v2536
        %v2566 = vmul.f32 %v2563, %v2537
        %v2567 = vadd.f32 %v2532, %v2564
        %v2568 = vadd.f32 %v2533, %v2565
        %v2569 = vadd.f32 %v2534, %v2566
        %s2570 = sld [smem:[#allocation8 + $0x22]]
        %v2571 = vstv %s2570
        %v2572 = vmul.f32 %v2571, %v2535
        %v2573 = vmul.f32 %v2571, %v2536
        %v2574 = vmul.f32 %v2571, %v2537
        %2578 = vrot.lane.b32.xlu0 %v2572, 127
        %v2579 = vpop.permute.xlu0 %2578
        %2580 = vrot.lane.b32.xlu0 %v2573, 127
        %v2581 = vpop.permute.xlu0 %2580
        %2582 = vrot.lane.b32.xlu0 %v2574, 127
        %v2583 = vpop.permute.xlu0 %2582
        %v2587 = vadd.f32 %v2543, %v2579
        %v2588 = vadd.f32 %v2544, %v2581
        %v2589 = vadd.f32 %v2545, %v2583
        %s2590 = sld [smem:[#allocation8 + $0x46]]
        %v2591 = vstv %s2590
        %v2592 = vmul.f32 %v2591, %v2535
        %v2593 = vmul.f32 %v2591, %v2536
        %v2594 = vmul.f32 %v2591, %v2537
        %2598 = vrot.lane.b32.xlu0 %v2592, 127
        %v2599 = vpop.permute.xlu0 %2598
        %2600 = vrot.lane.b32.xlu0 %v2593, 127
        %v2601 = vpop.permute.xlu0 %2600
        %2602 = vrot.lane.b32.xlu0 %v2594, 127
        %v2603 = vpop.permute.xlu0 %2602
        %v2607 = vadd.f32 %v2551, %v2599
        %v2608 = vadd.f32 %v2552, %v2601
        %v2609 = vadd.f32 %v2553, %v2603
        %s2610 = sld [smem:[#allocation8 + $0x6a]]
        %v2611 = vstv %s2610
        %v2612 = vmul.f32 %v2611, %v2535
        %v2613 = vmul.f32 %v2611, %v2536
        %v2614 = vmul.f32 %v2611, %v2537
        %2618 = vrot.lane.b32.xlu0 %v2612, 127
        %v2619 = vpop.permute.xlu0 %2618
        %2620 = vrot.lane.b32.xlu0 %v2613, 127
        %v2621 = vpop.permute.xlu0 %2620
        %2622 = vrot.lane.b32.xlu0 %v2614, 127
        %v2623 = vpop.permute.xlu0 %2622
        %v2627 = vadd.f32 %v2559, %v2619
        %v2628 = vadd.f32 %v2560, %v2621
        %v2629 = vadd.f32 %v2561, %v2623
        %s2630 = sld [smem:[#allocation8 + $0x8e]]
        %v2631 = vstv %s2630
        %v2632 = vmul.f32 %v2631, %v2535
        %v2633 = vmul.f32 %v2631, %v2536
        %v2634 = vmul.f32 %v2631, %v2537
        %2638 = vrot.lane.b32.xlu0 %v2632, 127
        %v2639 = vpop.permute.xlu0 %2638
        %2640 = vrot.lane.b32.xlu0 %v2633, 127
        %v2641 = vpop.permute.xlu0 %2640
        %2642 = vrot.lane.b32.xlu0 %v2634, 127
        %v2643 = vpop.permute.xlu0 %2642
        %v2647 = vadd.f32 %v2567, %v2639
        %v2648 = vadd.f32 %v2568, %v2641
        %v2649 = vadd.f32 %v2569, %v2643
        %s2650 = sld [smem:[#allocation8 + $0x23]]
        %v2651 = vstv %s2650
        %v2652 = vmul.f32 %v2651, %v2535
        %v2653 = vmul.f32 %v2651, %v2536
        %v2654 = vmul.f32 %v2651, %v2537
        %2658 = vrot.lane.b32.xlu0 %v2652, 126
        %v2659 = vpop.permute.xlu0 %2658
        %2660 = vrot.lane.b32.xlu0 %v2653, 126
        %v2661 = vpop.permute.xlu0 %2660
        %2662 = vrot.lane.b32.xlu0 %v2654, 126
        %v2663 = vpop.permute.xlu0 %2662
        %v2667 = vadd.f32 %v2587, %v2659
        %v2668 = vadd.f32 %v2588, %v2661
        %v2669 = vadd.f32 %v2589, %v2663
        %s2670 = sld [smem:[#allocation8 + $0x47]]
        %v2671 = vstv %s2670
        %v2672 = vmul.f32 %v2671, %v2535
        %v2673 = vmul.f32 %v2671, %v2536
        %v2674 = vmul.f32 %v2671, %v2537
        %2678 = vrot.lane.b32.xlu0 %v2672, 126
        %v2679 = vpop.permute.xlu0 %2678
        %2680 = vrot.lane.b32.xlu0 %v2673, 126
        %v2681 = vpop.permute.xlu0 %2680
        %2682 = vrot.lane.b32.xlu0 %v2674, 126
        %v2683 = vpop.permute.xlu0 %2682
        %v2687 = vadd.f32 %v2607, %v2679
        %v2688 = vadd.f32 %v2608, %v2681
        %v2689 = vadd.f32 %v2609, %v2683
        %s2690 = sld [smem:[#allocation8 + $0x6b]]
        %v2691 = vstv %s2690
        %v2692 = vmul.f32 %v2691, %v2535
        %v2693 = vmul.f32 %v2691, %v2536
        %v2694 = vmul.f32 %v2691, %v2537
        %2698 = vrot.lane.b32.xlu0 %v2692, 126
        %v2699 = vpop.permute.xlu0 %2698
        %2700 = vrot.lane.b32.xlu0 %v2693, 126
        %v2701 = vpop.permute.xlu0 %2700
        %2702 = vrot.lane.b32.xlu0 %v2694, 126
        %v2703 = vpop.permute.xlu0 %2702
        %v2707 = vadd.f32 %v2627, %v2699
        %v2708 = vadd.f32 %v2628, %v2701
        %v2709 = vadd.f32 %v2629, %v2703
        %s2710 = sld [smem:[#allocation8 + $0x8f]]
        %v2711 = vstv %s2710
        %v2712 = vmul.f32 %v2711, %v2535
        %v2713 = vmul.f32 %v2711, %v2536
        %v2714 = vmul.f32 %v2711, %v2537
        %2718 = vrot.lane.b32.xlu0 %v2712, 126
        %v2719 = vpop.permute.xlu0 %2718
        %2720 = vrot.lane.b32.xlu0 %v2713, 126
        %v2721 = vpop.permute.xlu0 %2720
        %2722 = vrot.lane.b32.xlu0 %v2714, 126
        %v2723 = vpop.permute.xlu0 %2722
        %v2727 = vadd.f32 %v2647, %v2719
        %v2728 = vadd.f32 %v2648, %v2721
        %v2729 = vadd.f32 %v2649, %v2723
        %vm2730 = vcmp.ge.f32.partialorder %v2667, 0.0
        %vm2731 = vcmp.ge.f32.partialorder %v2668, 0.0
        %vm2732 = vcmp.ge.f32.partialorder %v2669, 0.0
        %v2733 = vmul.f32 %v2667, 0.01
        %v2734 = vmul.f32 %v2668, 0.01
        %v2735 = vmul.f32 %v2669, 0.01
        %v2736 = vsel %vm2730, %v2667, %v2733
        %v2737 = vsel %vm2731, %v2668, %v2734
        %v2738 = vsel %vm2732, %v2669, %v2735
        %2742 = vrot.lane.b32.xlu0 %v2736, 2
        %v2743 = vpop.permute.xlu0 %2742
        %2744 = vrot.lane.b32.xlu0 %v2737, 2
        %v2745 = vpop.permute.xlu0 %2744
        %2746 = vrot.lane.b32.xlu0 %v2738, 2
        %v2747 = vpop.permute.xlu0 %2746
        %vm2751 = vcmask 162832
        %2752 = vst.msk [vmem:[#allocation3 + $0x2] sm:$0xff] %vm2751, %v2743
        %2753 = vst.msk [vmem:[#allocation3 + $0xa] sm:$0xff] %vm2751, %v2745
        %vm2754 = vcmask 156688
        %2755 = vst.msk [vmem:[#allocation3 + $0x12] sm:$0x3] %vm2754, %v2747
        %vm2756 = vcmp.ge.f32.partialorder %v2687, 0.0
        %vm2757 = vcmp.ge.f32.partialorder %v2688, 0.0
        %vm2758 = vcmp.ge.f32.partialorder %v2689, 0.0
        %v2759 = vmul.f32 %v2687, 0.01
        %v2760 = vmul.f32 %v2688, 0.01
        %v2761 = vmul.f32 %v2689, 0.01
        %v2762 = vsel %vm2756, %v2687, %v2759
        %v2763 = vsel %vm2757, %v2688, %v2760
        %v2764 = vsel %vm2758, %v2689, %v2761
        %2768 = vrot.lane.b32.xlu0 %v2762, 2
        %v2769 = vpop.permute.xlu0 %2768
        %2770 = vrot.lane.b32.xlu0 %v2763, 2
        %v2771 = vpop.permute.xlu0 %2770
        %2772 = vrot.lane.b32.xlu0 %v2764, 2
        %v2773 = vpop.permute.xlu0 %2772
        %s2777 = scalar_lea.vmem [#allocation3], 24
        %2778 = vst.msk [vmem:[%s2777 + $0x2] sm:$0xff] %vm2751, %v2769
        %2779 = vst.msk [vmem:[%s2777 + $0xa] sm:$0xff] %vm2751, %v2771
        %2780 = vst.msk [vmem:[%s2777 + $0x12] sm:$0x3] %vm2754, %v2773
        %vm2781 = vcmp.ge.f32.partialorder %v2707, 0.0
        %vm2782 = vcmp.ge.f32.partialorder %v2708, 0.0
        %vm2783 = vcmp.ge.f32.partialorder %v2709, 0.0
        %v2784 = vmul.f32 %v2707, 0.01
        %v2785 = vmul.f32 %v2708, 0.01
        %v2786 = vmul.f32 %v2709, 0.01
        %v2787 = vsel %vm2781, %v2707, %v2784
        %v2788 = vsel %vm2782, %v2708, %v2785
        %v2789 = vsel %vm2783, %v2709, %v2786
        %2793 = vrot.lane.b32.xlu0 %v2787, 2
        %v2794 = vpop.permute.xlu0 %2793
        %2795 = vrot.lane.b32.xlu0 %v2788, 2
        %v2796 = vpop.permute.xlu0 %2795
        %2797 = vrot.lane.b32.xlu0 %v2789, 2
        %v2798 = vpop.permute.xlu0 %2797
        %s2802 = scalar_lea.vmem [#allocation3], 48
        %2803 = vst.msk [vmem:[%s2802 + $0x2] sm:$0xff] %vm2751, %v2794
        %2804 = vst.msk [vmem:[%s2802 + $0xa] sm:$0xff] %vm2751, %v2796
        %2805 = vst.msk [vmem:[%s2802 + $0x12] sm:$0x3] %vm2754, %v2798
        %vm2806 = vcmp.ge.f32.partialorder %v2727, 0.0
        %vm2807 = vcmp.ge.f32.partialorder %v2728, 0.0
        %vm2808 = vcmp.ge.f32.partialorder %v2729, 0.0
        %v2809 = vmul.f32 %v2727, 0.01
        %v2810 = vmul.f32 %v2728, 0.01
        %v2811 = vmul.f32 %v2729, 0.01
        %v2812 = vsel %vm2806, %v2727, %v2809
        %v2813 = vsel %vm2807, %v2728, %v2810
        %v2814 = vsel %vm2808, %v2729, %v2811
        %2818 = vrot.lane.b32.xlu0 %v2812, 2
        %v2819 = vpop.permute.xlu0 %2818
        %2820 = vrot.lane.b32.xlu0 %v2813, 2
        %v2821 = vpop.permute.xlu0 %2820
        %2822 = vrot.lane.b32.xlu0 %v2814, 2
        %v2823 = vpop.permute.xlu0 %2822
        %s2827 = scalar_lea.vmem [#allocation3], 72
        %2828 = vst.msk [vmem:[%s2827 + $0x2] sm:$0xff] %vm2751, %v2819
        %2829 = vst.msk [vmem:[%s2827 + $0xa] sm:$0xff] %vm2751, %v2821
        %2830 = vst.msk [vmem:[%s2827 + $0x12] sm:$0x3] %vm2754, %v2823
        %s2831 = sld [smem:[#allocation12]]
        %v2832 = vstv %s2831
        %s2833 = sld [smem:[#allocation12 + $0x1]]
        %v2834 = vstv %s2833
        %v2835 = vld [vmem:[#allocation3] sm:$0xff]
        %v2836 = vld [vmem:[#allocation3 + $0x8] sm:$0xff]
        %v2837 = vld [vmem:[#allocation3 + $0x10] sm:$0xf]
        %s2838 = sld [smem:[#allocation10]]
        %v2839 = vstv %s2838
        %v2840 = vmul.f32 %v2839, %v2835
        %v2841 = vmul.f32 %v2839, %v2836
        %v2842 = vmul.f32 %v2839, %v2837
        %v2843 = vadd.f32 %v2832, %v2840
        %v2844 = vadd.f32 %v2832, %v2841
        %v2845 = vadd.f32 %v2832, %v2842
        %s2846 = sld [smem:[#allocation10 + $0x24]]
        %v2847 = vstv %s2846
        %v2848 = vmul.f32 %v2847, %v2835
        %v2849 = vmul.f32 %v2847, %v2836
        %v2850 = vmul.f32 %v2847, %v2837
        %v2851 = vadd.f32 %v2834, %v2848
        %v2852 = vadd.f32 %v2834, %v2849
        %v2853 = vadd.f32 %v2834, %v2850
        %s2854 = sld [smem:[#allocation10 + $0x1]]
        %v2855 = vstv %s2854
        %v2856 = vmul.f32 %v2855, %v2835
        %v2857 = vmul.f32 %v2855, %v2836
        %v2858 = vmul.f32 %v2855, %v2837
        %2862 = vrot.lane.b32.xlu0 %v2856, 127
        %v2863 = vpop.permute.xlu0 %2862
        %2864 = vrot.lane.b32.xlu0 %v2857, 127
        %v2865 = vpop.permute.xlu0 %2864
        %2866 = vrot.lane.b32.xlu0 %v2858, 127
        %v2867 = vpop.permute.xlu0 %2866
        %v2871 = vadd.f32 %v2843, %v2863
        %v2872 = vadd.f32 %v2844, %v2865
        %v2873 = vadd.f32 %v2845, %v2867
        %s2874 = sld [smem:[#allocation10 + $0x25]]
        %v2875 = vstv %s2874
        %v2876 = vmul.f32 %v2875, %v2835
        %v2877 = vmul.f32 %v2875, %v2836
        %v2878 = vmul.f32 %v2875, %v2837
        %2882 = vrot.lane.b32.xlu0 %v2876, 127
        %v2883 = vpop.permute.xlu0 %2882
        %2884 = vrot.lane.b32.xlu0 %v2877, 127
        %v2885 = vpop.permute.xlu0 %2884
        %2886 = vrot.lane.b32.xlu0 %v2878, 127
        %v2887 = vpop.permute.xlu0 %2886
        %v2891 = vadd.f32 %v2851, %v2883
        %v2892 = vadd.f32 %v2852, %v2885
        %v2893 = vadd.f32 %v2853, %v2887
        %s2894 = sld [smem:[#allocation10 + $0x2]]
        %v2895 = vstv %s2894
        %v2896 = vmul.f32 %v2895, %v2835
        %v2897 = vmul.f32 %v2895, %v2836
        %v2898 = vmul.f32 %v2895, %v2837
        %2902 = vrot.lane.b32.xlu0 %v2896, 126
        %v2903 = vpop.permute.xlu0 %2902
        %2904 = vrot.lane.b32.xlu0 %v2897, 126
        %v2905 = vpop.permute.xlu0 %2904
        %2906 = vrot.lane.b32.xlu0 %v2898, 126
        %v2907 = vpop.permute.xlu0 %2906
        %v2911 = vadd.f32 %v2871, %v2903
        %v2912 = vadd.f32 %v2872, %v2905
        %v2913 = vadd.f32 %v2873, %v2907
        %s2914 = sld [smem:[#allocation10 + $0x26]]
        %v2915 = vstv %s2914
        %v2916 = vmul.f32 %v2915, %v2835
        %v2917 = vmul.f32 %v2915, %v2836
        %v2918 = vmul.f32 %v2915, %v2837
        %2922 = vrot.lane.b32.xlu0 %v2916, 126
        %v2923 = vpop.permute.xlu0 %2922
        %2924 = vrot.lane.b32.xlu0 %v2917, 126
        %v2925 = vpop.permute.xlu0 %2924
        %2926 = vrot.lane.b32.xlu0 %v2918, 126
        %v2927 = vpop.permute.xlu0 %2926
        %v2931 = vadd.f32 %v2891, %v2923
        %v2932 = vadd.f32 %v2892, %v2925
        %v2933 = vadd.f32 %v2893, %v2927
        %v2934 = vld [vmem:[#allocation3 + $0x1] sm:$0xff]
        %v2935 = vld [vmem:[#allocation3 + $0x9] sm:$0xff]
        %v2936 = vld [vmem:[#allocation3 + $0x11] sm:$0xf]
        %s2937 = sld [smem:[#allocation10 + $0x3]]
        %v2938 = vstv %s2937
        %v2939 = vmul.f32 %v2938, %v2934
        %v2940 = vmul.f32 %v2938, %v2935
        %v2941 = vmul.f32 %v2938, %v2936
        %v2942 = vadd.f32 %v2911, %v2939
        %v2943 = vadd.f32 %v2912, %v2940
        %v2944 = vadd.f32 %v2913, %v2941
        %s2945 = sld [smem:[#allocation10 + $0x27]]
        %v2946 = vstv %s2945
        %v2947 = vmul.f32 %v2946, %v2934
        %v2948 = vmul.f32 %v2946, %v2935
        %v2949 = vmul.f32 %v2946, %v2936
        %v2950 = vadd.f32 %v2931, %v2947
        %v2951 = vadd.f32 %v2932, %v2948
        %v2952 = vadd.f32 %v2933, %v2949
        %s2953 = sld [smem:[#allocation10 + $0x4]]
        %v2954 = vstv %s2953
        %v2955 = vmul.f32 %v2954, %v2934
        %v2956 = vmul.f32 %v2954, %v2935
        %v2957 = vmul.f32 %v2954, %v2936
        %2961 = vrot.lane.b32.xlu0 %v2955, 127
        %v2962 = vpop.permute.xlu0 %2961
        %2963 = vrot.lane.b32.xlu0 %v2956, 127
        %v2964 = vpop.permute.xlu0 %2963
        %2965 = vrot.lane.b32.xlu0 %v2957, 127
        %v2966 = vpop.permute.xlu0 %2965
        %v2970 = vadd.f32 %v2942, %v2962
        %v2971 = vadd.f32 %v2943, %v2964
        %v2972 = vadd.f32 %v2944, %v2966
        %s2973 = sld [smem:[#allocation10 + $0x28]]
        %v2974 = vstv %s2973
        %v2975 = vmul.f32 %v2974, %v2934
        %v2976 = vmul.f32 %v2974, %v2935
        %v2977 = vmul.f32 %v2974, %v2936
        %2981 = vrot.lane.b32.xlu0 %v2975, 127
        %v2982 = vpop.permute.xlu0 %2981
        %2983 = vrot.lane.b32.xlu0 %v2976, 127
        %v2984 = vpop.permute.xlu0 %2983
        %2985 = vrot.lane.b32.xlu0 %v2977, 127
        %v2986 = vpop.permute.xlu0 %2985
        %v2990 = vadd.f32 %v2950, %v2982
        %v2991 = vadd.f32 %v2951, %v2984
        %v2992 = vadd.f32 %v2952, %v2986
        %s2993 = sld [smem:[#allocation10 + $0x5]]
        %v2994 = vstv %s2993
        %v2995 = vmul.f32 %v2994, %v2934
        %v2996 = vmul.f32 %v2994, %v2935
        %v2997 = vmul.f32 %v2994, %v2936
        %3001 = vrot.lane.b32.xlu0 %v2995, 126
        %v3002 = vpop.permute.xlu0 %3001
        %3003 = vrot.lane.b32.xlu0 %v2996, 126
        %v3004 = vpop.permute.xlu0 %3003
        %3005 = vrot.lane.b32.xlu0 %v2997, 126
        %v3006 = vpop.permute.xlu0 %3005
        %v3010 = vadd.f32 %v2970, %v3002
        %v3011 = vadd.f32 %v2971, %v3004
        %v3012 = vadd.f32 %v2972, %v3006
        %s3013 = sld [smem:[#allocation10 + $0x29]]
        %v3014 = vstv %s3013
        %v3015 = vmul.f32 %v3014, %v2934
        %v3016 = vmul.f32 %v3014, %v2935
        %v3017 = vmul.f32 %v3014, %v2936
        %3021 = vrot.lane.b32.xlu0 %v3015, 126
        %v3022 = vpop.permute.xlu0 %3021
        %3023 = vrot.lane.b32.xlu0 %v3016, 126
        %v3024 = vpop.permute.xlu0 %3023
        %3025 = vrot.lane.b32.xlu0 %v3017, 126
        %v3026 = vpop.permute.xlu0 %3025
        %v3030 = vadd.f32 %v2990, %v3022
        %v3031 = vadd.f32 %v2991, %v3024
        %v3032 = vadd.f32 %v2992, %v3026
        %v3033 = vld [vmem:[#allocation3 + $0x2] sm:$0xff]
        %v3034 = vld [vmem:[#allocation3 + $0xa] sm:$0xff]
        %v3035 = vld [vmem:[#allocation3 + $0x12] sm:$0xf]
        %s3036 = sld [smem:[#allocation10 + $0x6]]
        %v3037 = vstv %s3036
        %v3038 = vmul.f32 %v3037, %v3033
        %v3039 = vmul.f32 %v3037, %v3034
        %v3040 = vmul.f32 %v3037, %v3035
        %v3041 = vadd.f32 %v3010, %v3038
        %v3042 = vadd.f32 %v3011, %v3039
        %v3043 = vadd.f32 %v3012, %v3040
        %s3044 = sld [smem:[#allocation10 + $0x2a]]
        %v3045 = vstv %s3044
        %v3046 = vmul.f32 %v3045, %v3033
        %v3047 = vmul.f32 %v3045, %v3034
        %v3048 = vmul.f32 %v3045, %v3035
        %v3049 = vadd.f32 %v3030, %v3046
        %v3050 = vadd.f32 %v3031, %v3047
        %v3051 = vadd.f32 %v3032, %v3048
        %s3052 = sld [smem:[#allocation10 + $0x7]]
        %v3053 = vstv %s3052
        %v3054 = vmul.f32 %v3053, %v3033
        %v3055 = vmul.f32 %v3053, %v3034
        %v3056 = vmul.f32 %v3053, %v3035
        %3060 = vrot.lane.b32.xlu0 %v3054, 127
        %v3061 = vpop.permute.xlu0 %3060
        %3062 = vrot.lane.b32.xlu0 %v3055, 127
        %v3063 = vpop.permute.xlu0 %3062
        %3064 = vrot.lane.b32.xlu0 %v3056, 127
        %v3065 = vpop.permute.xlu0 %3064
        %v3069 = vadd.f32 %v3041, %v3061
        %v3070 = vadd.f32 %v3042, %v3063
        %v3071 = vadd.f32 %v3043, %v3065
        %s3072 = sld [smem:[#allocation10 + $0x2b]]
        %v3073 = vstv %s3072
        %v3074 = vmul.f32 %v3073, %v3033
        %v3075 = vmul.f32 %v3073, %v3034
        %v3076 = vmul.f32 %v3073, %v3035
        %3080 = vrot.lane.b32.xlu0 %v3074, 127
        %v3081 = vpop.permute.xlu0 %3080
        %3082 = vrot.lane.b32.xlu0 %v3075, 127
        %v3083 = vpop.permute.xlu0 %3082
        %3084 = vrot.lane.b32.xlu0 %v3076, 127
        %v3085 = vpop.permute.xlu0 %3084
        %v3089 = vadd.f32 %v3049, %v3081
        %v3090 = vadd.f32 %v3050, %v3083
        %v3091 = vadd.f32 %v3051, %v3085
        %s3092 = sld [smem:[#allocation10 + $0x8]]
        %v3093 = vstv %s3092
        %v3094 = vmul.f32 %v3093, %v3033
        %v3095 = vmul.f32 %v3093, %v3034
        %v3096 = vmul.f32 %v3093, %v3035
        %3100 = vrot.lane.b32.xlu0 %v3094, 126
        %v3101 = vpop.permute.xlu0 %3100
        %3102 = vrot.lane.b32.xlu0 %v3095, 126
        %v3103 = vpop.permute.xlu0 %3102
        %3104 = vrot.lane.b32.xlu0 %v3096, 126
        %v3105 = vpop.permute.xlu0 %3104
        %v3109 = vadd.f32 %v3069, %v3101
        %v3110 = vadd.f32 %v3070, %v3103
        %v3111 = vadd.f32 %v3071, %v3105
        %s3112 = sld [smem:[#allocation10 + $0x2c]]
        %v3113 = vstv %s3112
        %v3114 = vmul.f32 %v3113, %v3033
        %v3115 = vmul.f32 %v3113, %v3034
        %v3116 = vmul.f32 %v3113, %v3035
        %3120 = vrot.lane.b32.xlu0 %v3114, 126
        %v3121 = vpop.permute.xlu0 %3120
        %3122 = vrot.lane.b32.xlu0 %v3115, 126
        %v3123 = vpop.permute.xlu0 %3122
        %3124 = vrot.lane.b32.xlu0 %v3116, 126
        %v3125 = vpop.permute.xlu0 %3124
        %v3129 = vadd.f32 %v3089, %v3121
        %v3130 = vadd.f32 %v3090, %v3123
        %v3131 = vadd.f32 %v3091, %v3125
        %v3132 = vld [vmem:[%s2777] sm:$0xff]
        %v3133 = vld [vmem:[%s2777 + $0x8] sm:$0xff]
        %v3134 = vld [vmem:[%s2777 + $0x10] sm:$0xf]
        %s3135 = sld [smem:[#allocation10 + $0x9]]
        %v3136 = vstv %s3135
        %v3137 = vmul.f32 %v3136, %v3132
        %v3138 = vmul.f32 %v3136, %v3133
        %v3139 = vmul.f32 %v3136, %v3134
        %v3140 = vadd.f32 %v3109, %v3137
        %v3141 = vadd.f32 %v3110, %v3138
        %v3142 = vadd.f32 %v3111, %v3139
        %s3143 = sld [smem:[#allocation10 + $0x2d]]
        %v3144 = vstv %s3143
        %v3145 = vmul.f32 %v3144, %v3132
        %v3146 = vmul.f32 %v3144, %v3133
        %v3147 = vmul.f32 %v3144, %v3134
        %v3148 = vadd.f32 %v3129, %v3145
        %v3149 = vadd.f32 %v3130, %v3146
        %v3150 = vadd.f32 %v3131, %v3147
        %s3151 = sld [smem:[#allocation10 + $0xa]]
        %v3152 = vstv %s3151
        %v3153 = vmul.f32 %v3152, %v3132
        %v3154 = vmul.f32 %v3152, %v3133
        %v3155 = vmul.f32 %v3152, %v3134
        %3159 = vrot.lane.b32.xlu0 %v3153, 127
        %v3160 = vpop.permute.xlu0 %3159
        %3161 = vrot.lane.b32.xlu0 %v3154, 127
        %v3162 = vpop.permute.xlu0 %3161
        %3163 = vrot.lane.b32.xlu0 %v3155, 127
        %v3164 = vpop.permute.xlu0 %3163
        %v3168 = vadd.f32 %v3140, %v3160
        %v3169 = vadd.f32 %v3141, %v3162
        %v3170 = vadd.f32 %v3142, %v3164
        %s3171 = sld [smem:[#allocation10 + $0x2e]]
        %v3172 = vstv %s3171
        %v3173 = vmul.f32 %v3172, %v3132
        %v3174 = vmul.f32 %v3172, %v3133
        %v3175 = vmul.f32 %v3172, %v3134
        %3179 = vrot.lane.b32.xlu0 %v3173, 127
        %v3180 = vpop.permute.xlu0 %3179
        %3181 = vrot.lane.b32.xlu0 %v3174, 127
        %v3182 = vpop.permute.xlu0 %3181
        %3183 = vrot.lane.b32.xlu0 %v3175, 127
        %v3184 = vpop.permute.xlu0 %3183
        %v3188 = vadd.f32 %v3148, %v3180
        %v3189 = vadd.f32 %v3149, %v3182
        %v3190 = vadd.f32 %v3150, %v3184
        %s3191 = sld [smem:[#allocation10 + $0xb]]
        %v3192 = vstv %s3191
        %v3193 = vmul.f32 %v3192, %v3132
        %v3194 = vmul.f32 %v3192, %v3133
        %v3195 = vmul.f32 %v3192, %v3134
        %3199 = vrot.lane.b32.xlu0 %v3193, 126
        %v3200 = vpop.permute.xlu0 %3199
        %3201 = vrot.lane.b32.xlu0 %v3194, 126
        %v3202 = vpop.permute.xlu0 %3201
        %3203 = vrot.lane.b32.xlu0 %v3195, 126
        %v3204 = vpop.permute.xlu0 %3203
        %v3208 = vadd.f32 %v3168, %v3200
        %v3209 = vadd.f32 %v3169, %v3202
        %v3210 = vadd.f32 %v3170, %v3204
        %s3211 = sld [smem:[#allocation10 + $0x2f]]
        %v3212 = vstv %s3211
        %v3213 = vmul.f32 %v3212, %v3132
        %v3214 = vmul.f32 %v3212, %v3133
        %v3215 = vmul.f32 %v3212, %v3134
        %3219 = vrot.lane.b32.xlu0 %v3213, 126
        %v3220 = vpop.permute.xlu0 %3219
        %3221 = vrot.lane.b32.xlu0 %v3214, 126
        %v3222 = vpop.permute.xlu0 %3221
        %3223 = vrot.lane.b32.xlu0 %v3215, 126
        %v3224 = vpop.permute.xlu0 %3223
        %v3228 = vadd.f32 %v3188, %v3220
        %v3229 = vadd.f32 %v3189, %v3222
        %v3230 = vadd.f32 %v3190, %v3224
        %v3231 = vld [vmem:[%s2777 + $0x1] sm:$0xff]
        %v3232 = vld [vmem:[%s2777 + $0x9] sm:$0xff]
        %v3233 = vld [vmem:[%s2777 + $0x11] sm:$0xf]
        %s3234 = sld [smem:[#allocation10 + $0xc]]
        %v3235 = vstv %s3234
        %v3236 = vmul.f32 %v3235, %v3231
        %v3237 = vmul.f32 %v3235, %v3232
        %v3238 = vmul.f32 %v3235, %v3233
        %v3239 = vadd.f32 %v3208, %v3236
        %v3240 = vadd.f32 %v3209, %v3237
        %v3241 = vadd.f32 %v3210, %v3238
        %s3242 = sld [smem:[#allocation10 + $0x30]]
        %v3243 = vstv %s3242
        %v3244 = vmul.f32 %v3243, %v3231
        %v3245 = vmul.f32 %v3243, %v3232
        %v3246 = vmul.f32 %v3243, %v3233
        %v3247 = vadd.f32 %v3228, %v3244
        %v3248 = vadd.f32 %v3229, %v3245
        %v3249 = vadd.f32 %v3230, %v3246
        %s3250 = sld [smem:[#allocation10 + $0xd]]
        %v3251 = vstv %s3250
        %v3252 = vmul.f32 %v3251, %v3231
        %v3253 = vmul.f32 %v3251, %v3232
        %v3254 = vmul.f32 %v3251, %v3233
        %3258 = vrot.lane.b32.xlu0 %v3252, 127
        %v3259 = vpop.permute.xlu0 %3258
        %3260 = vrot.lane.b32.xlu0 %v3253, 127
        %v3261 = vpop.permute.xlu0 %3260
        %3262 = vrot.lane.b32.xlu0 %v3254, 127
        %v3263 = vpop.permute.xlu0 %3262
        %v3267 = vadd.f32 %v3239, %v3259
        %v3268 = vadd.f32 %v3240, %v3261
        %v3269 = vadd.f32 %v3241, %v3263
        %s3270 = sld [smem:[#allocation10 + $0x31]]
        %v3271 = vstv %s3270
        %v3272 = vmul.f32 %v3271, %v3231
        %v3273 = vmul.f32 %v3271, %v3232
        %v3274 = vmul.f32 %v3271, %v3233
        %3278 = vrot.lane.b32.xlu0 %v3272, 127
        %v3279 = vpop.permute.xlu0 %3278
        %3280 = vrot.lane.b32.xlu0 %v3273, 127
        %v3281 = vpop.permute.xlu0 %3280
        %3282 = vrot.lane.b32.xlu0 %v3274, 127
        %v3283 = vpop.permute.xlu0 %3282
        %v3287 = vadd.f32 %v3247, %v3279
        %v3288 = vadd.f32 %v3248, %v3281
        %v3289 = vadd.f32 %v3249, %v3283
        %s3290 = sld [smem:[#allocation10 + $0xe]]
        %v3291 = vstv %s3290
        %v3292 = vmul.f32 %v3291, %v3231
        %v3293 = vmul.f32 %v3291, %v3232
        %v3294 = vmul.f32 %v3291, %v3233
        %3298 = vrot.lane.b32.xlu0 %v3292, 126
        %v3299 = vpop.permute.xlu0 %3298
        %3300 = vrot.lane.b32.xlu0 %v3293, 126
        %v3301 = vpop.permute.xlu0 %3300
        %3302 = vrot.lane.b32.xlu0 %v3294, 126
        %v3303 = vpop.permute.xlu0 %3302
        %v3307 = vadd.f32 %v3267, %v3299
        %v3308 = vadd.f32 %v3268, %v3301
        %v3309 = vadd.f32 %v3269, %v3303
        %s3310 = sld [smem:[#allocation10 + $0x32]]
        %v3311 = vstv %s3310
        %v3312 = vmul.f32 %v3311, %v3231
        %v3313 = vmul.f32 %v3311, %v3232
        %v3314 = vmul.f32 %v3311, %v3233
        %3318 = vrot.lane.b32.xlu0 %v3312, 126
        %v3319 = vpop.permute.xlu0 %3318
        %3320 = vrot.lane.b32.xlu0 %v3313, 126
        %v3321 = vpop.permute.xlu0 %3320
        %3322 = vrot.lane.b32.xlu0 %v3314, 126
        %v3323 = vpop.permute.xlu0 %3322
        %v3327 = vadd.f32 %v3287, %v3319
        %v3328 = vadd.f32 %v3288, %v3321
        %v3329 = vadd.f32 %v3289, %v3323
        %v3330 = vld [vmem:[%s2777 + $0x2] sm:$0xff]
        %v3331 = vld [vmem:[%s2777 + $0xa] sm:$0xff]
        %v3332 = vld [vmem:[%s2777 + $0x12] sm:$0xf]
        %s3333 = sld [smem:[#allocation10 + $0xf]]
        %v3334 = vstv %s3333
        %v3335 = vmul.f32 %v3334, %v3330
        %v3336 = vmul.f32 %v3334, %v3331
        %v3337 = vmul.f32 %v3334, %v3332
        %v3338 = vadd.f32 %v3307, %v3335
        %v3339 = vadd.f32 %v3308, %v3336
        %v3340 = vadd.f32 %v3309, %v3337
        %s3341 = sld [smem:[#allocation10 + $0x33]]
        %v3342 = vstv %s3341
        %v3343 = vmul.f32 %v3342, %v3330
        %v3344 = vmul.f32 %v3342, %v3331
        %v3345 = vmul.f32 %v3342, %v3332
        %v3346 = vadd.f32 %v3327, %v3343
        %v3347 = vadd.f32 %v3328, %v3344
        %v3348 = vadd.f32 %v3329, %v3345
        %s3349 = sld [smem:[#allocation10 + $0x10]]
        %v3350 = vstv %s3349
        %v3351 = vmul.f32 %v3350, %v3330
        %v3352 = vmul.f32 %v3350, %v3331
        %v3353 = vmul.f32 %v3350, %v3332
        %3357 = vrot.lane.b32.xlu0 %v3351, 127
        %v3358 = vpop.permute.xlu0 %3357
        %3359 = vrot.lane.b32.xlu0 %v3352, 127
        %v3360 = vpop.permute.xlu0 %3359
        %3361 = vrot.lane.b32.xlu0 %v3353, 127
        %v3362 = vpop.permute.xlu0 %3361
        %v3366 = vadd.f32 %v3338, %v3358
        %v3367 = vadd.f32 %v3339, %v3360
        %v3368 = vadd.f32 %v3340, %v3362
        %s3369 = sld [smem:[#allocation10 + $0x34]]
        %v3370 = vstv %s3369
        %v3371 = vmul.f32 %v3370, %v3330
        %v3372 = vmul.f32 %v3370, %v3331
        %v3373 = vmul.f32 %v3370, %v3332
        %3377 = vrot.lane.b32.xlu0 %v3371, 127
        %v3378 = vpop.permute.xlu0 %3377
        %3379 = vrot.lane.b32.xlu0 %v3372, 127
        %v3380 = vpop.permute.xlu0 %3379
        %3381 = vrot.lane.b32.xlu0 %v3373, 127
        %v3382 = vpop.permute.xlu0 %3381
        %v3386 = vadd.f32 %v3346, %v3378
        %v3387 = vadd.f32 %v3347, %v3380
        %v3388 = vadd.f32 %v3348, %v3382
        %s3389 = sld [smem:[#allocation10 + $0x11]]
        %v3390 = vstv %s3389
        %v3391 = vmul.f32 %v3390, %v3330
        %v3392 = vmul.f32 %v3390, %v3331
        %v3393 = vmul.f32 %v3390, %v3332
        %3397 = vrot.lane.b32.xlu0 %v3391, 126
        %v3398 = vpop.permute.xlu0 %3397
        %3399 = vrot.lane.b32.xlu0 %v3392, 126
        %v3400 = vpop.permute.xlu0 %3399
        %3401 = vrot.lane.b32.xlu0 %v3393, 126
        %v3402 = vpop.permute.xlu0 %3401
        %v3406 = vadd.f32 %v3366, %v3398
        %v3407 = vadd.f32 %v3367, %v3400
        %v3408 = vadd.f32 %v3368, %v3402
        %s3409 = sld [smem:[#allocation10 + $0x35]]
        %v3410 = vstv %s3409
        %v3411 = vmul.f32 %v3410, %v3330
        %v3412 = vmul.f32 %v3410, %v3331
        %v3413 = vmul.f32 %v3410, %v3332
        %3417 = vrot.lane.b32.xlu0 %v3411, 126
        %v3418 = vpop.permute.xlu0 %3417
        %3419 = vrot.lane.b32.xlu0 %v3412, 126
        %v3420 = vpop.permute.xlu0 %3419
        %3421 = vrot.lane.b32.xlu0 %v3413, 126
        %v3422 = vpop.permute.xlu0 %3421
        %v3426 = vadd.f32 %v3386, %v3418
        %v3427 = vadd.f32 %v3387, %v3420
        %v3428 = vadd.f32 %v3388, %v3422
        %v3429 = vld [vmem:[%s2802] sm:$0xff]
        %v3430 = vld [vmem:[%s2802 + $0x8] sm:$0xff]
        %v3431 = vld [vmem:[%s2802 + $0x10] sm:$0xf]
        %s3432 = sld [smem:[#allocation10 + $0x12]]
        %v3433 = vstv %s3432
        %v3434 = vmul.f32 %v3433, %v3429
        %v3435 = vmul.f32 %v3433, %v3430
        %v3436 = vmul.f32 %v3433, %v3431
        %v3437 = vadd.f32 %v3406, %v3434
        %v3438 = vadd.f32 %v3407, %v3435
        %v3439 = vadd.f32 %v3408, %v3436
        %s3440 = sld [smem:[#allocation10 + $0x36]]
        %v3441 = vstv %s3440
        %v3442 = vmul.f32 %v3441, %v3429
        %v3443 = vmul.f32 %v3441, %v3430
        %v3444 = vmul.f32 %v3441, %v3431
        %v3445 = vadd.f32 %v3426, %v3442
        %v3446 = vadd.f32 %v3427, %v3443
        %v3447 = vadd.f32 %v3428, %v3444
        %s3448 = sld [smem:[#allocation10 + $0x13]]
        %v3449 = vstv %s3448
        %v3450 = vmul.f32 %v3449, %v3429
        %v3451 = vmul.f32 %v3449, %v3430
        %v3452 = vmul.f32 %v3449, %v3431
        %3456 = vrot.lane.b32.xlu0 %v3450, 127
        %v3457 = vpop.permute.xlu0 %3456
        %3458 = vrot.lane.b32.xlu0 %v3451, 127
        %v3459 = vpop.permute.xlu0 %3458
        %3460 = vrot.lane.b32.xlu0 %v3452, 127
        %v3461 = vpop.permute.xlu0 %3460
        %v3465 = vadd.f32 %v3437, %v3457
        %v3466 = vadd.f32 %v3438, %v3459
        %v3467 = vadd.f32 %v3439, %v3461
        %s3468 = sld [smem:[#allocation10 + $0x37]]
        %v3469 = vstv %s3468
        %v3470 = vmul.f32 %v3469, %v3429
        %v3471 = vmul.f32 %v3469, %v3430
        %v3472 = vmul.f32 %v3469, %v3431
        %3476 = vrot.lane.b32.xlu0 %v3470, 127
        %v3477 = vpop.permute.xlu0 %3476
        %3478 = vrot.lane.b32.xlu0 %v3471, 127
        %v3479 = vpop.permute.xlu0 %3478
        %3480 = vrot.lane.b32.xlu0 %v3472, 127
        %v3481 = vpop.permute.xlu0 %3480
        %v3485 = vadd.f32 %v3445, %v3477
        %v3486 = vadd.f32 %v3446, %v3479
        %v3487 = vadd.f32 %v3447, %v3481
        %s3488 = sld [smem:[#allocation10 + $0x14]]
        %v3489 = vstv %s3488
        %v3490 = vmul.f32 %v3489, %v3429
        %v3491 = vmul.f32 %v3489, %v3430
        %v3492 = vmul.f32 %v3489, %v3431
        %3496 = vrot.lane.b32.xlu0 %v3490, 126
        %v3497 = vpop.permute.xlu0 %3496
        %3498 = vrot.lane.b32.xlu0 %v3491, 126
        %v3499 = vpop.permute.xlu0 %3498
        %3500 = vrot.lane.b32.xlu0 %v3492, 126
        %v3501 = vpop.permute.xlu0 %3500
        %v3505 = vadd.f32 %v3465, %v3497
        %v3506 = vadd.f32 %v3466, %v3499
        %v3507 = vadd.f32 %v3467, %v3501
        %s3508 = sld [smem:[#allocation10 + $0x38]]
        %v3509 = vstv %s3508
        %v3510 = vmul.f32 %v3509, %v3429
        %v3511 = vmul.f32 %v3509, %v3430
        %v3512 = vmul.f32 %v3509, %v3431
        %3516 = vrot.lane.b32.xlu0 %v3510, 126
        %v3517 = vpop.permute.xlu0 %3516
        %3518 = vrot.lane.b32.xlu0 %v3511, 126
        %v3519 = vpop.permute.xlu0 %3518
        %3520 = vrot.lane.b32.xlu0 %v3512, 126
        %v3521 = vpop.permute.xlu0 %3520
        %v3525 = vadd.f32 %v3485, %v3517
        %v3526 = vadd.f32 %v3486, %v3519
        %v3527 = vadd.f32 %v3487, %v3521
        %v3528 = vld [vmem:[%s2802 + $0x1] sm:$0xff]
        %v3529 = vld [vmem:[%s2802 + $0x9] sm:$0xff]
        %v3530 = vld [vmem:[%s2802 + $0x11] sm:$0xf]
        %s3531 = sld [smem:[#allocation10 + $0x15]]
        %v3532 = vstv %s3531
        %v3533 = vmul.f32 %v3532, %v3528
        %v3534 = vmul.f32 %v3532, %v3529
        %v3535 = vmul.f32 %v3532, %v3530
        %v3536 = vadd.f32 %v3505, %v3533
        %v3537 = vadd.f32 %v3506, %v3534
        %v3538 = vadd.f32 %v3507, %v3535
        %s3539 = sld [smem:[#allocation10 + $0x39]]
        %v3540 = vstv %s3539
        %v3541 = vmul.f32 %v3540, %v3528
        %v3542 = vmul.f32 %v3540, %v3529
        %v3543 = vmul.f32 %v3540, %v3530
        %v3544 = vadd.f32 %v3525, %v3541
        %v3545 = vadd.f32 %v3526, %v3542
        %v3546 = vadd.f32 %v3527, %v3543
        %s3547 = sld [smem:[#allocation10 + $0x16]]
        %v3548 = vstv %s3547
        %v3549 = vmul.f32 %v3548, %v3528
        %v3550 = vmul.f32 %v3548, %v3529
        %v3551 = vmul.f32 %v3548, %v3530
        %3555 = vrot.lane.b32.xlu0 %v3549, 127
        %v3556 = vpop.permute.xlu0 %3555
        %3557 = vrot.lane.b32.xlu0 %v3550, 127
        %v3558 = vpop.permute.xlu0 %3557
        %3559 = vrot.lane.b32.xlu0 %v3551, 127
        %v3560 = vpop.permute.xlu0 %3559
        %v3564 = vadd.f32 %v3536, %v3556
        %v3565 = vadd.f32 %v3537, %v3558
        %v3566 = vadd.f32 %v3538, %v3560
        %s3567 = sld [smem:[#allocation10 + $0x3a]]
        %v3568 = vstv %s3567
        %v3569 = vmul.f32 %v3568, %v3528
        %v3570 = vmul.f32 %v3568, %v3529
        %v3571 = vmul.f32 %v3568, %v3530
        %3575 = vrot.lane.b32.xlu0 %v3569, 127
        %v3576 = vpop.permute.xlu0 %3575
        %3577 = vrot.lane.b32.xlu0 %v3570, 127
        %v3578 = vpop.permute.xlu0 %3577
        %3579 = vrot.lane.b32.xlu0 %v3571, 127
        %v3580 = vpop.permute.xlu0 %3579
        %v3584 = vadd.f32 %v3544, %v3576
        %v3585 = vadd.f32 %v3545, %v3578
        %v3586 = vadd.f32 %v3546, %v3580
        %s3587 = sld [smem:[#allocation10 + $0x17]]
        %v3588 = vstv %s3587
        %v3589 = vmul.f32 %v3588, %v3528
        %v3590 = vmul.f32 %v3588, %v3529
        %v3591 = vmul.f32 %v3588, %v3530
        %3595 = vrot.lane.b32.xlu0 %v3589, 126
        %v3596 = vpop.permute.xlu0 %3595
        %3597 = vrot.lane.b32.xlu0 %v3590, 126
        %v3598 = vpop.permute.xlu0 %3597
        %3599 = vrot.lane.b32.xlu0 %v3591, 126
        %v3600 = vpop.permute.xlu0 %3599
        %v3604 = vadd.f32 %v3564, %v3596
        %v3605 = vadd.f32 %v3565, %v3598
        %v3606 = vadd.f32 %v3566, %v3600
        %s3607 = sld [smem:[#allocation10 + $0x3b]]
        %v3608 = vstv %s3607
        %v3609 = vmul.f32 %v3608, %v3528
        %v3610 = vmul.f32 %v3608, %v3529
        %v3611 = vmul.f32 %v3608, %v3530
        %3615 = vrot.lane.b32.xlu0 %v3609, 126
        %v3616 = vpop.permute.xlu0 %3615
        %3617 = vrot.lane.b32.xlu0 %v3610, 126
        %v3618 = vpop.permute.xlu0 %3617
        %3619 = vrot.lane.b32.xlu0 %v3611, 126
        %v3620 = vpop.permute.xlu0 %3619
        %v3624 = vadd.f32 %v3584, %v3616
        %v3625 = vadd.f32 %v3585, %v3618
        %v3626 = vadd.f32 %v3586, %v3620
        %v3627 = vld [vmem:[%s2802 + $0x2] sm:$0xff]
        %v3628 = vld [vmem:[%s2802 + $0xa] sm:$0xff]
        %v3629 = vld [vmem:[%s2802 + $0x12] sm:$0xf]
        %s3630 = sld [smem:[#allocation10 + $0x18]]
        %v3631 = vstv %s3630
        %v3632 = vmul.f32 %v3631, %v3627
        %v3633 = vmul.f32 %v3631, %v3628
        %v3634 = vmul.f32 %v3631, %v3629
        %v3635 = vadd.f32 %v3604, %v3632
        %v3636 = vadd.f32 %v3605, %v3633
        %v3637 = vadd.f32 %v3606, %v3634
        %s3638 = sld [smem:[#allocation10 + $0x3c]]
        %v3639 = vstv %s3638
        %v3640 = vmul.f32 %v3639, %v3627
        %v3641 = vmul.f32 %v3639, %v3628
        %v3642 = vmul.f32 %v3639, %v3629
        %v3643 = vadd.f32 %v3624, %v3640
        %v3644 = vadd.f32 %v3625, %v3641
        %v3645 = vadd.f32 %v3626, %v3642
        %s3646 = sld [smem:[#allocation10 + $0x19]]
        %v3647 = vstv %s3646
        %v3648 = vmul.f32 %v3647, %v3627
        %v3649 = vmul.f32 %v3647, %v3628
        %v3650 = vmul.f32 %v3647, %v3629
        %3654 = vrot.lane.b32.xlu0 %v3648, 127
        %v3655 = vpop.permute.xlu0 %3654
        %3656 = vrot.lane.b32.xlu0 %v3649, 127
        %v3657 = vpop.permute.xlu0 %3656
        %3658 = vrot.lane.b32.xlu0 %v3650, 127
        %v3659 = vpop.permute.xlu0 %3658
        %v3663 = vadd.f32 %v3635, %v3655
        %v3664 = vadd.f32 %v3636, %v3657
        %v3665 = vadd.f32 %v3637, %v3659
        %s3666 = sld [smem:[#allocation10 + $0x3d]]
        %v3667 = vstv %s3666
        %v3668 = vmul.f32 %v3667, %v3627
        %v3669 = vmul.f32 %v3667, %v3628
        %v3670 = vmul.f32 %v3667, %v3629
        %3674 = vrot.lane.b32.xlu0 %v3668, 127
        %v3675 = vpop.permute.xlu0 %3674
        %3676 = vrot.lane.b32.xlu0 %v3669, 127
        %v3677 = vpop.permute.xlu0 %3676
        %3678 = vrot.lane.b32.xlu0 %v3670, 127
        %v3679 = vpop.permute.xlu0 %3678
        %v3683 = vadd.f32 %v3643, %v3675
        %v3684 = vadd.f32 %v3644, %v3677
        %v3685 = vadd.f32 %v3645, %v3679
        %s3686 = sld [smem:[#allocation10 + $0x1a]]
        %v3687 = vstv %s3686
        %v3688 = vmul.f32 %v3687, %v3627
        %v3689 = vmul.f32 %v3687, %v3628
        %v3690 = vmul.f32 %v3687, %v3629
        %3694 = vrot.lane.b32.xlu0 %v3688, 126
        %v3695 = vpop.permute.xlu0 %3694
        %3696 = vrot.lane.b32.xlu0 %v3689, 126
        %v3697 = vpop.permute.xlu0 %3696
        %3698 = vrot.lane.b32.xlu0 %v3690, 126
        %v3699 = vpop.permute.xlu0 %3698
        %v3703 = vadd.f32 %v3663, %v3695
        %v3704 = vadd.f32 %v3664, %v3697
        %v3705 = vadd.f32 %v3665, %v3699
        %s3706 = sld [smem:[#allocation10 + $0x3e]]
        %v3707 = vstv %s3706
        %v3708 = vmul.f32 %v3707, %v3627
        %v3709 = vmul.f32 %v3707, %v3628
        %v3710 = vmul.f32 %v3707, %v3629
        %3714 = vrot.lane.b32.xlu0 %v3708, 126
        %v3715 = vpop.permute.xlu0 %3714
        %3716 = vrot.lane.b32.xlu0 %v3709, 126
        %v3717 = vpop.permute.xlu0 %3716
        %3718 = vrot.lane.b32.xlu0 %v3710, 126
        %v3719 = vpop.permute.xlu0 %3718
        %v3723 = vadd.f32 %v3683, %v3715
        %v3724 = vadd.f32 %v3684, %v3717
        %v3725 = vadd.f32 %v3685, %v3719
        %v3726 = vld [vmem:[%s2827] sm:$0xff]
        %v3727 = vld [vmem:[%s2827 + $0x8] sm:$0xff]
        %v3728 = vld [vmem:[%s2827 + $0x10] sm:$0xf]
        %s3729 = sld [smem:[#allocation10 + $0x1b]]
        %v3730 = vstv %s3729
        %v3731 = vmul.f32 %v3730, %v3726
        %v3732 = vmul.f32 %v3730, %v3727
        %v3733 = vmul.f32 %v3730, %v3728
        %v3734 = vadd.f32 %v3703, %v3731
        %v3735 = vadd.f32 %v3704, %v3732
        %v3736 = vadd.f32 %v3705, %v3733
        %s3737 = sld [smem:[#allocation10 + $0x3f]]
        %v3738 = vstv %s3737
        %v3739 = vmul.f32 %v3738, %v3726
        %v3740 = vmul.f32 %v3738, %v3727
        %v3741 = vmul.f32 %v3738, %v3728
        %v3742 = vadd.f32 %v3723, %v3739
        %v3743 = vadd.f32 %v3724, %v3740
        %v3744 = vadd.f32 %v3725, %v3741
        %s3745 = sld [smem:[#allocation10 + $0x1c]]
        %v3746 = vstv %s3745
        %v3747 = vmul.f32 %v3746, %v3726
        %v3748 = vmul.f32 %v3746, %v3727
        %v3749 = vmul.f32 %v3746, %v3728
        %3753 = vrot.lane.b32.xlu0 %v3747, 127
        %v3754 = vpop.permute.xlu0 %3753
        %3755 = vrot.lane.b32.xlu0 %v3748, 127
        %v3756 = vpop.permute.xlu0 %3755
        %3757 = vrot.lane.b32.xlu0 %v3749, 127
        %v3758 = vpop.permute.xlu0 %3757
        %v3762 = vadd.f32 %v3734, %v3754
        %v3763 = vadd.f32 %v3735, %v3756
        %v3764 = vadd.f32 %v3736, %v3758
        %s3765 = sld [smem:[#allocation10 + $0x40]]
        %v3766 = vstv %s3765
        %v3767 = vmul.f32 %v3766, %v3726
        %v3768 = vmul.f32 %v3766, %v3727
        %v3769 = vmul.f32 %v3766, %v3728
        %3773 = vrot.lane.b32.xlu0 %v3767, 127
        %v3774 = vpop.permute.xlu0 %3773
        %3775 = vrot.lane.b32.xlu0 %v3768, 127
        %v3776 = vpop.permute.xlu0 %3775
        %3777 = vrot.lane.b32.xlu0 %v3769, 127
        %v3778 = vpop.permute.xlu0 %3777
        %v3782 = vadd.f32 %v3742, %v3774
        %v3783 = vadd.f32 %v3743, %v3776
        %v3784 = vadd.f32 %v3744, %v3778
        %s3785 = sld [smem:[#allocation10 + $0x1d]]
        %v3786 = vstv %s3785
        %v3787 = vmul.f32 %v3786, %v3726
        %v3788 = vmul.f32 %v3786, %v3727
        %v3789 = vmul.f32 %v3786, %v3728
        %3793 = vrot.lane.b32.xlu0 %v3787, 126
        %v3794 = vpop.permute.xlu0 %3793
        %3795 = vrot.lane.b32.xlu0 %v3788, 126
        %v3796 = vpop.permute.xlu0 %3795
        %3797 = vrot.lane.b32.xlu0 %v3789, 126
        %v3798 = vpop.permute.xlu0 %3797
        %v3802 = vadd.f32 %v3762, %v3794
        %v3803 = vadd.f32 %v3763, %v3796
        %v3804 = vadd.f32 %v3764, %v3798
        %s3805 = sld [smem:[#allocation10 + $0x41]]
        %v3806 = vstv %s3805
        %v3807 = vmul.f32 %v3806, %v3726
        %v3808 = vmul.f32 %v3806, %v3727
        %v3809 = vmul.f32 %v3806, %v3728
        %3813 = vrot.lane.b32.xlu0 %v3807, 126
        %v3814 = vpop.permute.xlu0 %3813
        %3815 = vrot.lane.b32.xlu0 %v3808, 126
        %v3816 = vpop.permute.xlu0 %3815
        %3817 = vrot.lane.b32.xlu0 %v3809, 126
        %v3818 = vpop.permute.xlu0 %3817
        %v3822 = vadd.f32 %v3782, %v3814
        %v3823 = vadd.f32 %v3783, %v3816
        %v3824 = vadd.f32 %v3784, %v3818
        %v3825 = vld [vmem:[%s2827 + $0x1] sm:$0xff]
        %v3826 = vld [vmem:[%s2827 + $0x9] sm:$0xff]
        %v3827 = vld [vmem:[%s2827 + $0x11] sm:$0xf]
        %s3828 = sld [smem:[#allocation10 + $0x1e]]
        %v3829 = vstv %s3828
        %v3830 = vmul.f32 %v3829, %v3825
        %v3831 = vmul.f32 %v3829, %v3826
        %v3832 = vmul.f32 %v3829, %v3827
        %v3833 = vadd.f32 %v3802, %v3830
        %v3834 = vadd.f32 %v3803, %v3831
        %v3835 = vadd.f32 %v3804, %v3832
        %s3836 = sld [smem:[#allocation10 + $0x42]]
        %v3837 = vstv %s3836
        %v3838 = vmul.f32 %v3837, %v3825
        %v3839 = vmul.f32 %v3837, %v3826
        %v3840 = vmul.f32 %v3837, %v3827
        %v3841 = vadd.f32 %v3822, %v3838
        %v3842 = vadd.f32 %v3823, %v3839
        %v3843 = vadd.f32 %v3824, %v3840
        %s3844 = sld [smem:[#allocation10 + $0x1f]]
        %v3845 = vstv %s3844
        %v3846 = vmul.f32 %v3845, %v3825
        %v3847 = vmul.f32 %v3845, %v3826
        %v3848 = vmul.f32 %v3845, %v3827
        %3852 = vrot.lane.b32.xlu0 %v3846, 127
        %v3853 = vpop.permute.xlu0 %3852
        %3854 = vrot.lane.b32.xlu0 %v3847, 127
        %v3855 = vpop.permute.xlu0 %3854
        %3856 = vrot.lane.b32.xlu0 %v3848, 127
        %v3857 = vpop.permute.xlu0 %3856
        %v3861 = vadd.f32 %v3833, %v3853
        %v3862 = vadd.f32 %v3834, %v3855
        %v3863 = vadd.f32 %v3835, %v3857
        %s3864 = sld [smem:[#allocation10 + $0x43]]
        %v3865 = vstv %s3864
        %v3866 = vmul.f32 %v3865, %v3825
        %v3867 = vmul.f32 %v3865, %v3826
        %v3868 = vmul.f32 %v3865, %v3827
        %3872 = vrot.lane.b32.xlu0 %v3866, 127
        %v3873 = vpop.permute.xlu0 %3872
        %3874 = vrot.lane.b32.xlu0 %v3867, 127
        %v3875 = vpop.permute.xlu0 %3874
        %3876 = vrot.lane.b32.xlu0 %v3868, 127
        %v3877 = vpop.permute.xlu0 %3876
        %v3881 = vadd.f32 %v3841, %v3873
        %v3882 = vadd.f32 %v3842, %v3875
        %v3883 = vadd.f32 %v3843, %v3877
        %s3884 = sld [smem:[#allocation10 + $0x20]]
        %v3885 = vstv %s3884
        %v3886 = vmul.f32 %v3885, %v3825
        %v3887 = vmul.f32 %v3885, %v3826
        %v3888 = vmul.f32 %v3885, %v3827
        %3892 = vrot.lane.b32.xlu0 %v3886, 126
        %v3893 = vpop.permute.xlu0 %3892
        %3894 = vrot.lane.b32.xlu0 %v3887, 126
        %v3895 = vpop.permute.xlu0 %3894
        %3896 = vrot.lane.b32.xlu0 %v3888, 126
        %v3897 = vpop.permute.xlu0 %3896
        %v3901 = vadd.f32 %v3861, %v3893
        %v3902 = vadd.f32 %v3862, %v3895
        %v3903 = vadd.f32 %v3863, %v3897
        %s3904 = sld [smem:[#allocation10 + $0x44]]
        %v3905 = vstv %s3904
        %v3906 = vmul.f32 %v3905, %v3825
        %v3907 = vmul.f32 %v3905, %v3826
        %v3908 = vmul.f32 %v3905, %v3827
        %3912 = vrot.lane.b32.xlu0 %v3906, 126
        %v3913 = vpop.permute.xlu0 %3912
        %3914 = vrot.lane.b32.xlu0 %v3907, 126
        %v3915 = vpop.permute.xlu0 %3914
        %3916 = vrot.lane.b32.xlu0 %v3908, 126
        %v3917 = vpop.permute.xlu0 %3916
        %v3921 = vadd.f32 %v3881, %v3913
        %v3922 = vadd.f32 %v3882, %v3915
        %v3923 = vadd.f32 %v3883, %v3917
        %v3924 = vld [vmem:[%s2827 + $0x2] sm:$0xff]
        %v3925 = vld [vmem:[%s2827 + $0xa] sm:$0xff]
        %v3926 = vld [vmem:[%s2827 + $0x12] sm:$0xf]
        %s3927 = sld [smem:[#allocation10 + $0x21]]
        %v3928 = vstv %s3927
        %v3929 = vmul.f32 %v3928, %v3924
        %v3930 = vmul.f32 %v3928, %v3925
        %v3931 = vmul.f32 %v3928, %v3926
        %v3932 = vadd.f32 %v3901, %v3929
        %v3933 = vadd.f32 %v3902, %v3930
        %v3934 = vadd.f32 %v3903, %v3931
        %s3935 = sld [smem:[#allocation10 + $0x45]]
        %v3936 = vstv %s3935
        %v3937 = vmul.f32 %v3936, %v3924
        %v3938 = vmul.f32 %v3936, %v3925
        %v3939 = vmul.f32 %v3936, %v3926
        %v3940 = vadd.f32 %v3921, %v3937
        %v3941 = vadd.f32 %v3922, %v3938
        %v3942 = vadd.f32 %v3923, %v3939
        %s3943 = sld [smem:[#allocation10 + $0x22]]
        %v3944 = vstv %s3943
        %v3945 = vmul.f32 %v3944, %v3924
        %v3946 = vmul.f32 %v3944, %v3925
        %v3947 = vmul.f32 %v3944, %v3926
        %3951 = vrot.lane.b32.xlu0 %v3945, 127
        %v3952 = vpop.permute.xlu0 %3951
        %3953 = vrot.lane.b32.xlu0 %v3946, 127
        %v3954 = vpop.permute.xlu0 %3953
        %3955 = vrot.lane.b32.xlu0 %v3947, 127
        %v3956 = vpop.permute.xlu0 %3955
        %v3960 = vadd.f32 %v3932, %v3952
        %v3961 = vadd.f32 %v3933, %v3954
        %v3962 = vadd.f32 %v3934, %v3956
        %s3963 = sld [smem:[#allocation10 + $0x46]]
        %v3964 = vstv %s3963
        %v3965 = vmul.f32 %v3964, %v3924
        %v3966 = vmul.f32 %v3964, %v3925
        %v3967 = vmul.f32 %v3964, %v3926
        %3971 = vrot.lane.b32.xlu0 %v3965, 127
        %v3972 = vpop.permute.xlu0 %3971
        %3973 = vrot.lane.b32.xlu0 %v3966, 127
        %v3974 = vpop.permute.xlu0 %3973
        %3975 = vrot.lane.b32.xlu0 %v3967, 127
        %v3976 = vpop.permute.xlu0 %3975
        %v3980 = vadd.f32 %v3940, %v3972
        %v3981 = vadd.f32 %v3941, %v3974
        %v3982 = vadd.f32 %v3942, %v3976
        %s3983 = sld [smem:[#allocation10 + $0x23]]
        %v3984 = vstv %s3983
        %v3985 = vmul.f32 %v3984, %v3924
        %v3986 = vmul.f32 %v3984, %v3925
        %v3987 = vmul.f32 %v3984, %v3926
        %3991 = vrot.lane.b32.xlu0 %v3985, 126
        %v3992 = vpop.permute.xlu0 %3991
        %3993 = vrot.lane.b32.xlu0 %v3986, 126
        %v3994 = vpop.permute.xlu0 %3993
        %3995 = vrot.lane.b32.xlu0 %v3987, 126
        %v3996 = vpop.permute.xlu0 %3995
        %v4000 = vadd.f32 %v3960, %v3992
        %v4001 = vadd.f32 %v3961, %v3994
        %v4002 = vadd.f32 %v3962, %v3996
        %s4003 = sld [smem:[#allocation10 + $0x47]]
        %v4004 = vstv %s4003
        %v4005 = vmul.f32 %v4004, %v3924
        %v4006 = vmul.f32 %v4004, %v3925
        %v4007 = vmul.f32 %v4004, %v3926
        %4011 = vrot.lane.b32.xlu0 %v4005, 126
        %v4012 = vpop.permute.xlu0 %4011
        %4013 = vrot.lane.b32.xlu0 %v4006, 126
        %v4014 = vpop.permute.xlu0 %4013
        %4015 = vrot.lane.b32.xlu0 %v4007, 126
        %v4016 = vpop.permute.xlu0 %4015
        %v4020 = vadd.f32 %v3980, %v4012
        %v4021 = vadd.f32 %v3981, %v4014
        %v4022 = vadd.f32 %v3982, %v4016
        %vm4023 = vcmp.ge.f32.partialorder %v4000, 0.0
        %vm4024 = vcmp.ge.f32.partialorder %v4001, 0.0
        %vm4025 = vcmp.ge.f32.partialorder %v4002, 0.0
        %v4026 = vmul.f32 %v4000, 0.01
        %v4027 = vmul.f32 %v4001, 0.01
        %v4028 = vmul.f32 %v4002, 0.01
        %v4029 = vsel %vm4023, %v4000, %v4026
        %v4030 = vsel %vm4024, %v4001, %v4027
        %v4031 = vsel %vm4025, %v4002, %v4028
        %4032 = vst.msk [vmem:[%s298] sm:$0xff] %vm299, %v4029
        %4033 = vst.msk [vmem:[%s298 + $0x8] sm:$0xff] %vm299, %v4030
        %4034 = vst.msk [vmem:[%s298 + $0x10] sm:$0xf] %vm302, %v4031
        %vm4035 = vcmp.ge.f32.partialorder %v4020, 0.0
        %vm4036 = vcmp.ge.f32.partialorder %v4021, 0.0
        %vm4037 = vcmp.ge.f32.partialorder %v4022, 0.0
        %v4038 = vmul.f32 %v4020, 0.01
        %v4039 = vmul.f32 %v4021, 0.01
        %v4040 = vmul.f32 %v4022, 0.01
        %v4041 = vsel %vm4035, %v4020, %v4038
        %v4042 = vsel %vm4036, %v4021, %v4039
        %v4043 = vsel %vm4037, %v4022, %v4040
        %s4044 = scalar_lea.vmem %s298, 24
        %4045 = vst.msk [vmem:[%s4044] sm:$0xff] %vm299, %v4041
        %4046 = vst.msk [vmem:[%s4044 + $0x8] sm:$0xff] %vm299, %v4042
        %4047 = vst.msk [vmem:[%s4044 + $0x10] sm:$0xf] %vm302, %v4043
        %p4048 = scmp.lt.s32.totalorder %s22, 1
        %s4049 = scalar_select %p4048, %s22, 1
        %s4050 = smul.addr %s4049, 6
        %s4051 = smul.addr %s4050, 8
        %s4052 = scalar_lea.vmem %s5, %s4051
        // Predicated region
        $region61: #{tpu_custom_call.1} parent=39 // pred_check
          %p4053 = pneg %p150
        $region62: #{tpu_custom_call.1} parent=39 // pred_check_branch
          %4055 = sbr.rel (%p4053) target = $region64
        $region63: #{tpu_custom_call.1} parent=39 // pred_region
          _
        $region64: #{tpu_custom_call.1} parent=39 // pred_fallthru
          _
      $region40: #{tpu_custom_call.1} parent=5 // pred_fallthru
        _
      %p4056 = scmp.le.s32.totalorder 2, %s17
      // Predicated region
      $region65: #{tpu_custom_call.1} parent=5 // pred_check
        %p4057 = pneg %p4056
      $region66: #{tpu_custom_call.1} parent=5 // pred_check_branch
        %4059 = sbr.rel (%p4057) target = $region68
      $region67: #{tpu_custom_call.1} parent=5 // pred_region
        %s4060 = ssub.s32 %s17, 2
        // Predicated region
        $region69: #{tpu_custom_call.1} parent=67 // pred_check
          %p4061 = pneg %p156
        $region70: #{tpu_custom_call.1} parent=67 // pred_check_branch
          %4063 = sbr.rel (%p4061) target = $region72
        $region71: #{tpu_custom_call.1} parent=67 // pred_region
          %p4064 = scmp.lt.s32.totalorder %s23, 1
          %s4065 = scalar_select %p4064, %s23, 1
          %s4066 = smul.addr %s4065, 6
          %s4067 = smul.addr %s4066, 8
          %s4068 = scalar_lea.vmem %s5, %s4067
        $region72: #{tpu_custom_call.1} parent=67 // pred_fallthru
          _
      $region68: #{tpu_custom_call.1} parent=5 // pred_fallthru
        _
    $region6: #{tpu_custom_call.1} parent=1 // loop_footer
      %s21 = sadd.s32 1, %s17
    $region7: #{tpu_custom_call.1} parent=1 // loop_footer_branch
      %16 = sbr.rel target = $region3
    $region8: #{tpu_custom_call.1} parent=1 // loop_exit
      _
    %4069 = vsyncpa [#allocation5], 1
    %s4070 = scalar_lea.sflag [#allocation5], 1
    %4071 = vsyncpa %s4070, 1
    %4072 = vsyncpa [#allocation6], 1
    %s4073 = scalar_lea.sflag [#allocation6], 1
    %4074 = vsyncpa %s4073, 1
    %4075 = vsyncpa [#allocation7], 1
    %s4076 = scalar_lea.sflag [#allocation7], 1
    %4077 = vsyncpa %s4076, 1
    %4078 = vsyncpa [#allocation11], 1

</llo_original>
